<compile_context>
chip_gen: v7x
topology: tpu7x:2x2x1
jax: 0.10.0
libtpu: 0.0.40
codegen_flags: <defaults>
</compile_context>

<pallas_src>
import functools

import jax
import jax.numpy as jnp
from jax.experimental import pallas as pl
from jax.experimental.pallas import tpu as pltpu


def _ru(x, m):
    return ((x + m - 1) // m) * m


def _pick_tile(M, target, mult):
    """Largest tile <= target (multiple of `mult`) dividing M, preferring >=2 blocks."""
    t = min(target, M)
    if M > mult:
        t = min(t, max(mult, M // 2))
    t = max(mult, (t // mult) * mult)
    while M % t:
        t -= mult
    return t


# ----------------------------------------------------------------------------
# Kernel 1: dense + bias (hoisted input-side GRU projection), tiled over rows.
# ----------------------------------------------------------------------------
def dense_bias_kernel(x_ref, w_ref, b_ref, o_ref):
    o_ref[...] = (jnp.dot(x_ref[...], w_ref[...],
                          preferred_element_type=jnp.float32) + b_ref[...])


def dense_bias(x, w, b):
    M, K = x.shape
    N = w.shape[1]
    TM = _pick_tile(M, target=256, mult=8)
    return pl.pallas_call(
        dense_bias_kernel,
        out_shape=jax.ShapeDtypeStruct((M, N), jnp.float32),
        grid=(M // TM,),
        in_specs=[pl.BlockSpec((TM, K), lambda i: (i, 0)),
                  pl.BlockSpec((K, N), lambda i: (0, 0)),
                  pl.BlockSpec((1, N), lambda i: (0, 0))],
        out_specs=pl.BlockSpec((TM, N), lambda i: (i, 0)),
        compiler_params=pltpu.CompilerParams(dimension_semantics=("parallel",)),
    )(x, w, b)


# ----------------------------------------------------------------------------
# Kernel 2: GRU recurrence, grid=(T,). One fused (Bp,Hp)x(Hp,3Hp) matmul per
# step; hidden state carried in a VMEM scratch; hN written once at the end.
# ----------------------------------------------------------------------------
def gru_step_kernel(*refs, masked):
    if masked:
        gx_ref, m_ref, wh_ref, h0_ref, hs_ref, hN_ref, h_scr = refs
    else:
        gx_ref, wh_ref, h0_ref, hs_ref, hN_ref, h_scr = refs
        m_ref = None

    t = pl.program_id(0)

    @pl.when(t == 0)
    def _():
        h_scr[...] = h0_ref[...]

    h = h_scr[...]                                     # (Bp, Hp)
    Hp = h.shape[-1]
    gx = gx_ref[0]                                     # (Bp, 3*Hp)
    hg = jnp.dot(h, wh_ref[...], preferred_element_type=jnp.float32)
    # gate slices at 128-aligned lane offsets (free)
    r = jax.nn.sigmoid(gx[:, :Hp] + hg[:, :Hp])
    z = jax.nn.sigmoid(gx[:, Hp:2 * Hp] + hg[:, Hp:2 * Hp])
    n = jnp.tanh(gx[:, 2 * Hp:] + r * hg[:, 2 * Hp:])
    h_new = (1.0 - z) * n + z * h

    if masked:
        m = m_ref[0]                                   # (Bp, 1) float, 1 = real token
        h_upd = m * h_new + (1.0 - m) * h              # keep prev state at padding
        hs_ref[0] = h_upd * m                          # emitted state zeroed at padding
    else:
        h_upd = h_new
        hs_ref[0] = h_upd
    h_scr[...] = h_upd

    @pl.when(t == pl.num_programs(0) - 1)
    def _():
        hN_ref[...] = h_upd


def gru_seq(gx, h0, wh, mask=None):
    T, Bp, H3 = gx.shape
    Hp = H3 // 3
    masked = mask is not None
    kernel = functools.partial(gru_step_kernel, masked=masked)

    in_specs = [pl.BlockSpec((1, Bp, H3), lambda t: (t, 0, 0))]
    args = [gx]
    if masked:
        in_specs.append(pl.BlockSpec((1, Bp, 1), lambda t: (t, 0, 0)))
        args.append(mask)
    in_specs += [pl.BlockSpec((Hp, H3), lambda t: (0, 0)),
                 pl.BlockSpec((Bp, Hp), lambda t: (0, 0))]
    args += [wh, h0]

    return pl.pallas_call(
        kernel,
        out_shape=(jax.ShapeDtypeStruct((T, Bp, Hp), jnp.float32),
                   jax.ShapeDtypeStruct((Bp, Hp), jnp.float32)),
        grid=(T,),
        in_specs=in_specs,
        out_specs=(pl.BlockSpec((1, Bp, Hp), lambda t: (t, 0, 0)),
                   pl.BlockSpec((Bp, Hp), lambda t: (0, 0))),
        scratch_shapes=[pltpu.VMEM((Bp, Hp), jnp.float32)],
        compiler_params=pltpu.CompilerParams(dimension_semantics=("arbitrary",)),
    )(*args)


# ----------------------------------------------------------------------------
# Kernel 3a: masked dot-product attention (scores, softmax, context vector),
# tiled over (batch, query-steps).
# ----------------------------------------------------------------------------
def attn_kernel(hs_ref, ctx_ref, cmask_ref, c_ref, alpha_ref):
    hs = hs_ref[...]                      # (BT, TQ, Hp)
    ctx = ctx_ref[...]                    # (BT, Tk, Hp)
    m = cmask_ref[...]                    # (BT, 1, Tk)

    scores = jnp.einsum('bqh,bkh->bqk', hs, ctx,
                        preferred_element_type=jnp.float32)
    scores = jnp.where(m > 0.0, scores, jnp.full_like(scores, -1e30))
    scores = scores - jnp.max(scores, axis=-1, keepdims=True)
    e = jnp.where(m > 0.0, jnp.exp(scores), jnp.zeros_like(scores))
    denom = jnp.maximum(jnp.sum(e, axis=-1, keepdims=True), 1e-20)  # NaN guard
    alpha = e * pl.reciprocal(denom, approx=True)   # internal softmax: approx ok

    alpha_ref[...] = alpha
    c_ref[...] = jnp.einsum('bqk,bkh->bqh', alpha, ctx,
                            preferred_element_type=jnp.float32)


def attn(hs, ctx, cmask3):
    Bp, Tq, Hp = hs.shape
    Tk = ctx.shape[1]
    BT = _pick_tile(Bp, target=8, mult=1)
    TQ = _pick_tile(Tq, target=256, mult=8)
    return pl.pallas_call(
        attn_kernel,
        out_shape=(jax.ShapeDtypeStruct((Bp, Tq, Hp), jnp.float32),
                   jax.ShapeDtypeStruct((Bp, Tq, Tk), jnp.float32)),
        grid=(Bp // BT, Tq // TQ),
        in_specs=[pl.BlockSpec((BT, TQ, Hp), lambda b, q: (b, q, 0)),
                  pl.BlockSpec((BT, Tk, Hp), lambda b, q: (b, 0, 0)),
                  pl.BlockSpec((BT, 1, Tk), lambda b, q: (b, 0, 0))],
        out_specs=(pl.BlockSpec((BT, TQ, Hp), lambda b, q: (b, q, 0)),
                   pl.BlockSpec((BT, TQ, Tk), lambda b, q: (b, q, 0))),
        compiler_params=pltpu.CompilerParams(
            dimension_semantics=("parallel", "parallel")),
    )(hs, ctx, cmask3)


# ----------------------------------------------------------------------------
# Kernel 3b: copy distribution, tiled over (batch, vocab). One-hot slice built
# in-kernel per vocab tile; bf16 MXU operands, f32 accumulation.
# ----------------------------------------------------------------------------
def copy_kernel(alpha_ref, ids_ref, copy_ref, *, v_tile):
    v0 = pl.program_id(1) * v_tile
    alpha = alpha_ref[...].astype(jnp.bfloat16)              # (BT, Tq, Tk)
    ids = ids_ref[...]                                        # (BT, Tk, 1) int32
    BT, Tk, _ = ids.shape
    vocab = jax.lax.broadcasted_iota(jnp.int32, (BT, Tk, v_tile), 2) + v0
    onehot = (ids == vocab).astype(jnp.bfloat16)              # exact in bf16
    copy_ref[...] = jnp.einsum('bqk,bkv->bqv', alpha, onehot,
                               preferred_element_type=jnp.float32)


def copy_dist(alpha, ids3, Vp):
    Bp, Tq, Tk = alpha.shape
    BT = _pick_tile(Bp, target=8, mult=1)
    VT = _pick_tile(Vp, target=512, mult=128)
    kernel = functools.partial(copy_kernel, v_tile=VT)
    return pl.pallas_call(
        kernel,
        out_shape=jax.ShapeDtypeStruct((Bp, Tq, Vp), jnp.float32),
        grid=(Bp // BT, Vp // VT),
        in_specs=[pl.BlockSpec((BT, Tq, Tk), lambda b, v: (b, 0, 0)),
                  pl.BlockSpec((BT, Tk, 1), lambda b, v: (b, 0, 0))],
        out_specs=pl.BlockSpec((BT, Tq, VT), lambda b, v: (b, 0, v)),
        compiler_params=pltpu.CompilerParams(
            dimension_semantics=("parallel", "parallel")),
    )(alpha, ids3)


# ----------------------------------------------------------------------------
# Kernel 4: merged [h,c] projection + generation softmax + pointer gate +
# mixture, tiled over rows. Gate weights live in a spare padding column of wo.
# ----------------------------------------------------------------------------
def proj_mix_kernel(hc_ref, copy_ref, wo_ref, bo_ref, out_ref, *, n_valid, gate_col):
    hc = hc_ref[...]                                               # (TM, 2Hp)
    logits = (jnp.dot(hc, wo_ref[...], preferred_element_type=jnp.float32)
              + bo_ref[...])                                       # (TM, Vp)
    col = jax.lax.broadcasted_iota(jnp.int32, logits.shape, 1)

    # pointer gate: extract the spare column that holds [wgh; wgc], bg
    gate_logit = jnp.sum(jnp.where(col == gate_col, logits, 0.0),
                         axis=-1, keepdims=True)                   # (TM, 1)
    pgen = jax.nn.sigmoid(gate_logit)

    valid = col < n_valid                                          # mask lane padding
    logits = jnp.where(valid, logits, jnp.full_like(logits, -1e30))
    logits = logits - jnp.max(logits, axis=-1, keepdims=True)
    ge = jnp.where(valid, jnp.exp(logits), jnp.zeros_like(logits))
    gen_probs = ge / jnp.sum(ge, axis=-1, keepdims=True)           # exact (user-visible)

    out_ref[...] = pgen * gen_probs + (1.0 - pgen) * copy_ref[...]


def proj_mix(hc, copy2, wo, bo, *, n_valid, gate_col):
    M, H2 = hc.shape
    Vp = wo.shape[1]
    TM = _pick_tile(M, target=256, mult=8)
    kernel = functools.partial(proj_mix_kernel, n_valid=n_valid, gate_col=gate_col)
    return pl.pallas_call(
        kernel,
        out_shape=jax.ShapeDtypeStruct((M, Vp), jnp.float32),
        grid=(M // TM,),
        in_specs=[pl.BlockSpec((TM, H2), lambda i: (i, 0)),
                  pl.BlockSpec((TM, Vp), lambda i: (i, 0)),
                  pl.BlockSpec((H2, Vp), lambda i: (0, 0)),
                  pl.BlockSpec((1, Vp), lambda i: (0, 0))],
        out_specs=pl.BlockSpec((TM, Vp), lambda i: (i, 0)),
        compiler_params=pltpu.CompilerParams(dimension_semantics=("parallel",)),
    )(hc, copy2, wo, bo)


# ----------------------------------------------------------------------------
# Parameter prep: lane-pad hidden to 128, gate-layout-preserving zero padding,
# pointer-gate weights folded into a spare vocab column. Run ONCE per model.
# ----------------------------------------------------------------------------
def prepare_params(P):
    E = P["emb_in"].shape[1]
    H = P["wh_e"].shape[0]
    V_out = P["woh"].shape[1]
    Hp = _ru(H, 128)
    Vp = _ru(V_out + 1, 128)   # +1 spare column for the pointer gate

    def pad_gru(wx, wh, b):
        wx_p = jnp.zeros((E, 3 * Hp), jnp.float32)
        wh_p = jnp.zeros((Hp, 3 * Hp), jnp.float32)
        b_p = jnp.zeros((1, 3 * Hp), jnp.float32)
        for g in range(3):
            wx_p = wx_p.at[:, g * Hp:g * Hp + H].set(wx[:, g * H:(g + 1) * H])
            wh_p = wh_p.at[:H, g * Hp:g * Hp + H].set(wh[:, g * H:(g + 1) * H])
            b_p = b_p.at[:, g * Hp:g * Hp + H].set(b[:, g * H:(g + 1) * H])
        return wx_p, wh_p, b_p

    wx_e, wh_e, b_e = pad_gru(P["wx_e"], P["wh_e"], P["b_e"])
    wx_d, wh_d, b_d = pad_gru(P["wx_d"], P["wh_d"], P["b_d"])

    wo = jnp.zeros((2 * Hp, Vp), jnp.float32)
    wo = wo.at[:H, :V_out].set(P["woh"])
    wo = wo.at[Hp:Hp + H, :V_out].set(P["woc"])
    wo = wo.at[:H, V_out:V_out + 1].set(P["wgh"])          # gate column
    wo = wo.at[Hp:Hp + H, V_out:V_out + 1].set(P["wgc"])
    bo = jnp.zeros((1, Vp), jnp.float32)
    bo = bo.at[:, :V_out].set(P["bo"])
    bo = bo.at[:, V_out:V_out + 1].set(P["bg"])

    return {"emb_in": P["emb_in"], "emb_out": P["emb_out"],
            "wx_e": wx_e, "wh_e": wh_e, "b_e": b_e,
            "wx_d": wx_d, "wh_d": wh_d, "b_d": b_d,
            "wo": wo, "bo": bo}


# ----------------------------------------------------------------------------
# EncDec.forward equivalent (glue in plain JAX, compute in Pallas)
# ----------------------------------------------------------------------------
def encdec_forward(inpseq, outseq, P, *, v_out):
    B, Tin = inpseq.shape
    Tout = outseq.shape[1]
    E = P["emb_in"].shape[1]
    Hp = P["wh_e"].shape[0]
    Vp = P["wo"].shape[1]

    Bp = _ru(B, 8)          # sublane padding
    Tq = _ru(Tout, 8)       # decode-step padding
    Tk = _ru(Tin, 8)        # source-step padding (masked out in attention)

    inp_p = jnp.zeros((Bp, Tk), jnp.int32).at[:B, :Tin].set(inpseq.astype(jnp.int32))
    out_p = jnp.zeros((Bp, Tq), jnp.int32).at[:B, :Tout].set(outseq.astype(jnp.int32))

    # --- inpemb: embedding + pad mask (gather = plain-JAX glue)
    ctx_mask = (inp_p != 0).astype(jnp.float32)             # (Bp, Tk)
    x_emb = jnp.take(P["emb_in"], inp_p, axis=0)            # (Bp, Tk, E)
    y_emb = jnp.take(P["emb_out"], out_p, axis=0)           # (Bp, Tq, E)
    x_tm = jnp.transpose(x_emb, (1, 0, 2))                  # (Tk, Bp, E)
    y_tm = jnp.transpose(y_emb, (1, 0, 2))                  # (Tq, Bp, E)

    # --- encoder: hoisted input projection + recurrence-only GRU kernel
    gx = dense_bias(x_tm.reshape(Tk * Bp, E), P["wx_e"], P["b_e"])
    gx = gx.reshape(Tk, Bp, 3 * Hp)
    mask_tm = jnp.transpose(ctx_mask)[:, :, None]           # (Tk, Bp, 1)
    h0 = jnp.zeros((Bp, Hp), jnp.float32)
    ctx_tm, hN = gru_seq(gx, h0, P["wh_e"], mask=mask_tm)
    ctx = jnp.transpose(ctx_tm, (1, 0, 2))                  # (Bp, Tk, Hp)

    # --- decoder recurrence (no-mask variant; everything else hoisted out)
    gy = dense_bias(y_tm.reshape(Tq * Bp, E), P["wx_d"], P["b_d"])
    gy = gy.reshape(Tq, Bp, 3 * Hp)
    hs_tm, _ = gru_seq(gy, hN, P["wh_d"], mask=None)
    hs = jnp.transpose(hs_tm, (1, 0, 2))                    # (Bp, Tq, Hp)

    # --- attention over source, then copy distribution (vocab-tiled)
    cmask3 = ctx_mask[:, None, :]                           # (Bp, 1, Tk)
    c, alpha = attn(hs, ctx, cmask3)
    ids3 = inp_p[:, :, None]                                # (Bp, Tk, 1) int32
    copy_probs = copy_dist(alpha, ids3, Vp)                 # (Bp, Tq, Vp)

    # --- merged [h,c] projection + pointer/generator mixture
    hc = jnp.concatenate([hs, c], axis=-1).reshape(Bp * Tq, 2 * Hp)
    copy2 = copy_probs.reshape(Bp * Tq, Vp)
    out2 = proj_mix(hc, copy2, P["wo"], P["bo"], n_valid=v_out, gate_col=v_out)

    return out2.reshape(Bp, Tq, Vp)[:B, :Tout, :v_out]      # (B, Tout, V_out)


if __name__ == "__main__":
    B, T_in, T_out = 2, 8, 6
    V_in, V_out = 20, 24
    E, H = 16, 32

    key = jax.random.PRNGKey(0)
    ks = jax.random.split(key, 16)

    def init(k, shape, scale=0.1):
        return (scale * jax.random.normal(k, shape)).astype(jnp.float32)

    P = {
        "emb_in": init(ks[0], (V_in, E)),
        "emb_out": init(ks[1], (V_out, E)),
        "wx_e": init(ks[2], (E, 3 * H)),
        "wh_e": init(ks[3], (H, 3 * H)),
        "b_e":  init(ks[4], (1, 3 * H)),
        "wx_d": init(ks[5], (E, 3 * H)),
        "wh_d": init(ks[6], (H, 3 * H)),
        "b_d":  init(ks[7], (1, 3 * H)),
        "woh":  init(ks[8], (H, V_out)),
        "woc":  init(ks[9], (H, V_out)),
        "bo":   init(ks[10], (1, V_out)),
        "wgh":  init(ks[11], (H, 1)),
        "wgc":  init(ks[12], (H, 1)),
        "bg":   init(ks[13], (1, 1)),
    }

    inpseq = jax.random.randint(ks[14], (B, T_in), 1, V_in).astype(jnp.int32)
    inpseq = inpseq.at[:, T_in - 2:].set(0)   # trailing padding (id 0)
    outseq = jax.random.randint(ks[15], (B, T_out), 1, V_out).astype(jnp.int32)

    prep = prepare_params(P)                  # once per model, not per forward
    fwd = jax.jit(functools.partial(encdec_forward, v_out=V_out))
    outprobs = fwd(inpseq, outseq, prep)
    outprobs = jax.block_until_ready(outprobs)

    assert outprobs.shape == (B, T_out, V_out)
    assert bool(jnp.all(jnp.isfinite(outprobs)))
    # rows are convex mixtures of two distributions -> should sum to ~1
    # (tolerance covers approx attention reciprocal + bf16 copy matmul)
    assert bool(jnp.allclose(jnp.sum(outprobs, axis=-1), 1.0, atol=1e-2))
    print("KERNEL_OK")
</pallas_src>

<mosaic_0001>
module attributes {stable_mosaic.version = 11 : i64} {
  func.func @gru_step_kernel(%arg0: i32, %arg1: memref<1x8x384xf32, #tpu.memory_space<vmem>>, %arg2: memref<1x8x1xf32, #tpu.memory_space<vmem>>, %arg3: memref<128x384xf32, #tpu.memory_space<vmem>>, %arg4: memref<8x128xf32, #tpu.memory_space<vmem>>, %arg5: memref<1x8x128xf32, #tpu.memory_space<vmem>>, %arg6: memref<8x128xf32, #tpu.memory_space<vmem>>, %arg7: memref<8x128xf32, #tpu.memory_space<vmem>>) attributes {dimension_semantics = [#tpu.dimension_semantics<arbitrary>], iteration_bounds = array<i64: 8>, scalar_prefetch = 0 : i64, scratch_operands = 1 : i64, tpu.core_type = #tpu.core_type<tc>, window_params = [{transform_indices = @transform_0, window_bounds = array<i64: 1, 8, 384>}, {transform_indices = @transform_1, window_bounds = array<i64: 1, 8, 1>}, {pipeline_mode = #tpu.pipeline_mode<synchronous>, transform_indices = @transform_2, window_bounds = array<i64: 128, 384>}, {pipeline_mode = #tpu.pipeline_mode<synchronous>, transform_indices = @transform_3, window_bounds = array<i64: 8, 128>}, {transform_indices = @transform_4, window_bounds = array<i64: 1, 8, 128>}, {pipeline_mode = #tpu.pipeline_mode<synchronous>, transform_indices = @transform_5, window_bounds = array<i64: 8, 128>}]} {
    %c0_i32 = arith.constant 0 : i32
    %0 = arith.cmpi eq, %arg0, %c0_i32 : i32
    %1 = arith.extui %0 : i1 to i32
    %c0_i32_0 = arith.constant 0 : i32
    %2 = arith.cmpi ne, %1, %c0_i32_0 : i32
    scf.if %2 {
      %c0_20 = arith.constant 0 : index
      %c0_21 = arith.constant 0 : index
      %52 = vector.load %arg4[%c0_20, %c0_21] : memref<8x128xf32, #tpu.memory_space<vmem>>, vector<8x128xf32>
      %c0_22 = arith.constant 0 : index
      %c0_23 = arith.constant 0 : index
      %53 = vector.load %arg7[%c0_22, %c0_23] : memref<8x128xf32, #tpu.memory_space<vmem>>, vector<8x128xf32>
      tpu.vector_store %arg7[%c0_22, %c0_23], %52 {strides = array<i32>} : memref<8x128xf32, #tpu.memory_space<vmem>>, vector<8x128xf32>,
    } else {
    }
    %c0 = arith.constant 0 : index
    %c0_1 = arith.constant 0 : index
    %3 = vector.load %arg7[%c0, %c0_1] : memref<8x128xf32, #tpu.memory_space<vmem>>, vector<8x128xf32>
    %c0_2 = arith.constant 0 : index
    %c0_3 = arith.constant 0 : index
    %c0_4 = arith.constant 0 : index
    %4 = vector.load %arg1[%c0_2, %c0_3, %c0_4] : memref<1x8x384xf32, #tpu.memory_space<vmem>>, vector<1x8x384xf32>
    %5 = vector.shape_cast %4 : vector<1x8x384xf32> to vector<8x384xf32>
    %c0_5 = arith.constant 0 : index
    %c0_6 = arith.constant 0 : index
    %6 = vector.load %arg3[%c0_5, %c0_6] : memref<128x384xf32, #tpu.memory_space<vmem>>, vector<128x384xf32>
    %cst = arith.constant dense<0.000000e+00> : vector<8x384xf32>
    %7 = tpu.matmul %3, %6, %cst {dimension_numbers = #tpu.dot_dimension_numbers<[1], [0], [0], [1], [0, 0, 1, 1], [], []>} : vector<8x128xf32>, vector<128x384xf32>, vector<8x384xf32> -> vector<8x384xf32>
    %8 = vector.extract_strided_slice %5 {offsets = [0, 0], sizes = [8, 128], strides = [1, 1]} : vector<8x384xf32> to vector<8x128xf32>
    %9 = vector.extract_strided_slice %7 {offsets = [0, 0], sizes = [8, 128], strides = [1, 1]} : vector<8x384xf32> to vector<8x128xf32>
    %10 = arith.addf %8, %9 : vector<8x128xf32>
    %11 = arith.negf %10 : vector<8x128xf32>
    %12 = math.exp %11 : vector<8x128xf32>
    %cst_7 = arith.constant 1.000000e+00 : f32
    %13 = vector.broadcast %cst_7 : f32 to vector<8x128xf32>
    %14 = arith.addf %13, %12 : vector<8x128xf32>
    %15 = arith.divf %13, %14 : vector<8x128xf32>
    %16 = vector.extract_strided_slice %5 {offsets = [0, 128], sizes = [8, 128], strides = [1, 1]} : vector<8x384xf32> to vector<8x128xf32>
    %17 = vector.extract_strided_slice %7 {offsets = [0, 128], sizes = [8, 128], strides = [1, 1]} : vector<8x384xf32> to vector<8x128xf32>
    %18 = arith.addf %16, %17 : vector<8x128xf32>
    %19 = arith.negf %18 : vector<8x128xf32>
    %20 = math.exp %19 : vector<8x128xf32>
    %cst_8 = arith.constant 1.000000e+00 : f32
    %21 = vector.broadcast %cst_8 : f32 to vector<8x128xf32>
    %22 = arith.addf %21, %20 : vector<8x128xf32>
    %23 = arith.divf %21, %22 : vector<8x128xf32>
    %24 = vector.extract_strided_slice %5 {offsets = [0, 256], sizes = [8, 128], strides = [1, 1]} : vector<8x384xf32> to vector<8x128xf32>
    %25 = vector.extract_strided_slice %7 {offsets = [0, 256], sizes = [8, 128], strides = [1, 1]} : vector<8x384xf32> to vector<8x128xf32>
    %26 = arith.mulf %15, %25 : vector<8x128xf32>
    %27 = arith.addf %24, %26 : vector<8x128xf32>
    %28 = math.tanh %27 : vector<8x128xf32>
    %cst_9 = arith.constant 1.000000e+00 : f32
    %29 = vector.broadcast %cst_9 : f32 to vector<8x128xf32>
    %30 = arith.subf %29, %23 : vector<8x128xf32>
    %31 = arith.mulf %30, %28 : vector<8x128xf32>
    %32 = arith.mulf %23, %3 : vector<8x128xf32>
    %33 = arith.addf %31, %32 : vector<8x128xf32>
    %c0_10 = arith.constant 0 : index
    %c0_11 = arith.constant 0 : index
    %c0_12 = arith.constant 0 : index
    %34 = vector.load %arg2[%c0_10, %c0_11, %c0_12] : memref<1x8x1xf32, #tpu.memory_space<vmem>>, vector<1x8x1xf32>
    %35 = vector.shape_cast %34 : vector<1x8x1xf32> to vector<8x1xf32>
    %36 = vector.broadcast %35 : vector<8x1xf32> to vector<8x128xf32>
    %37 = arith.mulf %36, %33 : vector<8x128xf32>
    %cst_13 = arith.constant 1.000000e+00 : f32
    %38 = vector.broadcast %cst_13 : f32 to vector<8x1xf32>
    %39 = arith.subf %38, %35 : vector<8x1xf32>
    %40 = vector.broadcast %39 : vector<8x1xf32> to vector<8x128xf32>
    %41 = arith.mulf %40, %3 : vector<8x128xf32>
    %42 = arith.addf %37, %41 : vector<8x128xf32>
    %43 = vector.broadcast %35 : vector<8x1xf32> to vector<8x128xf32>
    %44 = arith.mulf %42, %43 : vector<8x128xf32>
    %c0_14 = arith.constant 0 : index
    %c0_15 = arith.constant 0 : index
    %c0_16 = arith.constant 0 : index
    %45 = vector.load %arg5[%c0_14, %c0_15, %c0_16] : memref<1x8x128xf32, #tpu.memory_space<vmem>>, vector<1x8x128xf32>
    %46 = vector.shape_cast %45 : vector<1x8x128xf32> to vector<8x128xf32>
    %47 = vector.shape_cast %44 : vector<8x128xf32> to vector<1x8x128xf32>
    tpu.vector_store %arg5[%c0_14, %c0_15, %c0_16], %47 {strides = array<i32>} : memref<1x8x128xf32, #tpu.memory_space<vmem>>, vector<1x8x128xf32>,
    %c0_17 = arith.constant 0 : index
    %c0_18 = arith.constant 0 : index
    %48 = vector.load %arg7[%c0_17, %c0_18] : memref<8x128xf32, #tpu.memory_space<vmem>>, vector<8x128xf32>
    tpu.vector_store %arg7[%c0_17, %c0_18], %42 {strides = array<i32>} : memref<8x128xf32, #tpu.memory_space<vmem>>, vector<8x128xf32>,
    %c7_i32 = arith.constant 7 : i32
    %49 = arith.cmpi eq, %arg0, %c7_i32 : i32
    %50 = arith.extui %49 : i1 to i32
    %c0_i32_19 = arith.constant 0 : i32
    %51 = arith.cmpi ne, %50, %c0_i32_19 : i32
    scf.if %51 {
      %c0_20 = arith.constant 0 : index
      %c0_21 = arith.constant 0 : index
      %52 = vector.load %arg6[%c0_20, %c0_21] : memref<8x128xf32, #tpu.memory_space<vmem>>, vector<8x128xf32>
      tpu.vector_store %arg6[%c0_20, %c0_21], %42 {strides = array<i32>} : memref<8x128xf32, #tpu.memory_space<vmem>>, vector<8x128xf32>,
    } else {
    }
    return
  }
  func.func @transform_0(%arg0: i32) -> (i32, i32, i32) {
    %c0_i32 = arith.constant 0 : i32
    %c0_i32_0 = arith.constant 0 : i32
    %c0_i32_1 = arith.constant 0 : i32
    return %arg0, %c0_i32, %c0_i32_0 : i32, i32, i32
  }
  func.func @transform_1(%arg0: i32) -> (i32, i32, i32) {
    %c0_i32 = arith.constant 0 : i32
    %c0_i32_0 = arith.constant 0 : i32
    %c0_i32_1 = arith.constant 0 : i32
    return %arg0, %c0_i32, %c0_i32_0 : i32, i32, i32
  }
  func.func @transform_2(%arg0: i32) -> (i32, i32) {
    %c0_i32 = arith.constant 0 : i32
    %c0_i32_0 = arith.constant 0 : i32
    %c0_i32_1 = arith.constant 0 : i32
    return %c0_i32, %c0_i32_0 : i32, i32
  }
  func.func @transform_3(%arg0: i32) -> (i32, i32) {
    %c0_i32 = arith.constant 0 : i32
    %c0_i32_0 = arith.constant 0 : i32
    %c0_i32_1 = arith.constant 0 : i32
    return %c0_i32, %c0_i32_0 : i32, i32
  }
  func.func @transform_4(%arg0: i32) -> (i32, i32, i32) {
    %c0_i32 = arith.constant 0 : i32
    %c0_i32_0 = arith.constant 0 : i32
    %c0_i32_1 = arith.constant 0 : i32
    return %arg0, %c0_i32, %c0_i32_0 : i32, i32, i32
  }
  func.func @transform_5(%arg0: i32) -> (i32, i32) {
    %c0_i32 = arith.constant 0 : i32
    %c0_i32_0 = arith.constant 0 : i32
    %c0_i32_1 = arith.constant 0 : i32
    return %c0_i32, %c0_i32_0 : i32, i32
  }
}

module attributes {stable_mosaic.version = 11 : i64} {
  func.func @dense_bias_kernel(%arg0: i32, %arg1: memref<32x16xf32, #tpu.memory_space<vmem>>, %arg2: memref<16x384xf32, #tpu.memory_space<vmem>>, %arg3: memref<1x384xf32, #tpu.memory_space<vmem>>, %arg4: memref<32x384xf32, #tpu.memory_space<vmem>>) attributes {dimension_semantics = [#tpu.dimension_semantics<parallel>], iteration_bounds = array<i64: 2>, scalar_prefetch = 0 : i64, scratch_operands = 0 : i64, tpu.core_type = #tpu.core_type<tc>, window_params = [{transform_indices = @transform_0, window_bounds = array<i64: 32, 16>}, {pipeline_mode = #tpu.pipeline_mode<synchronous>, transform_indices = @transform_1, window_bounds = array<i64: 16, 384>}, {pipeline_mode = #tpu.pipeline_mode<synchronous>, transform_indices = @transform_2, window_bounds = array<i64: 1, 384>}, {transform_indices = @transform_3, window_bounds = array<i64: 32, 384>}]} {
    %c0 = arith.constant 0 : index
    %c0_0 = arith.constant 0 : index
    %0 = vector.load %arg1[%c0, %c0_0] : memref<32x16xf32, #tpu.memory_space<vmem>>, vector<32x16xf32>
    %c0_1 = arith.constant 0 : index
    %c0_2 = arith.constant 0 : index
    %1 = vector.load %arg2[%c0_1, %c0_2] : memref<16x384xf32, #tpu.memory_space<vmem>>, vector<16x384xf32>
    %cst = arith.constant dense<0.000000e+00> : vector<32x384xf32>
    %2 = tpu.matmul %0, %1, %cst {dimension_numbers = #tpu.dot_dimension_numbers<[1], [0], [0], [1], [0, 0, 1, 1], [], []>} : vector<32x16xf32>, vector<16x384xf32>, vector<32x384xf32> -> vector<32x384xf32>
    %c0_3 = arith.constant 0 : index
    %c0_4 = arith.constant 0 : index
    %3 = vector.load %arg3[%c0_3, %c0_4] : memref<1x384xf32, #tpu.memory_space<vmem>>, vector<1x384xf32>
    %4 = vector.broadcast %3 : vector<1x384xf32> to vector<32x384xf32>
    %5 = arith.addf %2, %4 : vector<32x384xf32>
    %c0_5 = arith.constant 0 : index
    %c0_6 = arith.constant 0 : index
    %6 = vector.load %arg4[%c0_5, %c0_6] : memref<32x384xf32, #tpu.memory_space<vmem>>, vector<32x384xf32>
    tpu.vector_store %arg4[%c0_5, %c0_6], %5 {strides = array<i32>} : memref<32x384xf32, #tpu.memory_space<vmem>>, vector<32x384xf32>,
    return
  }
  func.func @transform_0(%arg0: i32) -> (i32, i32) {
    %c0_i32 = arith.constant 0 : i32
    %c0_i32_0 = arith.constant 0 : i32
    return %arg0, %c0_i32 : i32, i32
  }
  func.func @transform_1(%arg0: i32) -> (i32, i32) {
    %c0_i32 = arith.constant 0 : i32
    %c0_i32_0 = arith.constant 0 : i32
    %c0_i32_1 = arith.constant 0 : i32
    return %c0_i32, %c0_i32_0 : i32, i32
  }
  func.func @transform_2(%arg0: i32) -> (i32, i32) {
    %c0_i32 = arith.constant 0 : i32
    %c0_i32_0 = arith.constant 0 : i32
    %c0_i32_1 = arith.constant 0 : i32
    return %c0_i32, %c0_i32_0 : i32, i32
  }
  func.func @transform_3(%arg0: i32) -> (i32, i32) {
    %c0_i32 = arith.constant 0 : i32
    %c0_i32_0 = arith.constant 0 : i32
    return %arg0, %c0_i32 : i32, i32
  }
}

module attributes {stable_mosaic.version = 11 : i64} {
  func.func @gru_step_kernel(%arg0: i32, %arg1: memref<1x8x384xf32, #tpu.memory_space<vmem>>, %arg2: memref<128x384xf32, #tpu.memory_space<vmem>>, %arg3: memref<8x128xf32, #tpu.memory_space<vmem>>, %arg4: memref<1x8x128xf32, #tpu.memory_space<vmem>>, %arg5: memref<8x128xf32, #tpu.memory_space<vmem>>, %arg6: memref<8x128xf32, #tpu.memory_space<vmem>>) attributes {dimension_semantics = [#tpu.dimension_semantics<arbitrary>], iteration_bounds = array<i64: 8>, scalar_prefetch = 0 : i64, scratch_operands = 1 : i64, tpu.core_type = #tpu.core_type<tc>, window_params = [{transform_indices = @transform_0, window_bounds = array<i64: 1, 8, 384>}, {pipeline_mode = #tpu.pipeline_mode<synchronous>, transform_indices = @transform_1, window_bounds = array<i64: 128, 384>}, {pipeline_mode = #tpu.pipeline_mode<synchronous>, transform_indices = @transform_2, window_bounds = array<i64: 8, 128>}, {transform_indices = @transform_3, window_bounds = array<i64: 1, 8, 128>}, {pipeline_mode = #tpu.pipeline_mode<synchronous>, transform_indices = @transform_4, window_bounds = array<i64: 8, 128>}]} {
    %c0_i32 = arith.constant 0 : i32
    %0 = arith.cmpi eq, %arg0, %c0_i32 : i32
    %1 = arith.extui %0 : i1 to i32
    %c0_i32_0 = arith.constant 0 : i32
    %2 = arith.cmpi ne, %1, %c0_i32_0 : i32
    scf.if %2 {
      %c0_16 = arith.constant 0 : index
      %c0_17 = arith.constant 0 : index
      %41 = vector.load %arg3[%c0_16, %c0_17] : memref<8x128xf32, #tpu.memory_space<vmem>>, vector<8x128xf32>
      %c0_18 = arith.constant 0 : index
      %c0_19 = arith.constant 0 : index
      %42 = vector.load %arg6[%c0_18, %c0_19] : memref<8x128xf32, #tpu.memory_space<vmem>>, vector<8x128xf32>
      tpu.vector_store %arg6[%c0_18, %c0_19], %41 {strides = array<i32>} : memref<8x128xf32, #tpu.memory_space<vmem>>, vector<8x128xf32>,
    } else {
    }
    %c0 = arith.constant 0 : index
    %c0_1 = arith.constant 0 : index
    %3 = vector.load %arg6[%c0, %c0_1] : memref<8x128xf32, #tpu.memory_space<vmem>>, vector<8x128xf32>
    %c0_2 = arith.constant 0 : index
    %c0_3 = arith.constant 0 : index
    %c0_4 = arith.constant 0 : index
    %4 = vector.load %arg1[%c0_2, %c0_3, %c0_4] : memref<1x8x384xf32, #tpu.memory_space<vmem>>, vector<1x8x384xf32>
    %5 = vector.shape_cast %4 : vector<1x8x384xf32> to vector<8x384xf32>
    %c0_5 = arith.constant 0 : index
    %c0_6 = arith.constant 0 : index
    %6 = vector.load %arg2[%c0_5, %c0_6] : memref<128x384xf32, #tpu.memory_space<vmem>>, vector<128x384xf32>
    %cst = arith.constant dense<0.000000e+00> : vector<8x384xf32>
    %7 = tpu.matmul %3, %6, %cst {dimension_numbers = #tpu.dot_dimension_numbers<[1], [0], [0], [1], [0, 0, 1, 1], [], []>} : vector<8x128xf32>, vector<128x384xf32>, vector<8x384xf32> -> vector<8x384xf32>
    %8 = vector.extract_strided_slice %5 {offsets = [0, 0], sizes = [8, 128], strides = [1, 1]} : vector<8x384xf32> to vector<8x128xf32>
    %9 = vector.extract_strided_slice %7 {offsets = [0, 0], sizes = [8, 128], strides = [1, 1]} : vector<8x384xf32> to vector<8x128xf32>
    %10 = arith.addf %8, %9 : vector<8x128xf32>
    %11 = arith.negf %10 : vector<8x128xf32>
    %12 = math.exp %11 : vector<8x128xf32>
    %cst_7 = arith.constant 1.000000e+00 : f32
    %13 = vector.broadcast %cst_7 : f32 to vector<8x128xf32>
    %14 = arith.addf %13, %12 : vector<8x128xf32>
    %15 = arith.divf %13, %14 : vector<8x128xf32>
    %16 = vector.extract_strided_slice %5 {offsets = [0, 128], sizes = [8, 128], strides = [1, 1]} : vector<8x384xf32> to vector<8x128xf32>
    %17 = vector.extract_strided_slice %7 {offsets = [0, 128], sizes = [8, 128], strides = [1, 1]} : vector<8x384xf32> to vector<8x128xf32>
    %18 = arith.addf %16, %17 : vector<8x128xf32>
    %19 = arith.negf %18 : vector<8x128xf32>
    %20 = math.exp %19 : vector<8x128xf32>
    %cst_8 = arith.constant 1.000000e+00 : f32
    %21 = vector.broadcast %cst_8 : f32 to vector<8x128xf32>
    %22 = arith.addf %21, %20 : vector<8x128xf32>
    %23 = arith.divf %21, %22 : vector<8x128xf32>
    %24 = vector.extract_strided_slice %5 {offsets = [0, 256], sizes = [8, 128], strides = [1, 1]} : vector<8x384xf32> to vector<8x128xf32>
    %25 = vector.extract_strided_slice %7 {offsets = [0, 256], sizes = [8, 128], strides = [1, 1]} : vector<8x384xf32> to vector<8x128xf32>
    %26 = arith.mulf %15, %25 : vector<8x128xf32>
    %27 = arith.addf %24, %26 : vector<8x128xf32>
    %28 = math.tanh %27 : vector<8x128xf32>
    %cst_9 = arith.constant 1.000000e+00 : f32
    %29 = vector.broadcast %cst_9 : f32 to vector<8x128xf32>
    %30 = arith.subf %29, %23 : vector<8x128xf32>
    %31 = arith.mulf %30, %28 : vector<8x128xf32>
    %32 = arith.mulf %23, %3 : vector<8x128xf32>
    %33 = arith.addf %31, %32 : vector<8x128xf32>
    %c0_10 = arith.constant 0 : index
    %c0_11 = arith.constant 0 : index
    %c0_12 = arith.constant 0 : index
    %34 = vector.load %arg4[%c0_10, %c0_11, %c0_12] : memref<1x8x128xf32, #tpu.memory_space<vmem>>, vector<1x8x128xf32>
    %35 = vector.shape_cast %34 : vector<1x8x128xf32> to vector<8x128xf32>
    %36 = vector.shape_cast %33 : vector<8x128xf32> to vector<1x8x128xf32>
    tpu.vector_store %arg4[%c0_10, %c0_11, %c0_12], %36 {strides = array<i32>} : memref<1x8x128xf32, #tpu.memory_space<vmem>>, vector<1x8x128xf32>,
    %c0_13 = arith.constant 0 : index
    %c0_14 = arith.constant 0 : index
    %37 = vector.load %arg6[%c0_13, %c0_14] : memref<8x128xf32, #tpu.memory_space<vmem>>, vector<8x128xf32>
    tpu.vector_store %arg6[%c0_13, %c0_14], %33 {strides = array<i32>} : memref<8x128xf32, #tpu.memory_space<vmem>>, vector<8x128xf32>,
    %c7_i32 = arith.constant 7 : i32
    %38 = arith.cmpi eq, %arg0, %c7_i32 : i32
    %39 = arith.extui %38 : i1 to i32
    %c0_i32_15 = arith.constant 0 : i32
    %40 = arith.cmpi ne, %39, %c0_i32_15 : i32
    scf.if %40 {
      %c0_16 = arith.constant 0 : index
      %c0_17 = arith.constant 0 : index
      %41 = vector.load %arg5[%c0_16, %c0_17] : memref<8x128xf32, #tpu.memory_space<vmem>>, vector<8x128xf32>
      tpu.vector_store %arg5[%c0_16, %c0_17], %33 {strides = array<i32>} : memref<8x128xf32, #tpu.memory_space<vmem>>, vector<8x128xf32>,
    } else {
    }
    return
  }
  func.func @transform_0(%arg0: i32) -> (i32, i32, i32) {
    %c0_i32 = arith.constant 0 : i32
    %c0_i32_0 = arith.constant 0 : i32
    %c0_i32_1 = arith.constant 0 : i32
    return %arg0, %c0_i32, %c0_i32_0 : i32, i32, i32
  }
  func.func @transform_1(%arg0: i32) -> (i32, i32) {
    %c0_i32 = arith.constant 0 : i32
    %c0_i32_0 = arith.constant 0 : i32
    %c0_i32_1 = arith.constant 0 : i32
    return %c0_i32, %c0_i32_0 : i32, i32
  }
  func.func @transform_2(%arg0: i32) -> (i32, i32) {
    %c0_i32 = arith.constant 0 : i32
    %c0_i32_0 = arith.constant 0 : i32
    %c0_i32_1 = arith.constant 0 : i32
    return %c0_i32, %c0_i32_0 : i32, i32
  }
  func.func @transform_3(%arg0: i32) -> (i32, i32, i32) {
    %c0_i32 = arith.constant 0 : i32
    %c0_i32_0 = arith.constant 0 : i32
    %c0_i32_1 = arith.constant 0 : i32
    return %arg0, %c0_i32, %c0_i32_0 : i32, i32, i32
  }
  func.func @transform_4(%arg0: i32) -> (i32, i32) {
    %c0_i32 = arith.constant 0 : i32
    %c0_i32_0 = arith.constant 0 : i32
    %c0_i32_1 = arith.constant 0 : i32
    return %c0_i32, %c0_i32_0 : i32, i32
  }
}

module attributes {stable_mosaic.version = 11 : i64} {
  func.func @attn_kernel(%arg0: i32, %arg1: i32, %arg2: memref<4x8x128xf32, #tpu.memory_space<vmem>>, %arg3: memref<4x8x128xf32, #tpu.memory_space<vmem>>, %arg4: memref<4x1x8xf32, #tpu.memory_space<vmem>>, %arg5: memref<4x8x128xf32, #tpu.memory_space<vmem>>, %arg6: memref<4x8x8xf32, #tpu.memory_space<vmem>>) attributes {dimension_semantics = [#tpu.dimension_semantics<parallel>, #tpu.dimension_semantics<parallel>], iteration_bounds = array<i64: 2, 1>, scalar_prefetch = 0 : i64, scratch_operands = 0 : i64, tpu.core_type = #tpu.core_type<tc>, window_params = [{transform_indices = @transform_0, window_bounds = array<i64: 4, 8, 128>}, {transform_indices = @transform_1, window_bounds = array<i64: 4, 8, 128>}, {transform_indices = @transform_2, window_bounds = array<i64: 4, 1, 8>}, {transform_indices = @transform_3, window_bounds = array<i64: 4, 8, 128>}, {transform_indices = @transform_4, window_bounds = array<i64: 4, 8, 8>}]} {
    %c0 = arith.constant 0 : index
    %c0_0 = arith.constant 0 : index
    %c0_1 = arith.constant 0 : index
    %0 = vector.load %arg2[%c0, %c0_0, %c0_1] : memref<4x8x128xf32, #tpu.memory_space<vmem>>, vector<4x8x128xf32>
    %c0_2 = arith.constant 0 : index
    %c0_3 = arith.constant 0 : index
    %c0_4 = arith.constant 0 : index
    %1 = vector.load %arg3[%c0_2, %c0_3, %c0_4] : memref<4x8x128xf32, #tpu.memory_space<vmem>>, vector<4x8x128xf32>
    %c0_5 = arith.constant 0 : index
    %c0_6 = arith.constant 0 : index
    %c0_7 = arith.constant 0 : index
    %2 = vector.load %arg4[%c0_5, %c0_6, %c0_7] : memref<4x1x8xf32, #tpu.memory_space<vmem>>, vector<4x1x8xf32>
    "tpu.trace_start"() <{level = 10 : i32, message = "bqh,bkh->bqk"}> : () -> ()
    %cst = arith.constant dense<0.000000e+00> : vector<4x8x8xf32>
    %3 = tpu.matmul %0, %1, %cst {dimension_numbers = #tpu.dot_dimension_numbers<[2], [2], [1], [1], [0, 0, 0, 1, 1, 1], [0], [0]>} : vector<4x8x128xf32>, vector<4x8x128xf32>, vector<4x8x8xf32> -> vector<4x8x8xf32>
    %cst_8 = arith.constant 0.000000e+00 : f32
    "tpu.trace_stop"() : () -> ()
    %4 = vector.broadcast %cst_8 : f32 to vector<4x1x8xf32>
    %5 = arith.cmpf ogt, %2, %4 : vector<4x1x8xf32>
    %cst_9 = arith.constant -1.000000e+30 : f32
    %6 = vector.broadcast %cst_9 : f32 to vector<4x8x8xf32>
    %7 = vector.shape_cast %5 : vector<4x1x8xi1> to vector<4x1x8xi1>
    %8 = vector.broadcast %7 : vector<4x1x8xi1> to vector<4x8x8xi1>
    %9 = arith.select %8, %3, %6 : vector<4x8x8xi1>, vector<4x8x8xf32>
    %cst_10 = arith.constant dense<0xFF800000> : vector<4x8xf32>
    %10 = vector.multi_reduction <maximumf>, %9, %cst_10 [2] : vector<4x8x8xf32> to vector<4x8xf32>
    %11 = vector.shape_cast %10 : vector<4x8xf32> to vector<4x8x1xf32>
    %12 = vector.broadcast %11 : vector<4x8x1xf32> to vector<4x8x8xf32>
    %13 = arith.subf %9, %12 : vector<4x8x8xf32>
    %cst_11 = arith.constant 0.000000e+00 : f32
    %14 = vector.broadcast %cst_11 : f32 to vector<4x1x8xf32>
    %15 = arith.cmpf ogt, %2, %14 : vector<4x1x8xf32>
    %16 = math.exp %13 : vector<4x8x8xf32>
    %cst_12 = arith.constant 0.000000e+00 : f32
    %17 = vector.broadcast %cst_12 : f32 to vector<4x8x8xf32>
    %18 = vector.shape_cast %15 : vector<4x1x8xi1> to vector<4x1x8xi1>
    %19 = vector.broadcast %18 : vector<4x1x8xi1> to vector<4x8x8xi1>
    %20 = arith.select %19, %16, %17 : vector<4x8x8xi1>, vector<4x8x8xf32>
    %cst_13 = arith.constant dense<0.000000e+00> : vector<4x8xf32>
    %21 = vector.multi_reduction <add>, %20, %cst_13 [2] : vector<4x8x8xf32> to vector<4x8xf32>
    %22 = vector.shape_cast %21 : vector<4x8xf32> to vector<4x8x1xf32>
    %cst_14 = arith.constant 9.99999968E-21 : f32
    %23 = vector.broadcast %cst_14 : f32 to vector<4x8x1xf32>
    %24 = arith.maximumf %22, %23 : vector<4x8x1xf32>
    %25 = tpu.reciprocal %24 {approx = true} : vector<4x8x1xf32> -> vector<4x8x1xf32>
    %26 = vector.broadcast %25 : vector<4x8x1xf32> to vector<4x8x8xf32>
    %27 = arith.mulf %20, %26 : vector<4x8x8xf32>
    %c0_15 = arith.constant 0 : index
    %c0_16 = arith.constant 0 : index
    %c0_17 = arith.constant 0 : index
    %28 = vector.load %arg6[%c0_15, %c0_16, %c0_17] : memref<4x8x8xf32, #tpu.memory_space<vmem>>, vector<4x8x8xf32>
    tpu.vector_store %arg6[%c0_15, %c0_16, %c0_17], %27 {strides = array<i32>} : memref<4x8x8xf32, #tpu.memory_space<vmem>>, vector<4x8x8xf32>,
    "tpu.trace_start"() <{level = 10 : i32, message = "bqk,bkh->bqh"}> : () -> ()
    %cst_18 = arith.constant dense<0.000000e+00> : vector<4x8x128xf32>
    %29 = tpu.matmul %27, %1, %cst_18 {dimension_numbers = #tpu.dot_dimension_numbers<[2], [1], [1], [2], [0, 0, 0, 1, 1, 2], [0], [0]>} : vector<4x8x8xf32>, vector<4x8x128xf32>, vector<4x8x128xf32> -> vector<4x8x128xf32>
    "tpu.trace_stop"() : () -> ()
    %c0_19 = arith.constant 0 : index
    %c0_20 = arith.constant 0 : index
    %c0_21 = arith.constant 0 : index
    %30 = vector.load %arg5[%c0_19, %c0_20, %c0_21] : memref<4x8x128xf32, #tpu.memory_space<vmem>>, vector<4x8x128xf32>
    tpu.vector_store %arg5[%c0_19, %c0_20, %c0_21], %29 {strides = array<i32>} : memref<4x8x128xf32, #tpu.memory_space<vmem>>, vector<4x8x128xf32>,
    return
  }
  func.func @transform_0(%arg0: i32, %arg1: i32) -> (i32, i32, i32) {
    %c0_i32 = arith.constant 0 : i32
    %c0_i32_0 = arith.constant 0 : i32
    return %arg0, %arg1, %c0_i32 : i32, i32, i32
  }
  func.func @transform_1(%arg0: i32, %arg1: i32) -> (i32, i32, i32) {
    %c0_i32 = arith.constant 0 : i32
    %c0_i32_0 = arith.constant 0 : i32
    %c0_i32_1 = arith.constant 0 : i32
    return %arg0, %c0_i32, %c0_i32_0 : i32, i32, i32
  }
  func.func @transform_2(%arg0: i32, %arg1: i32) -> (i32, i32, i32) {
    %c0_i32 = arith.constant 0 : i32
    %c0_i32_0 = arith.constant 0 : i32
    %c0_i32_1 = arith.constant 0 : i32
    return %arg0, %c0_i32, %c0_i32_0 : i32, i32, i32
  }
  func.func @transform_3(%arg0: i32, %arg1: i32) -> (i32, i32, i32) {
    %c0_i32 = arith.constant 0 : i32
    %c0_i32_0 = arith.constant 0 : i32
    return %arg0, %arg1, %c0_i32 : i32, i32, i32
  }
  func.func @transform_4(%arg0: i32, %arg1: i32) -> (i32, i32, i32) {
    %c0_i32 = arith.constant 0 : i32
    %c0_i32_0 = arith.constant 0 : i32
    return %arg0, %arg1, %c0_i32 : i32, i32, i32
  }
}

module attributes {stable_mosaic.version = 11 : i64} {
  func.func @proj_mix_kernel(%arg0: i32, %arg1: memref<32x256xf32, #tpu.memory_space<vmem>>, %arg2: memref<32x128xf32, #tpu.memory_space<vmem>>, %arg3: memref<256x128xf32, #tpu.memory_space<vmem>>, %arg4: memref<1x128xf32, #tpu.memory_space<vmem>>, %arg5: memref<32x128xf32, #tpu.memory_space<vmem>>) attributes {dimension_semantics = [#tpu.dimension_semantics<parallel>], iteration_bounds = array<i64: 2>, scalar_prefetch = 0 : i64, scratch_operands = 0 : i64, tpu.core_type = #tpu.core_type<tc>, window_params = [{transform_indices = @transform_0, window_bounds = array<i64: 32, 256>}, {transform_indices = @transform_1, window_bounds = array<i64: 32, 128>}, {pipeline_mode = #tpu.pipeline_mode<synchronous>, transform_indices = @transform_2, window_bounds = array<i64: 256, 128>}, {pipeline_mode = #tpu.pipeline_mode<synchronous>, transform_indices = @transform_3, window_bounds = array<i64: 1, 128>}, {transform_indices = @transform_4, window_bounds = array<i64: 32, 128>}]} {
    %c0 = arith.constant 0 : index
    %c0_0 = arith.constant 0 : index
    %0 = vector.load %arg1[%c0, %c0_0] : memref<32x256xf32, #tpu.memory_space<vmem>>, vector<32x256xf32>
    %c0_1 = arith.constant 0 : index
    %c0_2 = arith.constant 0 : index
    %1 = vector.load %arg3[%c0_1, %c0_2] : memref<256x128xf32, #tpu.memory_space<vmem>>, vector<256x128xf32>
    %cst = arith.constant dense<0.000000e+00> : vector<32x128xf32>
    %2 = tpu.matmul %0, %1, %cst {dimension_numbers = #tpu.dot_dimension_numbers<[1], [0], [0], [1], [0, 0, 1, 1], [], []>} : vector<32x256xf32>, vector<256x128xf32>, vector<32x128xf32> -> vector<32x128xf32>
    %c0_3 = arith.constant 0 : index
    %c0_4 = arith.constant 0 : index
    %3 = vector.load %arg4[%c0_3, %c0_4] : memref<1x128xf32, #tpu.memory_space<vmem>>, vector<1x128xf32>
    %4 = vector.broadcast %3 : vector<1x128xf32> to vector<32x128xf32>
    %5 = arith.addf %2, %4 : vector<32x128xf32>
    %6 = tpu.iota {dimensions = array<i32: 1>} : vector<32x128xi32>
    %c24_i32 = arith.constant 24 : i32
    %7 = vector.broadcast %c24_i32 : i32 to vector<32x128xi32>
    %8 = arith.cmpi eq, %6, %7 : vector<32x128xi32>
    %cst_5 = arith.constant 0.000000e+00 : f32
    %9 = vector.broadcast %cst_5 : f32 to vector<32x128xf32>
    %10 = arith.select %8, %5, %9 : vector<32x128xi1>, vector<32x128xf32>
    %cst_6 = arith.constant dense<0.000000e+00> : vector<32xf32>
    %11 = vector.multi_reduction <add>, %10, %cst_6 [1] : vector<32x128xf32> to vector<32xf32>
    %12 = vector.shape_cast %11 : vector<32xf32> to vector<32x1xf32>
    %13 = arith.negf %12 : vector<32x1xf32>
    %14 = math.exp %13 : vector<32x1xf32>
    %cst_7 = arith.constant 1.000000e+00 : f32
    %15 = vector.broadcast %cst_7 : f32 to vector<32x1xf32>
    %16 = arith.addf %15, %14 : vector<32x1xf32>
    %17 = arith.divf %15, %16 : vector<32x1xf32>
    %c24_i32_8 = arith.constant 24 : i32
    %18 = vector.broadcast %c24_i32_8 : i32 to vector<32x128xi32>
    %19 = arith.cmpi slt, %6, %18 : vector<32x128xi32>
    %cst_9 = arith.constant -1.000000e+30 : f32
    %20 = vector.broadcast %cst_9 : f32 to vector<32x128xf32>
    %21 = arith.select %19, %5, %20 : vector<32x128xi1>, vector<32x128xf32>
    %cst_10 = arith.constant dense<0xFF800000> : vector<32xf32>
    %22 = vector.multi_reduction <maximumf>, %21, %cst_10 [1] : vector<32x128xf32> to vector<32xf32>
    %23 = vector.shape_cast %22 : vector<32xf32> to vector<32x1xf32>
    %24 = vector.broadcast %23 : vector<32x1xf32> to vector<32x128xf32>
    %25 = arith.subf %21, %24 : vector<32x128xf32>
    %26 = math.exp %25 : vector<32x128xf32>
    %cst_11 = arith.constant 0.000000e+00 : f32
    %27 = vector.broadcast %cst_11 : f32 to vector<32x128xf32>
    %28 = arith.select %19, %26, %27 : vector<32x128xi1>, vector<32x128xf32>
    %cst_12 = arith.constant dense<0.000000e+00> : vector<32xf32>
    %29 = vector.multi_reduction <add>, %28, %cst_12 [1] : vector<32x128xf32> to vector<32xf32>
    %30 = vector.shape_cast %29 : vector<32xf32> to vector<32x1xf32>
    %31 = vector.broadcast %30 : vector<32x1xf32> to vector<32x128xf32>
    %32 = arith.divf %28, %31 : vector<32x128xf32>
    %33 = vector.broadcast %17 : vector<32x1xf32> to vector<32x128xf32>
    %34 = arith.mulf %33, %32 : vector<32x128xf32>
    %cst_13 = arith.constant 1.000000e+00 : f32
    %35 = vector.broadcast %cst_13 : f32 to vector<32x1xf32>
    %36 = arith.subf %35, %17 : vector<32x1xf32>
    %c0_14 = arith.constant 0 : index
    %c0_15 = arith.constant 0 : index
    %37 = vector.load %arg2[%c0_14, %c0_15] : memref<32x128xf32, #tpu.memory_space<vmem>>, vector<32x128xf32>
    %38 = vector.broadcast %36 : vector<32x1xf32> to vector<32x128xf32>
    %39 = arith.mulf %38, %37 : vector<32x128xf32>
    %40 = arith.addf %34, %39 : vector<32x128xf32>
    %c0_16 = arith.constant 0 : index
    %c0_17 = arith.constant 0 : index
    %41 = vector.load %arg5[%c0_16, %c0_17] : memref<32x128xf32, #tpu.memory_space<vmem>>, vector<32x128xf32>
    tpu.vector_store %arg5[%c0_16, %c0_17], %40 {strides = array<i32>} : memref<32x128xf32, #tpu.memory_space<vmem>>, vector<32x128xf32>,
    return
  }
  func.func @transform_0(%arg0: i32) -> (i32, i32) {
    %c0_i32 = arith.constant 0 : i32
    %c0_i32_0 = arith.constant 0 : i32
    return %arg0, %c0_i32 : i32, i32
  }
  func.func @transform_1(%arg0: i32) -> (i32, i32) {
    %c0_i32 = arith.constant 0 : i32
    %c0_i32_0 = arith.constant 0 : i32
    return %arg0, %c0_i32 : i32, i32
  }
  func.func @transform_2(%arg0: i32) -> (i32, i32) {
    %c0_i32 = arith.constant 0 : i32
    %c0_i32_0 = arith.constant 0 : i32
    %c0_i32_1 = arith.constant 0 : i32
    return %c0_i32, %c0_i32_0 : i32, i32
  }
  func.func @transform_3(%arg0: i32) -> (i32, i32) {
    %c0_i32 = arith.constant 0 : i32
    %c0_i32_0 = arith.constant 0 : i32
    %c0_i32_1 = arith.constant 0 : i32
    return %c0_i32, %c0_i32_0 : i32, i32
  }
  func.func @transform_4(%arg0: i32) -> (i32, i32) {
    %c0_i32 = arith.constant 0 : i32
    %c0_i32_0 = arith.constant 0 : i32
    return %arg0, %c0_i32 : i32, i32
  }
}

module attributes {stable_mosaic.version = 11 : i64} {
  func.func @copy_kernel(%arg0: i32, %arg1: i32, %arg2: memref<4x8x8xf32, #tpu.memory_space<vmem>>, %arg3: memref<4x8x1xi32, #tpu.memory_space<vmem>>, %arg4: memref<4x8x128xf32, #tpu.memory_space<vmem>>) attributes {dimension_semantics = [#tpu.dimension_semantics<parallel>, #tpu.dimension_semantics<parallel>], iteration_bounds = array<i64: 2, 1>, scalar_prefetch = 0 : i64, scratch_operands = 0 : i64, tpu.core_type = #tpu.core_type<tc>, window_params = [{transform_indices = @transform_0, window_bounds = array<i64: 4, 8, 8>}, {transform_indices = @transform_1, window_bounds = array<i64: 4, 8, 1>}, {transform_indices = @transform_2, window_bounds = array<i64: 4, 8, 128>}]} {
    %c128_i32 = arith.constant 128 : i32
    %0 = arith.muli %arg1, %c128_i32 : i32
    %c0 = arith.constant 0 : index
    %c0_0 = arith.constant 0 : index
    %c0_1 = arith.constant 0 : index
    %1 = vector.load %arg2[%c0, %c0_0, %c0_1] : memref<4x8x8xf32, #tpu.memory_space<vmem>>, vector<4x8x8xf32>
    %2 = arith.truncf %1 : vector<4x8x8xf32> to vector<4x8x8xbf16>
    %c0_2 = arith.constant 0 : index
    %c0_3 = arith.constant 0 : index
    %c0_4 = arith.constant 0 : index
    %3 = vector.load %arg3[%c0_2, %c0_3, %c0_4] : memref<4x8x1xi32, #tpu.memory_space<vmem>>, vector<4x8x1xi32>
    %4 = tpu.iota {dimensions = array<i32: 2>} : vector<4x8x128xi32>
    %5 = vector.broadcast %0 : i32 to vector<4x8x128xi32>
    %6 = arith.addi %4, %5 : vector<4x8x128xi32>
    %7 = vector.broadcast %3 : vector<4x8x1xi32> to vector<4x8x128xi32>
    %8 = arith.cmpi eq, %7, %6 : vector<4x8x128xi32>
    %9 = arith.extui %8 : vector<4x8x128xi1> to vector<4x8x128xi32>
    %10 = arith.sitofp %9 : vector<4x8x128xi32> to vector<4x8x128xf32>
    %11 = arith.truncf %10 : vector<4x8x128xf32> to vector<4x8x128xbf16>
    "tpu.trace_start"() <{level = 10 : i32, message = "bqk,bkv->bqv"}> : () -> ()
    %cst = arith.constant dense<0.000000e+00> : vector<4x8x128xf32>
    %12 = tpu.matmul %2, %11, %cst {dimension_numbers = #tpu.dot_dimension_numbers<[2], [1], [1], [2], [0, 0, 0, 1, 1, 2], [0], [0]>} : vector<4x8x8xbf16>, vector<4x8x128xbf16>, vector<4x8x128xf32> -> vector<4x8x128xf32>
    "tpu.trace_stop"() : () -> ()
    %c0_5 = arith.constant 0 : index
    %c0_6 = arith.constant 0 : index
    %c0_7 = arith.constant 0 : index
    %13 = vector.load %arg4[%c0_5, %c0_6, %c0_7] : memref<4x8x128xf32, #tpu.memory_space<vmem>>, vector<4x8x128xf32>
    tpu.vector_store %arg4[%c0_5, %c0_6, %c0_7], %12 {strides = array<i32>} : memref<4x8x128xf32, #tpu.memory_space<vmem>>, vector<4x8x128xf32>,
    return
  }
  func.func @transform_0(%arg0: i32, %arg1: i32) -> (i32, i32, i32) {
    %c0_i32 = arith.constant 0 : i32
    %c0_i32_0 = arith.constant 0 : i32
    %c0_i32_1 = arith.constant 0 : i32
    return %arg0, %c0_i32, %c0_i32_0 : i32, i32, i32
  }
  func.func @transform_1(%arg0: i32, %arg1: i32) -> (i32, i32, i32) {
    %c0_i32 = arith.constant 0 : i32
    %c0_i32_0 = arith.constant 0 : i32
    %c0_i32_1 = arith.constant 0 : i32
    return %arg0, %c0_i32, %c0_i32_0 : i32, i32, i32
  }
  func.func @transform_2(%arg0: i32, %arg1: i32) -> (i32, i32, i32) {
    %c0_i32 = arith.constant 0 : i32
    %c0_i32_0 = arith.constant 0 : i32
    return %arg0, %c0_i32, %arg1 : i32, i32, i32
  }
}

</mosaic_0001>

<llo_original>
// kernel: encdec_forward.7
$region0: #{encdec_forward.7}
  #allocation0 [shape = 'u32[]', space=smem, size = 0x4, offset = 0x4, fixed_abs, tag = 'smem constant byte address 0x4 - core index']
  #allocation1 [shape = 'u32[144,128]{1,0:T(1,128)}', space=vmem, size = 0x12000, scoped, tag = 'internal scratch']
  %s0 = inlined_call_operand.vmem [shape: f32[64,16], index: 0, kind: input, shape index: {}]
  %s1 = inlined_call_operand.vmem [shape: f32[16,384], index: 1, kind: input, shape index: {}]
  %s2 = inlined_call_operand.vmem [shape: f32[1,384], index: 2, kind: input, shape index: {}]
  %s3 = inlined_call_operand.vmem [shape: f32[64,384], index: 3, kind: output, shape index: {}]
  %s4 = sld [smem:[#allocation0]]
  $region45: #{encdec_forward.7} parent=0
    _
  %s6 = ssub.s32 1, %s4
  %s7 = scalar_select 0, %s6, %s4
  loop: start=0, step=1, limit=4
  $region2: #{encdec_forward.7} parent=0 // loop_pre_header
    _
  $region3: #{encdec_forward.7} parent=0 // loop_header
    %s9 = sphi 0, %s13
    %p10 = scmp.ge.s32.totalorder %s9, 4
    %s19 = sphi 0, %s21
    %s22 = sphi 0, %s19
    %s23 = sphi 0, %s22
    %s39 = sphi 0, %s23
    %s43 = sphi 0, %s43
    %s45 = sphi 0, %s43
    %s46 = sphi 0, %s45
    %s60 = sphi 0, %s46
    %s64 = sphi 0, %s64
    %s66 = sphi 0, %s64
    %s67 = sphi 0, %s66
    %s81 = sphi 0, %s67
    %s87 = sphi 0, %s89
    %s90 = sphi 0, %s87
    %s91 = sphi 0, %s90
    %s107 = sphi 0, %s91
  $region4: #{encdec_forward.7} parent=0 // loop_header_branch
    %12 = sbr.rel (%p10) target = $region8
  $region5: #{encdec_forward.7} parent=0 // loop_body
    %s14 = ssub.s32 %s9, 1
    %s15 = ssub.s32 %s9, 2
    %s16 = sadd.s32 %s9, 1
    %s17 = ssub.s32 %s9, %s16
    %p18 = scmp.eq.s32.totalorder %s17, 0
    %s20 = sadd.s32 %s19, 1
    %s21 = scalar_select %p18, %s19, %s20
    %p24 = pneg %p18
    %p25 = scmp.eq.s32.totalorder %s9, 1
    %p26 = por %p24, %p25
    %p27 = scmp.ne.s32.totalorder %s19, %s22
    %p28 = scmp.eq.s32.totalorder %s9, 0
    %p29 = por %p27, %p28
    %p30 = scmp.ne.s32.totalorder %s19, %s22
    %p31 = scmp.eq.s32.totalorder %s14, 1
    %p32 = por %p30, %p31
    %p33 = scmp.ne.s32.totalorder %s22, %s23
    %p34 = scmp.eq.s32.totalorder %s14, 0
    %p35 = por %p33, %p34
    %p36 = scmp.ne.s32.totalorder %s22, %s23
    %p37 = scmp.eq.s32.totalorder %s15, 1
    %p38 = por %p36, %p37
    %p40 = scmp.ne.s32.totalorder %s23, %s39
    %p41 = scmp.eq.s32.totalorder %s15, 0
    %p42 = por %p40, %p41
    %s44 = sadd.s32 %s43, 1
    %p47 = scmp.eq.s32.totalorder %s9, 1
    %p48 = scmp.ne.s32.totalorder %s43, %s45
    %p49 = scmp.eq.s32.totalorder %s9, 0
    %p50 = por %p48, %p49
    %p51 = scmp.ne.s32.totalorder %s43, %s45
    %p52 = scmp.eq.s32.totalorder %s14, 1
    %p53 = por %p51, %p52
    %p54 = scmp.ne.s32.totalorder %s45, %s46
    %p55 = scmp.eq.s32.totalorder %s14, 0
    %p56 = por %p54, %p55
    %p57 = scmp.ne.s32.totalorder %s45, %s46
    %p58 = scmp.eq.s32.totalorder %s15, 1
    %p59 = por %p57, %p58
    %p61 = scmp.ne.s32.totalorder %s46, %s60
    %p62 = scmp.eq.s32.totalorder %s15, 0
    %p63 = por %p61, %p62
    %s65 = sadd.s32 %s64, 1
    %p68 = scmp.eq.s32.totalorder %s9, 1
    %p69 = scmp.ne.s32.totalorder %s64, %s66
    %p70 = scmp.eq.s32.totalorder %s9, 0
    %p71 = por %p69, %p70
    %p72 = scmp.ne.s32.totalorder %s64, %s66
    %p73 = scmp.eq.s32.totalorder %s14, 1
    %p74 = por %p72, %p73
    %p75 = scmp.ne.s32.totalorder %s66, %s67
    %p76 = scmp.eq.s32.totalorder %s14, 0
    %p77 = por %p75, %p76
    %p78 = scmp.ne.s32.totalorder %s66, %s67
    %p79 = scmp.eq.s32.totalorder %s15, 1
    %p80 = por %p78, %p79
    %p82 = scmp.ne.s32.totalorder %s67, %s81
    %p83 = scmp.eq.s32.totalorder %s15, 0
    %p84 = por %p82, %p83
    %s85 = ssub.s32 %s9, %s16
    %p86 = scmp.eq.s32.totalorder %s85, 0
    %s88 = sadd.s32 %s87, 1
    %s89 = scalar_select %p86, %s87, %s88
    %p92 = pneg %p86
    %p93 = scmp.eq.s32.totalorder %s9, 1
    %p94 = por %p92, %p93
    %p95 = scmp.ne.s32.totalorder %s87, %s90
    %p96 = scmp.eq.s32.totalorder %s9, 0
    %p97 = por %p95, %p96
    %p98 = scmp.ne.s32.totalorder %s87, %s90
    %p99 = scmp.eq.s32.totalorder %s14, 1
    %p100 = por %p98, %p99
    %p101 = scmp.ne.s32.totalorder %s90, %s91
    %p102 = scmp.eq.s32.totalorder %s14, 0
    %p103 = por %p101, %p102
    %p104 = scmp.ne.s32.totalorder %s90, %s91
    %p105 = scmp.eq.s32.totalorder %s15, 1
    %p106 = por %p104, %p105
    %p108 = scmp.ne.s32.totalorder %s91, %s107
    %p109 = scmp.eq.s32.totalorder %s15, 0
    %p110 = por %p108, %p109
    %p111 = scmp.le.s32.totalorder 1, %s9
    %p112 = scmp.lt.s32.totalorder %s9, 3
    %p113 = pnand %p111, %p112
    %p114 = pneg %p113
    // Predicated region
    $region9: #{encdec_forward.7} parent=5 // pred_check
      _
    $region10: #{encdec_forward.7} parent=5 // pred_check_branch
      %116 = sbr.rel (%p113) target = $region12
    $region11: #{encdec_forward.7} parent=5 // pred_region
      %s117 = ssub.s32 %s9, 1
      // Predicated region
      $region13: #{encdec_forward.7} parent=11 // pred_check
        %p118 = pneg %p56
      $region14: #{encdec_forward.7} parent=11 // pred_check_branch
        %120 = sbr.rel (%p118) target = $region16
      $region15: #{encdec_forward.7} parent=11 // pred_region
        _
      $region16: #{encdec_forward.7} parent=11 // pred_fallthru
        _
      // Predicated region
      $region17: #{encdec_forward.7} parent=11 // pred_check
        %p121 = pneg %p77
      $region18: #{encdec_forward.7} parent=11 // pred_check_branch
        %123 = sbr.rel (%p121) target = $region20
      $region19: #{encdec_forward.7} parent=11 // pred_region
        _
      $region20: #{encdec_forward.7} parent=11 // pred_fallthru
        _
    $region12: #{encdec_forward.7} parent=5 // pred_fallthru
      _
    %p124 = scmp.lt.s32.totalorder %s9, 2
    // Predicated region
    $region21: #{encdec_forward.7} parent=5 // pred_check
      %p125 = pneg %p124
    $region22: #{encdec_forward.7} parent=5 // pred_check_branch
      %127 = sbr.rel (%p125) target = $region24
    $region23: #{encdec_forward.7} parent=5 // pred_region
      // Predicated region
      $region25: #{encdec_forward.7} parent=23 // pred_check
        %p128 = pneg %p29
      $region26: #{encdec_forward.7} parent=23 // pred_check_branch
        %130 = sbr.rel (%p128) target = $region28
      $region27: #{encdec_forward.7} parent=23 // pred_region
        %s131 = smul.u32 4, %s9
        %p132 = scmp.lt.s32.totalorder %s131, 7
        %s133 = scalar_select %p132, %s131, 7
        %s134 = smul.addr %s133, 8
        %s135 = scalar_lea.vmem %s0, %s134
        %s136 = smul.u32 4, %s9
      $region28: #{encdec_forward.7} parent=23 // pred_fallthru
        _
    $region24: #{encdec_forward.7} parent=5 // pred_fallthru
      _
    %p137 = scmp.le.s32.totalorder 1, %s9
    %p138 = scmp.lt.s32.totalorder %s9, 3
    %p139 = pnand %p137, %p138
    %p140 = pneg %p139
    // Predicated region
    $region29: #{encdec_forward.7} parent=5 // pred_check
      _
    $region30: #{encdec_forward.7} parent=5 // pred_check_branch
      %142 = sbr.rel (%p139) target = $region32
    $region31: #{encdec_forward.7} parent=5 // pred_region
      %s143 = ssub.s32 %s9, 1
      %s144 = smul.u32 4, %s14
      %p145 = scmp.lt.s32.totalorder %s144, 7
      %s146 = scalar_select %p145, %s144, 7
      %s147 = smul.addr %s146, 8
      %s148 = scalar_lea.vmem %s0, %s147
      %p149 = pneg %p35
      %p150 = pneg %p32
      %p151 = pneg %p56
      %p152 = pneg %p53
      %p153 = pneg %p77
      %p154 = pneg %p74
      %p155 = pneg %p103
      %p156 = pneg %p100
      %s157 = smul.u32 4, %s14
      %p158 = scmp.lt.s32.totalorder %s157, 7
      %s159 = scalar_select %p158, %s157, 7
      %s160 = smul.addr %s159, 3
      %s161 = smul.addr %s160, 8
      %s162 = scalar_lea.vmem %s3, %s161
      %s163 = smul.u32 4, %s14
      %p164 = scmp.lt.s32.totalorder %s163, 7
      %s165 = scalar_select %p164, %s163, 7
      %s166 = smul.addr %s165, 8
      %s167 = scalar_lea.vmem %s0, %s166
      %s168 = smul.u32 4, %s14
      %s169 = smul.u32 4, %s14
      %p170 = scmp.lt.s32.totalorder %s169, 7
      %s171 = scalar_select %p170, %s169, 7
      %s172 = smul.addr %s171, 3
      %s173 = smul.addr %s172, 8
      %s174 = scalar_lea.vmem %s3, %s173
      %s175 = smul.u32 4, %s14
      %v176 = vld [vmem:[%s167] sm:$0xff]
      %v177 = vld [vmem:[%s167 + $0x8] sm:$0xff]
      %v178 = vld [vmem:[%s167 + $0x10] sm:$0xff]
      %v179 = vld [vmem:[%s167 + $0x18] sm:$0xff]
      %v180 = vld [vmem:[%s1] sm:$0xff]
      %v181 = vld [vmem:[%s1 + $0x8] sm:$0xff]
      %v182 = vld [vmem:[%s1 + $0x10] sm:$0xff]
      %v183 = vld [vmem:[%s1 + $0x18] sm:$0xff]
      %v184 = vld [vmem:[%s1 + $0x20] sm:$0xff]
      %v185 = vld [vmem:[%s1 + $0x28] sm:$0xff]
      %v186 = vld [vmem:[%s2] sm:$0x7]
      %v188 = vlaneseq
      %v189 = vshrl.u32 %v188, 7
      %v190 = vsub.s32 0, %v189
      %v191 = vrot.slane %v186, %v190
      %v192 = vlaneseq
      %v193 = vshrl.u32 %v192, 7
      %v194 = vsub.s32 1, %v193
      %v195 = vrot.slane %v186, %v194
      %v196 = vlaneseq
      %v197 = vshrl.u32 %v196, 7
      %v198 = vsub.s32 2, %v197
      %v199 = vrot.slane %v186, %v198
      %vm203 = vcmask 130048
      %v205 = vsel %vm203, %v176, 0
      %v208 = vsel %vm203, %v177, 0
      %v211 = vsel %vm203, %v178, 0
      %v214 = vsel %vm203, %v179, 0
      %216 = vmatprep.subr.mxu0 %v181
      %217 = vmatpush1.msra.mxu0 %v180
      %218 = vmatprep.subr.mxu0 %v184
      %219 = vmatpush1.msra.mxu0 %v183
      %220 = vmatprep.subr.mxu0 0.0
      %221 = vmatpush1.msra.mxu0 0.0
      %222 = vmatprep.subr.mxu0 0.0
      %223 = vmatpush1.msra.mxu0 0.0
      %224 = vmatprep.subr.mxu0 0.0
      %225 = vmatpush1.msra.mxu0 0.0
      %226 = vmatprep.subr.mxu0 0.0
      %227 = vmatpush1.msra.mxu0 0.0
      %228 = vmatprep.subr.mxu0 0.0
      %229 = vmatpush1.msra.mxu0 0.0
      %230 = vmatprep.subr.mxu0 0.0
      %231 = vmatpush1.msra.mxu0 0.0
      %232 = vmatprep.subr.mxu0 0.0
      %233 = vmatpush1.msra.mxu0 0.0
      %234 = vmatprep.subr.mxu0 0.0
      %235 = vmatpush1.msra.mxu0 0.0
      %236 = vmatprep.subr.mxu0 0.0
      %237 = vmatpush1.msra.mxu0 0.0
      %238 = vmatprep.subr.mxu0 0.0
      %239 = vmatpush1.msra.mxu0 0.0
      %240 = vmatprep.subr.mxu0 0.0
      %241 = vmatpush1.msra.mxu0 0.0
      %242 = vmatprep.subr.mxu0 0.0
      %243 = vmatpush1.msra.mxu0 0.0
      %244 = vmatprep.subr.mxu0 0.0
      %245 = vmatpush1.msra.mxu0 0.0
      %246 = vmatprep.subr.mxu0 0.0
      %247 = vmatpush1.msra.mxu0 0.0
      %248 = vmatprep.subr.mxu0 0.0
      %249 = vmatpush1.msra.mxu0 0.0
      %250 = vmatprep.subr.mxu0 0.0
      %251 = vmatpush1.msra.mxu0 0.0
      %252 = vmatprep.subr.mxu0 0.0
      %253 = vmatpush1.msra.mxu0 0.0
      %254 = vmatprep.subr.mxu0 0.0
      %255 = vmatpush1.msra.mxu0 0.0
      %256 = vmatprep.subr.mxu0 0.0
      %257 = vmatpush1.msra.mxu0 0.0
      %258 = vmatprep.subr.mxu0 0.0
      %259 = vmatpush1.msra.mxu0 0.0
      %260 = vmatprep.subr.mxu0 0.0
      %261 = vmatpush1.msra.mxu0 0.0
      %262 = vmatprep.subr.mxu0 0.0
      %263 = vmatpush1.msra.mxu0 0.0
      %264 = vmatprep.subr.mxu0 0.0
      %265 = vmatpush1.msra.mxu0 0.0
      %266 = vmatprep.subr.mxu0 0.0
      %267 = vmatpush1.msra.mxu0 0.0
      %268 = vmatprep.subr.mxu0 0.0
      %269 = vmatpush1.msra.mxu0 0.0
      %270 = vmatprep.subr.mxu0 0.0
      %271 = vmatpush1.msra.mxu0 0.0
      %272 = vmatprep.subr.mxu0 0.0
      %273 = vmatpush1.msra.mxu0 0.0
      %274 = vmatprep.subr.mxu0 0.0
      %275 = vmatpush1.msra.mxu0 0.0
      %276 = vmatprep.subr.mxu0 0.0
      %277 = vmatpush1.msra.mxu0 0.0
      %278 = vmatprep.subr.mxu0 0.0
      %279 = vmatpush1.msra.mxu0 0.0
      %280 = vmatprep.mubr.f32.mxu0 0.0
      %281 = vmatmul.mubr.f32.gmra.mrb[0].mxu0 %v205
      %v282 = vpop.f32.mrb[0].mxu0
      %v283 = vadd.f32 %v191, %v282
      %v284 = vpop.f32.mrb[0].mxu0
      %v285 = vadd.f32 %v195, %v284
      %286 = vmatprep.mubr.f32.mxu0 0.0
      %287 = vmatmul.mubr.f32.gmra.mrb[0].mxu0 %v208
      %v288 = vpop.f32.mrb[0].mxu0
      %v289 = vadd.f32 %v191, %v288
      %v290 = vpop.f32.mrb[0].mxu0
      %v291 = vadd.f32 %v195, %v290
      %292 = vmatprep.mubr.f32.mxu0 0.0
      %293 = vmatmul.mubr.f32.gmra.mrb[0].mxu0 %v211
      %v294 = vpop.f32.mrb[0].mxu0
      %v295 = vadd.f32 %v191, %v294
      %v296 = vpop.f32.mrb[0].mxu0
      %v297 = vadd.f32 %v195, %v296
      %298 = vmatprep.mubr.f32.mxu0 0.0
      %299 = vmatmul.mubr.f32.gmra.mrb[0].mxu0 %v214
      %v300 = vpop.f32.mrb[0].mxu0
      %v301 = vadd.f32 %v191, %v300
      %v302 = vpop.f32.mrb[0].mxu0
      %v303 = vadd.f32 %v195, %v302
      %304 = vdwg.mxu0
      %305 = vmatprep.subr.mxu0 0.0
      %306 = vmatpush1.msra.mxu0 %v182
      %307 = vmatprep.subr.mxu0 0.0
      %308 = vmatpush1.msra.mxu0 %v185
      %309 = vmatprep.subr.mxu0 0.0
      %310 = vmatpush1.msra.mxu0 0.0
      %311 = vmatprep.subr.mxu0 0.0
      %312 = vmatpush1.msra.mxu0 0.0
      %313 = vmatprep.subr.mxu0 0.0
      %314 = vmatpush1.msra.mxu0 0.0
      %315 = vmatprep.subr.mxu0 0.0
      %316 = vmatpush1.msra.mxu0 0.0
      %317 = vmatprep.subr.mxu0 0.0
      %318 = vmatpush1.msra.mxu0 0.0
      %319 = vmatprep.subr.mxu0 0.0
      %320 = vmatpush1.msra.mxu0 0.0
      %321 = vmatprep.subr.mxu0 0.0
      %322 = vmatpush1.msra.mxu0 0.0
      %323 = vmatprep.subr.mxu0 0.0
      %324 = vmatpush1.msra.mxu0 0.0
      %325 = vmatprep.subr.mxu0 0.0
      %326 = vmatpush1.msra.mxu0 0.0
      %327 = vmatprep.subr.mxu0 0.0
      %328 = vmatpush1.msra.mxu0 0.0
      %329 = vmatprep.subr.mxu0 0.0
      %330 = vmatpush1.msra.mxu0 0.0
      %331 = vmatprep.subr.mxu0 0.0
      %332 = vmatpush1.msra.mxu0 0.0
      %333 = vmatprep.subr.mxu0 0.0
      %334 = vmatpush1.msra.mxu0 0.0
      %335 = vmatprep.subr.mxu0 0.0
      %336 = vmatpush1.msra.mxu0 0.0
      %337 = vmatprep.subr.mxu0 0.0
      %338 = vmatpush1.msra.mxu0 0.0
      %339 = vmatprep.subr.mxu0 0.0
      %340 = vmatpush1.msra.mxu0 0.0
      %341 = vmatprep.subr.mxu0 0.0
      %342 = vmatpush1.msra.mxu0 0.0
      %343 = vmatprep.subr.mxu0 0.0
      %344 = vmatpush1.msra.mxu0 0.0
      %345 = vmatprep.subr.mxu0 0.0
      %346 = vmatpush1.msra.mxu0 0.0
      %347 = vmatprep.subr.mxu0 0.0
      %348 = vmatpush1.msra.mxu0 0.0
      %349 = vmatprep.subr.mxu0 0.0
      %350 = vmatpush1.msra.mxu0 0.0
      %351 = vmatprep.subr.mxu0 0.0
      %352 = vmatpush1.msra.mxu0 0.0
      %353 = vmatprep.subr.mxu0 0.0
      %354 = vmatpush1.msra.mxu0 0.0
      %355 = vmatprep.subr.mxu0 0.0
      %356 = vmatpush1.msra.mxu0 0.0
      %357 = vmatprep.subr.mxu0 0.0
      %358 = vmatpush1.msra.mxu0 0.0
      %359 = vmatprep.subr.mxu0 0.0
      %360 = vmatpush1.msra.mxu0 0.0
      %361 = vmatprep.subr.mxu0 0.0
      %362 = vmatpush1.msra.mxu0 0.0
      %363 = vmatprep.subr.mxu0 0.0
      %364 = vmatpush1.msra.mxu0 0.0
      %365 = vmatprep.subr.mxu0 0.0
      %366 = vmatpush1.msra.mxu0 0.0
      %367 = vmatprep.subr.mxu0 0.0
      %368 = vmatpush1.msra.mxu0 0.0
      %369 = vmatprep.mubr.f32.mxu0 0.0
      %370 = vmatmul.mubr.f32.gmra.mrb[0].mxu0 %v205
      %v371 = vpop.f32.mrb[0].mxu0
      %v372 = vadd.f32 %v199, %v371
      %v373 = vpop.f32.mrb[0].mxu0
      %374 = vmatprep.mubr.f32.mxu0 0.0
      %375 = vmatmul.mubr.f32.gmra.mrb[0].mxu0 %v208
      %v376 = vpop.f32.mrb[0].mxu0
      %v377 = vadd.f32 %v199, %v376
      %v378 = vpop.f32.mrb[0].mxu0
      %379 = vmatprep.mubr.f32.mxu0 0.0
      %380 = vmatmul.mubr.f32.gmra.mrb[0].mxu0 %v211
      %v381 = vpop.f32.mrb[0].mxu0
      %v382 = vadd.f32 %v199, %v381
      %v383 = vpop.f32.mrb[0].mxu0
      %384 = vmatprep.mubr.f32.mxu0 0.0
      %385 = vmatmul.mubr.f32.gmra.mrb[0].mxu0 %v214
      %v386 = vpop.f32.mrb[0].mxu0
      %v387 = vadd.f32 %v199, %v386
      %v388 = vpop.f32.mrb[0].mxu0
      %389 = vdwg.mxu0
      %390 = vst [vmem:[%s174] sm:$0xff] %v283
      %391 = vst [vmem:[%s174 + $0x8] sm:$0xff] %v285
      %392 = vst [vmem:[%s174 + $0x10] sm:$0xff] %v372
      %393 = vst [vmem:[%s174 + $0x18] sm:$0xff] %v289
      %394 = vst [vmem:[%s174 + $0x20] sm:$0xff] %v291
      %395 = vst [vmem:[%s174 + $0x28] sm:$0xff] %v377
      %396 = vst [vmem:[%s174 + $0x30] sm:$0xff] %v295
      %397 = vst [vmem:[%s174 + $0x38] sm:$0xff] %v297
      %398 = vst [vmem:[%s174 + $0x40] sm:$0xff] %v382
      %399 = vst [vmem:[%s174 + $0x48] sm:$0xff] %v301
      %400 = vst [vmem:[%s174 + $0x50] sm:$0xff] %v303
      %401 = vst [vmem:[%s174 + $0x58] sm:$0xff] %v387
      %s402 = smul.u32 4, %s14
      %p403 = scmp.lt.s32.totalorder %s402, 7
      %s404 = scalar_select %p403, %s402, 7
      %s405 = smul.addr %s404, 3
      %s406 = smul.addr %s405, 8
      %s407 = scalar_lea.vmem %s3, %s406
      // Predicated region
      $region33: #{encdec_forward.7} parent=31 // pred_check
        %p408 = pneg %p100
      $region34: #{encdec_forward.7} parent=31 // pred_check_branch
        %410 = sbr.rel (%p408) target = $region36
      $region35: #{encdec_forward.7} parent=31 // pred_region
        %s411 = smul.u32 4, %s14
      $region36: #{encdec_forward.7} parent=31 // pred_fallthru
        _
    $region32: #{encdec_forward.7} parent=5 // pred_fallthru
      _
    %p412 = scmp.le.s32.totalorder 2, %s9
    // Predicated region
    $region37: #{encdec_forward.7} parent=5 // pred_check
      %p413 = pneg %p412
    $region38: #{encdec_forward.7} parent=5 // pred_check_branch
      %415 = sbr.rel (%p413) target = $region40
    $region39: #{encdec_forward.7} parent=5 // pred_region
      %s416 = ssub.s32 %s9, 2
      // Predicated region
      $region41: #{encdec_forward.7} parent=39 // pred_check
        %p417 = pneg %p106
      $region42: #{encdec_forward.7} parent=39 // pred_check_branch
        %419 = sbr.rel (%p417) target = $region44
      $region43: #{encdec_forward.7} parent=39 // pred_region
        %s420 = smul.u32 4, %s15
        %p421 = scmp.lt.s32.totalorder %s420, 7
        %s422 = scalar_select %p421, %s420, 7
        %s423 = smul.addr %s422, 3
        %s424 = smul.addr %s423, 8
        %s425 = scalar_lea.vmem %s3, %s424
      $region44: #{encdec_forward.7} parent=39 // pred_fallthru
        _
    $region40: #{encdec_forward.7} parent=5 // pred_fallthru
      _
  $region6: #{encdec_forward.7} parent=0 // loop_footer
    %s13 = sadd.s32 1, %s9
  $region7: #{encdec_forward.7} parent=0 // loop_footer_branch
    %8 = sbr.rel target = $region3
  $region8: #{encdec_forward.7} parent=0 // loop_exit
    _

// kernel: encdec_forward.8
$region0: #{encdec_forward.8}
  #allocation0 [shape = 'u32[]', space=smem, size = 0x4, offset = 0x4, fixed_abs, tag = 'smem constant byte address 0x4 - core index']
  #allocation1 [shape = 'u32[144,128]{1,0:T(1,128)}', space=vmem, size = 0x12000, scoped, tag = 'internal scratch']
  #allocation2 [shape = 'f32[8,128]{1,0:T(8,128)}', space=vmem, size = 0x1000, scoped, tag = 'scratch operand']
  %s0 = inlined_call_operand.vmem [shape: f32[8,8,384], index: 0, kind: input, shape index: {}]
  %s1 = inlined_call_operand.vmem [shape: f32[8,8,1], index: 1, kind: input, shape index: {}]
  %s2 = inlined_call_operand.vmem [shape: f32[128,384], index: 2, kind: input, shape index: {}]
  %s3 = inlined_call_operand.vmem [shape: f32[8,128], index: 3, kind: input, shape index: {}]
  %s4 = inlined_call_operand.vmem [shape: f32[8,8,128], index: 4, kind: output, shape index: {0}]
  %s5 = inlined_call_operand.vmem [shape: f32[8,128], index: 5, kind: output, shape index: {1}]
  %6 = xla_tuple %s4, %s5
  %s7 = sld [smem:[#allocation0]]
  $region65: #{encdec_forward.8} parent=0
    _
  %s9 = ssub.s32 1, %s7
  %s10 = scalar_select 0, %s9, %s7
  loop: start=0, step=1, limit=10
  $region2: #{encdec_forward.8} parent=0 // loop_pre_header
    _
  $region3: #{encdec_forward.8} parent=0 // loop_header
    %s12 = sphi 0, %s16
    %p13 = scmp.ge.s32.totalorder %s12, 10
    %s22 = sphi 0, %s24
    %s25 = sphi 0, %s22
    %s26 = sphi 0, %s25
    %s42 = sphi 0, %s26
    %s48 = sphi 0, %s50
    %s51 = sphi 0, %s48
    %s52 = sphi 0, %s51
    %s68 = sphi 0, %s52
    %s72 = sphi 0, %s72
    %s74 = sphi 0, %s72
    %s75 = sphi 0, %s74
    %s89 = sphi 0, %s75
    %s93 = sphi 0, %s93
    %s95 = sphi 0, %s93
    %s96 = sphi 0, %s95
    %s110 = sphi 0, %s96
    %s116 = sphi 0, %s118
    %s119 = sphi 0, %s116
    %s120 = sphi 0, %s119
    %s136 = sphi 0, %s120
    %s140 = sphi 0, %s140
    %s142 = sphi 0, %s140
    %s143 = sphi 0, %s142
    %s157 = sphi 0, %s143
  $region4: #{encdec_forward.8} parent=0 // loop_header_branch
    %15 = sbr.rel (%p13) target = $region8
  $region5: #{encdec_forward.8} parent=0 // loop_body
    %s17 = ssub.s32 %s12, 1
    %s18 = ssub.s32 %s12, 2
    %s19 = sadd.s32 %s12, 1
    %s20 = ssub.s32 %s12, %s19
    %p21 = scmp.eq.s32.totalorder %s20, 0
    %s23 = sadd.s32 %s22, 1
    %s24 = scalar_select %p21, %s22, %s23
    %p27 = pneg %p21
    %p28 = scmp.eq.s32.totalorder %s12, 7
    %p29 = por %p27, %p28
    %p30 = scmp.ne.s32.totalorder %s22, %s25
    %p31 = scmp.eq.s32.totalorder %s12, 0
    %p32 = por %p30, %p31
    %p33 = scmp.ne.s32.totalorder %s22, %s25
    %p34 = scmp.eq.s32.totalorder %s17, 7
    %p35 = por %p33, %p34
    %p36 = scmp.ne.s32.totalorder %s25, %s26
    %p37 = scmp.eq.s32.totalorder %s17, 0
    %p38 = por %p36, %p37
    %p39 = scmp.ne.s32.totalorder %s25, %s26
    %p40 = scmp.eq.s32.totalorder %s18, 7
    %p41 = por %p39, %p40
    %p43 = scmp.ne.s32.totalorder %s26, %s42
    %p44 = scmp.eq.s32.totalorder %s18, 0
    %p45 = por %p43, %p44
    %s46 = ssub.s32 %s12, %s19
    %p47 = scmp.eq.s32.totalorder %s46, 0
    %s49 = sadd.s32 %s48, 1
    %s50 = scalar_select %p47, %s48, %s49
    %p53 = pneg %p47
    %p54 = scmp.eq.s32.totalorder %s12, 7
    %p55 = por %p53, %p54
    %p56 = scmp.ne.s32.totalorder %s48, %s51
    %p57 = scmp.eq.s32.totalorder %s12, 0
    %p58 = por %p56, %p57
    %p59 = scmp.ne.s32.totalorder %s48, %s51
    %p60 = scmp.eq.s32.totalorder %s17, 7
    %p61 = por %p59, %p60
    %p62 = scmp.ne.s32.totalorder %s51, %s52
    %p63 = scmp.eq.s32.totalorder %s17, 0
    %p64 = por %p62, %p63
    %p65 = scmp.ne.s32.totalorder %s51, %s52
    %p66 = scmp.eq.s32.totalorder %s18, 7
    %p67 = por %p65, %p66
    %p69 = scmp.ne.s32.totalorder %s52, %s68
    %p70 = scmp.eq.s32.totalorder %s18, 0
    %p71 = por %p69, %p70
    %s73 = sadd.s32 %s72, 1
    %p76 = scmp.eq.s32.totalorder %s12, 7
    %p77 = scmp.ne.s32.totalorder %s72, %s74
    %p78 = scmp.eq.s32.totalorder %s12, 0
    %p79 = por %p77, %p78
    %p80 = scmp.ne.s32.totalorder %s72, %s74
    %p81 = scmp.eq.s32.totalorder %s17, 7
    %p82 = por %p80, %p81
    %p83 = scmp.ne.s32.totalorder %s74, %s75
    %p84 = scmp.eq.s32.totalorder %s17, 0
    %p85 = por %p83, %p84
    %p86 = scmp.ne.s32.totalorder %s74, %s75
    %p87 = scmp.eq.s32.totalorder %s18, 7
    %p88 = por %p86, %p87
    %p90 = scmp.ne.s32.totalorder %s75, %s89
    %p91 = scmp.eq.s32.totalorder %s18, 0
    %p92 = por %p90, %p91
    %s94 = sadd.s32 %s93, 1
    %p97 = scmp.eq.s32.totalorder %s12, 7
    %p98 = scmp.ne.s32.totalorder %s93, %s95
    %p99 = scmp.eq.s32.totalorder %s12, 0
    %p100 = por %p98, %p99
    %p101 = scmp.ne.s32.totalorder %s93, %s95
    %p102 = scmp.eq.s32.totalorder %s17, 7
    %p103 = por %p101, %p102
    %p104 = scmp.ne.s32.totalorder %s95, %s96
    %p105 = scmp.eq.s32.totalorder %s17, 0
    %p106 = por %p104, %p105
    %p107 = scmp.ne.s32.totalorder %s95, %s96
    %p108 = scmp.eq.s32.totalorder %s18, 7
    %p109 = por %p107, %p108
    %p111 = scmp.ne.s32.totalorder %s96, %s110
    %p112 = scmp.eq.s32.totalorder %s18, 0
    %p113 = por %p111, %p112
    %s114 = ssub.s32 %s12, %s19
    %p115 = scmp.eq.s32.totalorder %s114, 0
    %s117 = sadd.s32 %s116, 1
    %s118 = scalar_select %p115, %s116, %s117
    %p121 = pneg %p115
    %p122 = scmp.eq.s32.totalorder %s12, 7
    %p123 = por %p121, %p122
    %p124 = scmp.ne.s32.totalorder %s116, %s119
    %p125 = scmp.eq.s32.totalorder %s12, 0
    %p126 = por %p124, %p125
    %p127 = scmp.ne.s32.totalorder %s116, %s119
    %p128 = scmp.eq.s32.totalorder %s17, 7
    %p129 = por %p127, %p128
    %p130 = scmp.ne.s32.totalorder %s119, %s120
    %p131 = scmp.eq.s32.totalorder %s17, 0
    %p132 = por %p130, %p131
    %p133 = scmp.ne.s32.totalorder %s119, %s120
    %p134 = scmp.eq.s32.totalorder %s18, 7
    %p135 = por %p133, %p134
    %p137 = scmp.ne.s32.totalorder %s120, %s136
    %p138 = scmp.eq.s32.totalorder %s18, 0
    %p139 = por %p137, %p138
    %s141 = sadd.s32 %s140, 1
    %p144 = scmp.eq.s32.totalorder %s12, 7
    %p145 = scmp.ne.s32.totalorder %s140, %s142
    %p146 = scmp.eq.s32.totalorder %s12, 0
    %p147 = por %p145, %p146
    %p148 = scmp.ne.s32.totalorder %s140, %s142
    %p149 = scmp.eq.s32.totalorder %s17, 7
    %p150 = por %p148, %p149
    %p151 = scmp.ne.s32.totalorder %s142, %s143
    %p152 = scmp.eq.s32.totalorder %s17, 0
    %p153 = por %p151, %p152
    %p154 = scmp.ne.s32.totalorder %s142, %s143
    %p155 = scmp.eq.s32.totalorder %s18, 7
    %p156 = por %p154, %p155
    %p158 = scmp.ne.s32.totalorder %s143, %s157
    %p159 = scmp.eq.s32.totalorder %s18, 0
    %p160 = por %p158, %p159
    %p161 = scmp.le.s32.totalorder 1, %s12
    %p162 = scmp.lt.s32.totalorder %s12, 9
    %p163 = pnand %p161, %p162
    %p164 = pneg %p163
    // Predicated region
    $region9: #{encdec_forward.8} parent=5 // pred_check
      _
    $region10: #{encdec_forward.8} parent=5 // pred_check_branch
      %166 = sbr.rel (%p163) target = $region12
    $region11: #{encdec_forward.8} parent=5 // pred_region
      %s167 = ssub.s32 %s12, 1
      // Predicated region
      $region13: #{encdec_forward.8} parent=11 // pred_check
        %p168 = pneg %p85
      $region14: #{encdec_forward.8} parent=11 // pred_check_branch
        %170 = sbr.rel (%p168) target = $region16
      $region15: #{encdec_forward.8} parent=11 // pred_region
        _
      $region16: #{encdec_forward.8} parent=11 // pred_fallthru
        _
      // Predicated region
      $region17: #{encdec_forward.8} parent=11 // pred_check
        %p171 = pneg %p106
      $region18: #{encdec_forward.8} parent=11 // pred_check_branch
        %173 = sbr.rel (%p171) target = $region20
      $region19: #{encdec_forward.8} parent=11 // pred_region
        _
      $region20: #{encdec_forward.8} parent=11 // pred_fallthru
        _
    $region12: #{encdec_forward.8} parent=5 // pred_fallthru
      _
    %p174 = scmp.lt.s32.totalorder %s12, 8
    // Predicated region
    $region21: #{encdec_forward.8} parent=5 // pred_check
      %p175 = pneg %p174
    $region22: #{encdec_forward.8} parent=5 // pred_check_branch
      %177 = sbr.rel (%p175) target = $region24
    $region23: #{encdec_forward.8} parent=5 // pred_region
      // Predicated region
      $region25: #{encdec_forward.8} parent=23 // pred_check
        %p178 = pneg %p32
      $region26: #{encdec_forward.8} parent=23 // pred_check_branch
        %180 = sbr.rel (%p178) target = $region28
      $region27: #{encdec_forward.8} parent=23 // pred_region
        %p181 = scmp.lt.s32.totalorder %s12, 7
        %s182 = scalar_select %p181, %s12, 7
        %s183 = smul.addr %s182, 3
        %s184 = smul.addr %s183, 8
        %s185 = scalar_lea.vmem %s0, %s184
      $region28: #{encdec_forward.8} parent=23 // pred_fallthru
        _
      // Predicated region
      $region29: #{encdec_forward.8} parent=23 // pred_check
        %p186 = pneg %p58
      $region30: #{encdec_forward.8} parent=23 // pred_check_branch
        %188 = sbr.rel (%p186) target = $region32
      $region31: #{encdec_forward.8} parent=23 // pred_region
        %p189 = scmp.lt.s32.totalorder %s12, 7
        %s190 = scalar_select %p189, %s12, 7
        %s191 = smul.addr %s190, 8
        %s192 = scalar_lea.vmem %s1, %s191
      $region32: #{encdec_forward.8} parent=23 // pred_fallthru
        _
    $region24: #{encdec_forward.8} parent=5 // pred_fallthru
      _
    %p193 = scmp.le.s32.totalorder 1, %s12
    %p194 = scmp.lt.s32.totalorder %s12, 9
    %p195 = pnand %p193, %p194
    %p196 = pneg %p195
    // Predicated region
    $region33: #{encdec_forward.8} parent=5 // pred_check
      _
    $region34: #{encdec_forward.8} parent=5 // pred_check_branch
      %198 = sbr.rel (%p195) target = $region36
    $region35: #{encdec_forward.8} parent=5 // pred_region
      %s199 = ssub.s32 %s12, 1
      %p200 = scmp.lt.s32.totalorder %s17, 7
      %s201 = scalar_select %p200, %s17, 7
      %s202 = smul.addr %s201, 3
      %s203 = smul.addr %s202, 8
      %s204 = scalar_lea.vmem %s0, %s203
      %p205 = pneg %p38
      %p206 = pneg %p35
      %p207 = scmp.lt.s32.totalorder %s17, 7
      %s208 = scalar_select %p207, %s17, 7
      %s209 = smul.addr %s208, 8
      %s210 = scalar_lea.vmem %s1, %s209
      %p211 = pneg %p64
      %p212 = pneg %p61
      %p213 = pneg %p85
      %p214 = pneg %p82
      %p215 = pneg %p106
      %p216 = pneg %p103
      %p217 = pneg %p132
      %p218 = pneg %p129
      %p219 = scmp.lt.s32.totalorder %s17, 7
      %s220 = scalar_select %p219, %s17, 7
      %s221 = smul.addr %s220, 8
      %s222 = scalar_lea.vmem %s4, %s221
      %p223 = pneg %p153
      %p224 = pneg %p150
      %p225 = scmp.lt.s32.totalorder %s17, 7
      %s226 = scalar_select %p225, %s17, 7
      %s227 = smul.addr %s226, 3
      %s228 = smul.addr %s227, 8
      %s229 = scalar_lea.vmem %s0, %s228
      %p230 = scmp.lt.s32.totalorder %s17, 7
      %s231 = scalar_select %p230, %s17, 7
      %s232 = smul.addr %s231, 8
      %s233 = scalar_lea.vmem %s1, %s232
      %p234 = scmp.lt.s32.totalorder %s17, 7
      %s235 = scalar_select %p234, %s17, 7
      %s236 = smul.addr %s235, 8
      %s237 = scalar_lea.vmem %s4, %s236
      %p238 = scmp.eq.s32.totalorder %s17, 0
      // Predicated region
      $region37: #{encdec_forward.8} parent=35 // pred_check
        %p239 = pneg %p238
      $region38: #{encdec_forward.8} parent=35 // pred_check_branch
        %241 = sbr.rel (%p239) target = $region40
      $region39: #{encdec_forward.8} parent=35 // pred_region
        %v242 = vld [vmem:[%s3] sm:$0xff]
        %243 = vst [vmem:[#allocation2] sm:$0xff] %v242
      $region40: #{encdec_forward.8} parent=35 // pred_fallthru
        _
      %v244 = vld [vmem:[#allocation2] sm:$0xff]
      %v245 = vld [vmem:[%s229] sm:$0xff]
      %v246 = vld [vmem:[%s229 + $0x8] sm:$0xff]
      %v247 = vld [vmem:[%s229 + $0x10] sm:$0xff]
      %v248 = vld [vmem:[%s2] sm:$0xff]
      %v249 = vld [vmem:[%s2 + $0x8] sm:$0xff]
      %v250 = vld [vmem:[%s2 + $0x10] sm:$0xff]
      %v251 = vld [vmem:[%s2 + $0x18] sm:$0xff]
      %v252 = vld [vmem:[%s2 + $0x20] sm:$0xff]
      %v253 = vld [vmem:[%s2 + $0x28] sm:$0xff]
      %v254 = vld [vmem:[%s2 + $0x30] sm:$0xff]
      %v255 = vld [vmem:[%s2 + $0x38] sm:$0xff]
      %v256 = vld [vmem:[%s2 + $0x40] sm:$0xff]
      %v257 = vld [vmem:[%s2 + $0x48] sm:$0xff]
      %v258 = vld [vmem:[%s2 + $0x50] sm:$0xff]
      %v259 = vld [vmem:[%s2 + $0x58] sm:$0xff]
      %v260 = vld [vmem:[%s2 + $0x60] sm:$0xff]
      %v261 = vld [vmem:[%s2 + $0x68] sm:$0xff]
      %v262 = vld [vmem:[%s2 + $0x70] sm:$0xff]
      %v263 = vld [vmem:[%s2 + $0x78] sm:$0xff]
      %v264 = vld [vmem:[%s2 + $0x80] sm:$0xff]
      %v265 = vld [vmem:[%s2 + $0x88] sm:$0xff]
      %v266 = vld [vmem:[%s2 + $0x90] sm:$0xff]
      %v267 = vld [vmem:[%s2 + $0x98] sm:$0xff]
      %v268 = vld [vmem:[%s2 + $0xa0] sm:$0xff]
      %v269 = vld [vmem:[%s2 + $0xa8] sm:$0xff]
      %v270 = vld [vmem:[%s2 + $0xb0] sm:$0xff]
      %v271 = vld [vmem:[%s2 + $0xb8] sm:$0xff]
      %v272 = vld [vmem:[%s2 + $0xc0] sm:$0xff]
      %v273 = vld [vmem:[%s2 + $0xc8] sm:$0xff]
      %v274 = vld [vmem:[%s2 + $0xd0] sm:$0xff]
      %v275 = vld [vmem:[%s2 + $0xd8] sm:$0xff]
      %v276 = vld [vmem:[%s2 + $0xe0] sm:$0xff]
      %v277 = vld [vmem:[%s2 + $0xe8] sm:$0xff]
      %v278 = vld [vmem:[%s2 + $0xf0] sm:$0xff]
      %v279 = vld [vmem:[%s2 + $0xf8] sm:$0xff]
      %v280 = vld [vmem:[%s2 + $0x100] sm:$0xff]
      %v281 = vld [vmem:[%s2 + $0x108] sm:$0xff]
      %v282 = vld [vmem:[%s2 + $0x110] sm:$0xff]
      %v283 = vld [vmem:[%s2 + $0x118] sm:$0xff]
      %v284 = vld [vmem:[%s2 + $0x120] sm:$0xff]
      %v285 = vld [vmem:[%s2 + $0x128] sm:$0xff]
      %v286 = vld [vmem:[%s2 + $0x130] sm:$0xff]
      %v287 = vld [vmem:[%s2 + $0x138] sm:$0xff]
      %v288 = vld [vmem:[%s2 + $0x140] sm:$0xff]
      %v289 = vld [vmem:[%s2 + $0x148] sm:$0xff]
      %v290 = vld [vmem:[%s2 + $0x150] sm:$0xff]
      %v291 = vld [vmem:[%s2 + $0x158] sm:$0xff]
      %v292 = vld [vmem:[%s2 + $0x160] sm:$0xff]
      %v293 = vld [vmem:[%s2 + $0x168] sm:$0xff]
      %v294 = vld [vmem:[%s2 + $0x170] sm:$0xff]
      %v295 = vld [vmem:[%s2 + $0x178] sm:$0xff]
      %296 = vmatprep.subr.mxu0 %v249
      %297 = vmatpush1.msra.mxu0 %v248
      %298 = vmatprep.subr.mxu0 %v252
      %299 = vmatpush1.msra.mxu0 %v251
      %300 = vmatprep.subr.mxu0 %v255
      %301 = vmatpush1.msra.mxu0 %v254
      %302 = vmatprep.subr.mxu0 %v258
      %303 = vmatpush1.msra.mxu0 %v257
      %304 = vmatprep.subr.mxu0 %v261
      %305 = vmatpush1.msra.mxu0 %v260
      %306 = vmatprep.subr.mxu0 %v264
      %307 = vmatpush1.msra.mxu0 %v263
      %308 = vmatprep.subr.mxu0 %v267
      %309 = vmatpush1.msra.mxu0 %v266
      %310 = vmatprep.subr.mxu0 %v270
      %311 = vmatpush1.msra.mxu0 %v269
      %312 = vmatprep.subr.mxu0 %v273
      %313 = vmatpush1.msra.mxu0 %v272
      %314 = vmatprep.subr.mxu0 %v276
      %315 = vmatpush1.msra.mxu0 %v275
      %316 = vmatprep.subr.mxu0 %v279
      %317 = vmatpush1.msra.mxu0 %v278
      %318 = vmatprep.subr.mxu0 %v282
      %319 = vmatpush1.msra.mxu0 %v281
      %320 = vmatprep.subr.mxu0 %v285
      %321 = vmatpush1.msra.mxu0 %v284
      %322 = vmatprep.subr.mxu0 %v288
      %323 = vmatpush1.msra.mxu0 %v287
      %324 = vmatprep.subr.mxu0 %v291
      %325 = vmatpush1.msra.mxu0 %v290
      %326 = vmatprep.subr.mxu0 %v294
      %327 = vmatpush1.msra.mxu0 %v293
      %328 = vmatprep.subr.mxu0 0.0
      %329 = vmatpush1.msra.mxu0 0.0
      %330 = vmatprep.subr.mxu0 0.0
      %331 = vmatpush1.msra.mxu0 0.0
      %332 = vmatprep.subr.mxu0 0.0
      %333 = vmatpush1.msra.mxu0 0.0
      %334 = vmatprep.subr.mxu0 0.0
      %335 = vmatpush1.msra.mxu0 0.0
      %336 = vmatprep.subr.mxu0 0.0
      %337 = vmatpush1.msra.mxu0 0.0
      %338 = vmatprep.subr.mxu0 0.0
      %339 = vmatpush1.msra.mxu0 0.0
      %340 = vmatprep.subr.mxu0 0.0
      %341 = vmatpush1.msra.mxu0 0.0
      %342 = vmatprep.subr.mxu0 0.0
      %343 = vmatpush1.msra.mxu0 0.0
      %344 = vmatprep.subr.mxu0 0.0
      %345 = vmatpush1.msra.mxu0 0.0
      %346 = vmatprep.subr.mxu0 0.0
      %347 = vmatpush1.msra.mxu0 0.0
      %348 = vmatprep.subr.mxu0 0.0
      %349 = vmatpush1.msra.mxu0 0.0
      %350 = vmatprep.subr.mxu0 0.0
      %351 = vmatpush1.msra.mxu0 0.0
      %352 = vmatprep.subr.mxu0 0.0
      %353 = vmatpush1.msra.mxu0 0.0
      %354 = vmatprep.subr.mxu0 0.0
      %355 = vmatpush1.msra.mxu0 0.0
      %356 = vmatprep.subr.mxu0 0.0
      %357 = vmatpush1.msra.mxu0 0.0
      %358 = vmatprep.subr.mxu0 0.0
      %359 = vmatpush1.msra.mxu0 0.0
      %360 = vmatprep.mubr.f32.mxu0 0.0
      %361 = vmatmul.mubr.f32.gmra.mrb[0].mxu0 %v244
      %v362 = vpop.f32.mrb[0].mxu0
      %v363 = vadd.f32 0.0, %v362
      %v364 = vpop.f32.mrb[0].mxu0
      %v365 = vadd.f32 0.0, %v364
      %366 = vdwg.mxu0
      %367 = vmatprep.subr.mxu0 0.0
      %368 = vmatpush1.msra.mxu0 %v250
      %369 = vmatprep.subr.mxu0 0.0
      %370 = vmatpush1.msra.mxu0 %v253
      %371 = vmatprep.subr.mxu0 0.0
      %372 = vmatpush1.msra.mxu0 %v256
      %373 = vmatprep.subr.mxu0 0.0
      %374 = vmatpush1.msra.mxu0 %v259
      %375 = vmatprep.subr.mxu0 0.0
      %376 = vmatpush1.msra.mxu0 %v262
      %377 = vmatprep.subr.mxu0 0.0
      %378 = vmatpush1.msra.mxu0 %v265
      %379 = vmatprep.subr.mxu0 0.0
      %380 = vmatpush1.msra.mxu0 %v268
      %381 = vmatprep.subr.mxu0 0.0
      %382 = vmatpush1.msra.mxu0 %v271
      %383 = vmatprep.subr.mxu0 0.0
      %384 = vmatpush1.msra.mxu0 %v274
      %385 = vmatprep.subr.mxu0 0.0
      %386 = vmatpush1.msra.mxu0 %v277
      %387 = vmatprep.subr.mxu0 0.0
      %388 = vmatpush1.msra.mxu0 %v280
      %389 = vmatprep.subr.mxu0 0.0
      %390 = vmatpush1.msra.mxu0 %v283
      %391 = vmatprep.subr.mxu0 0.0
      %392 = vmatpush1.msra.mxu0 %v286
      %393 = vmatprep.subr.mxu0 0.0
      %394 = vmatpush1.msra.mxu0 %v289
      %395 = vmatprep.subr.mxu0 0.0
      %396 = vmatpush1.msra.mxu0 %v292
      %397 = vmatprep.subr.mxu0 0.0
      %398 = vmatpush1.msra.mxu0 %v295
      %399 = vmatprep.subr.mxu0 0.0
      %400 = vmatpush1.msra.mxu0 0.0
      %401 = vmatprep.subr.mxu0 0.0
      %402 = vmatpush1.msra.mxu0 0.0
      %403 = vmatprep.subr.mxu0 0.0
      %404 = vmatpush1.msra.mxu0 0.0
      %405 = vmatprep.subr.mxu0 0.0
      %406 = vmatpush1.msra.mxu0 0.0
      %407 = vmatprep.subr.mxu0 0.0
      %408 = vmatpush1.msra.mxu0 0.0
      %409 = vmatprep.subr.mxu0 0.0
      %410 = vmatpush1.msra.mxu0 0.0
      %411 = vmatprep.subr.mxu0 0.0
      %412 = vmatpush1.msra.mxu0 0.0
      %413 = vmatprep.subr.mxu0 0.0
      %414 = vmatpush1.msra.mxu0 0.0
      %415 = vmatprep.subr.mxu0 0.0
      %416 = vmatpush1.msra.mxu0 0.0
      %417 = vmatprep.subr.mxu0 0.0
      %418 = vmatpush1.msra.mxu0 0.0
      %419 = vmatprep.subr.mxu0 0.0
      %420 = vmatpush1.msra.mxu0 0.0
      %421 = vmatprep.subr.mxu0 0.0
      %422 = vmatpush1.msra.mxu0 0.0
      %423 = vmatprep.subr.mxu0 0.0
      %424 = vmatpush1.msra.mxu0 0.0
      %425 = vmatprep.subr.mxu0 0.0
      %426 = vmatpush1.msra.mxu0 0.0
      %427 = vmatprep.subr.mxu0 0.0
      %428 = vmatpush1.msra.mxu0 0.0
      %429 = vmatprep.subr.mxu0 0.0
      %430 = vmatpush1.msra.mxu0 0.0
      %431 = vmatprep.mubr.f32.mxu0 0.0
      %432 = vmatmul.mubr.f32.gmra.mrb[0].mxu0 %v244
      %v433 = vpop.f32.mrb[0].mxu0
      %v434 = vadd.f32 0.0, %v433
      %v435 = vpop.f32.mrb[0].mxu0
      %436 = vdwg.mxu0
      %v437 = vadd.f32 %v245, %v363
      %v438 = vxor.u32 %v437, 2147483648
      %v439 = vmul.f32 %v438, 1.442695
      %v440 = vpow.pop %v439
      %v441 = vadd.f32 %v440, 1.0
      %v442 = vrcp.pop %v441
      %v443 = vmul.f32 1.0, %v442
      %v444 = vadd.f32 %v246, %v365
      %v445 = vxor.u32 %v444, 2147483648
      %v446 = vmul.f32 %v445, 1.442695
      %v447 = vpow.pop %v446
      %v448 = vadd.f32 %v447, 1.0
      %v449 = vrcp.pop %v448
      %v450 = vmul.f32 1.0, %v449
      %v451 = vmul.f32 %v443, %v434
      %v452 = vadd.f32 %v247, %v451
      %v453 = vtanh.pop %v452
      %v454 = vsub.f32 1.0, %v450
      %v455 = vmul.f32 %v454, %v453
      %v456 = vmul.f32 %v450, %v244
      %v457 = vadd.f32 %v455, %v456
      %v458 = vld [vmem:[%s233] sm:$0xff]
      %460 = vset.pattern.permute.xlu0 0
      %461 = vperm.xlu0 %460, %v458
      %v462 = vpop.permute.xlu0 %461
      %v464 = vmul.f32 %v462, %v457
      %v465 = vsub.f32 1.0, %v458
      %467 = vset.pattern.permute.xlu0 0
      %468 = vperm.xlu0 %467, %v465
      %v469 = vpop.permute.xlu0 %468
      %v471 = vmul.f32 %v469, %v244
      %v472 = vadd.f32 %v464, %v471
      %v473 = vmul.f32 %v472, %v462
      %474 = vst [vmem:[%s237] sm:$0xff] %v473
      %475 = vst [vmem:[#allocation2] sm:$0xff] %v472
      %p476 = scmp.eq.s32.totalorder %s17, 7
      // Predicated region
      $region41: #{encdec_forward.8} parent=35 // pred_check
        %p477 = pneg %p476
      $region42: #{encdec_forward.8} parent=35 // pred_check_branch
        %479 = sbr.rel (%p477) target = $region44
      $region43: #{encdec_forward.8} parent=35 // pred_region
        %480 = vst [vmem:[%s5] sm:$0xff] %v472
      $region44: #{encdec_forward.8} parent=35 // pred_fallthru
        _
      %p481 = scmp.lt.s32.totalorder %s17, 7
      %s482 = scalar_select %p481, %s17, 7
      %s483 = smul.addr %s482, 8
      %s484 = scalar_lea.vmem %s4, %s483
      // Predicated region
      $region45: #{encdec_forward.8} parent=35 // pred_check
        %p485 = pneg %p129
      $region46: #{encdec_forward.8} parent=35 // pred_check_branch
        %487 = sbr.rel (%p485) target = $region48
      $region47: #{encdec_forward.8} parent=35 // pred_region
        _
      $region48: #{encdec_forward.8} parent=35 // pred_fallthru
        _
      // Predicated region
      $region49: #{encdec_forward.8} parent=35 // pred_check
        %p488 = pneg %p150
      $region50: #{encdec_forward.8} parent=35 // pred_check_branch
        %490 = sbr.rel (%p488) target = $region52
      $region51: #{encdec_forward.8} parent=35 // pred_region
        _
      $region52: #{encdec_forward.8} parent=35 // pred_fallthru
        _
      // Predicated region
      $region53: #{encdec_forward.8} parent=35 // pred_check
        %p491 = pneg %p150
      $region54: #{encdec_forward.8} parent=35 // pred_check_branch
        %493 = sbr.rel (%p491) target = $region56
      $region55: #{encdec_forward.8} parent=35 // pred_region
        _
      $region56: #{encdec_forward.8} parent=35 // pred_fallthru
        _
    $region36: #{encdec_forward.8} parent=5 // pred_fallthru
      _
    %p494 = scmp.le.s32.totalorder 2, %s12
    // Predicated region
    $region57: #{encdec_forward.8} parent=5 // pred_check
      %p495 = pneg %p494
    $region58: #{encdec_forward.8} parent=5 // pred_check_branch
      %497 = sbr.rel (%p495) target = $region60
    $region59: #{encdec_forward.8} parent=5 // pred_region
      %s498 = ssub.s32 %s12, 2
      // Predicated region
      $region61: #{encdec_forward.8} parent=59 // pred_check
        %p499 = pneg %p135
      $region62: #{encdec_forward.8} parent=59 // pred_check_branch
        %501 = sbr.rel (%p499) target = $region64
      $region63: #{encdec_forward.8} parent=59 // pred_region
        %p502 = scmp.lt.s32.totalorder %s18, 7
        %s503 = scalar_select %p502, %s18, 7
        %s504 = smul.addr %s503, 8
        %s505 = scalar_lea.vmem %s4, %s504
      $region64: #{encdec_forward.8} parent=59 // pred_fallthru
        _
    $region60: #{encdec_forward.8} parent=5 // pred_fallthru
      _
  $region6: #{encdec_forward.8} parent=0 // loop_footer
    %s16 = sadd.s32 1, %s12
  $region7: #{encdec_forward.8} parent=0 // loop_footer_branch
    %11 = sbr.rel target = $region3
  $region8: #{encdec_forward.8} parent=0 // loop_exit
    _

// kernel: encdec_forward.10
$region0: #{encdec_forward.10}
  #allocation0 [shape = 'u32[]', space=smem, size = 0x4, offset = 0x4, fixed_abs, tag = 'smem constant byte address 0x4 - core index']
  #allocation1 [shape = 'u32[144,128]{1,0:T(1,128)}', space=vmem, size = 0x12000, scoped, tag = 'internal scratch']
  #allocation2 [shape = 'f32[8,128]{1,0:T(8,128)}', space=vmem, size = 0x1000, scoped, tag = 'scratch operand']
  %s0 = inlined_call_operand.vmem [shape: f32[8,8,384], index: 0, kind: input, shape index: {}]
  %s1 = inlined_call_operand.vmem [shape: f32[128,384], index: 1, kind: input, shape index: {}]
  %s2 = inlined_call_operand.vmem [shape: f32[8,128], index: 2, kind: input, shape index: {}]
  %s3 = inlined_call_operand.vmem [shape: f32[8,8,128], index: 3, kind: output, shape index: {0}]
  %s4 = inlined_call_operand.hbm [shape: f32[8,128], index: 4, kind: output, shape index: {1}]
  %5 = xla_tuple %s3, %s4
  %s6 = sld [smem:[#allocation0]]
  $region61: #{encdec_forward.10} parent=0
    _
  %s8 = ssub.s32 1, %s6
  %s9 = scalar_select 0, %s8, %s6
  $region1: #{encdec_forward.10} parent=0
    #allocation3 [shape = 'u8[4096]{0}', space=vmem, size = 0x1000, scoped, tag = 'output window, operand 1, single buffered']
    #allocation4 [shape = 's32[2]{0}', space=sflag, size = 0x8, scoped, tag = 'scoped memory for encdec_forward.10']
    %10 = vsyncpa [#allocation4], 0
    loop: start=0, step=1, limit=10
    $region2: #{encdec_forward.10} parent=1 // loop_pre_header
      _
    $region3: #{encdec_forward.10} parent=1 // loop_header
      %s12 = sphi 0, %s16
      %p13 = scmp.ge.s32.totalorder %s12, 10
      %s22 = sphi 0, %s24
      %s25 = sphi 0, %s22
      %s26 = sphi 0, %s25
      %s42 = sphi 0, %s26
      %s46 = sphi 0, %s46
      %s48 = sphi 0, %s46
      %s49 = sphi 0, %s48
      %s63 = sphi 0, %s49
      %s67 = sphi 0, %s67
      %s69 = sphi 0, %s67
      %s70 = sphi 0, %s69
      %s84 = sphi 0, %s70
      %s90 = sphi 0, %s92
      %s93 = sphi 0, %s90
      %s94 = sphi 0, %s93
      %s110 = sphi 0, %s94
      %s114 = sphi 0, %s114
      %s116 = sphi 0, %s114
      %s117 = sphi 0, %s116
      %s131 = sphi 0, %s117
    $region4: #{encdec_forward.10} parent=1 // loop_header_branch
      %15 = sbr.rel (%p13) target = $region8
    $region5: #{encdec_forward.10} parent=1 // loop_body
      %s17 = ssub.s32 %s12, 1
      %s18 = ssub.s32 %s12, 2
      %s19 = sadd.s32 %s12, 1
      %s20 = ssub.s32 %s12, %s19
      %p21 = scmp.eq.s32.totalorder %s20, 0
      %s23 = sadd.s32 %s22, 1
      %s24 = scalar_select %p21, %s22, %s23
      %p27 = pneg %p21
      %p28 = scmp.eq.s32.totalorder %s12, 7
      %p29 = por %p27, %p28
      %p30 = scmp.ne.s32.totalorder %s22, %s25
      %p31 = scmp.eq.s32.totalorder %s12, 0
      %p32 = por %p30, %p31
      %p33 = scmp.ne.s32.totalorder %s22, %s25
      %p34 = scmp.eq.s32.totalorder %s17, 7
      %p35 = por %p33, %p34
      %p36 = scmp.ne.s32.totalorder %s25, %s26
      %p37 = scmp.eq.s32.totalorder %s17, 0
      %p38 = por %p36, %p37
      %p39 = scmp.ne.s32.totalorder %s25, %s26
      %p40 = scmp.eq.s32.totalorder %s18, 7
      %p41 = por %p39, %p40
      %p43 = scmp.ne.s32.totalorder %s26, %s42
      %p44 = scmp.eq.s32.totalorder %s18, 0
      %p45 = por %p43, %p44
      %s47 = sadd.s32 %s46, 1
      %p50 = scmp.eq.s32.totalorder %s12, 7
      %p51 = scmp.ne.s32.totalorder %s46, %s48
      %p52 = scmp.eq.s32.totalorder %s12, 0
      %p53 = por %p51, %p52
      %p54 = scmp.ne.s32.totalorder %s46, %s48
      %p55 = scmp.eq.s32.totalorder %s17, 7
      %p56 = por %p54, %p55
      %p57 = scmp.ne.s32.totalorder %s48, %s49
      %p58 = scmp.eq.s32.totalorder %s17, 0
      %p59 = por %p57, %p58
      %p60 = scmp.ne.s32.totalorder %s48, %s49
      %p61 = scmp.eq.s32.totalorder %s18, 7
      %p62 = por %p60, %p61
      %p64 = scmp.ne.s32.totalorder %s49, %s63
      %p65 = scmp.eq.s32.totalorder %s18, 0
      %p66 = por %p64, %p65
      %s68 = sadd.s32 %s67, 1
      %p71 = scmp.eq.s32.totalorder %s12, 7
      %p72 = scmp.ne.s32.totalorder %s67, %s69
      %p73 = scmp.eq.s32.totalorder %s12, 0
      %p74 = por %p72, %p73
      %p75 = scmp.ne.s32.totalorder %s67, %s69
      %p76 = scmp.eq.s32.totalorder %s17, 7
      %p77 = por %p75, %p76
      %p78 = scmp.ne.s32.totalorder %s69, %s70
      %p79 = scmp.eq.s32.totalorder %s17, 0
      %p80 = por %p78, %p79
      %p81 = scmp.ne.s32.totalorder %s69, %s70
      %p82 = scmp.eq.s32.totalorder %s18, 7
      %p83 = por %p81, %p82
      %p85 = scmp.ne.s32.totalorder %s70, %s84
      %p86 = scmp.eq.s32.totalorder %s18, 0
      %p87 = por %p85, %p86
      %s88 = ssub.s32 %s12, %s19
      %p89 = scmp.eq.s32.totalorder %s88, 0
      %s91 = sadd.s32 %s90, 1
      %s92 = scalar_select %p89, %s90, %s91
      %p95 = pneg %p89
      %p96 = scmp.eq.s32.totalorder %s12, 7
      %p97 = por %p95, %p96
      %p98 = scmp.ne.s32.totalorder %s90, %s93
      %p99 = scmp.eq.s32.totalorder %s12, 0
      %p100 = por %p98, %p99
      %p101 = scmp.ne.s32.totalorder %s90, %s93
      %p102 = scmp.eq.s32.totalorder %s17, 7
      %p103 = por %p101, %p102
      %p104 = scmp.ne.s32.totalorder %s93, %s94
      %p105 = scmp.eq.s32.totalorder %s17, 0
      %p106 = por %p104, %p105
      %p107 = scmp.ne.s32.totalorder %s93, %s94
      %p108 = scmp.eq.s32.totalorder %s18, 7
      %p109 = por %p107, %p108
      %p111 = scmp.ne.s32.totalorder %s94, %s110
      %p112 = scmp.eq.s32.totalorder %s18, 0
      %p113 = por %p111, %p112
      %s115 = sadd.s32 %s114, 1
      %p118 = scmp.eq.s32.totalorder %s12, 7
      %p119 = scmp.ne.s32.totalorder %s114, %s116
      %p120 = scmp.eq.s32.totalorder %s12, 0
      %p121 = por %p119, %p120
      %p122 = scmp.ne.s32.totalorder %s114, %s116
      %p123 = scmp.eq.s32.totalorder %s17, 7
      %p124 = por %p122, %p123
      %p125 = scmp.ne.s32.totalorder %s116, %s117
      %p126 = scmp.eq.s32.totalorder %s17, 0
      %p127 = por %p125, %p126
      %p128 = scmp.ne.s32.totalorder %s116, %s117
      %p129 = scmp.eq.s32.totalorder %s18, 7
      %p130 = por %p128, %p129
      %p132 = scmp.ne.s32.totalorder %s117, %s131
      %p133 = scmp.eq.s32.totalorder %s18, 0
      %p134 = por %p132, %p133
      %p135 = scmp.le.s32.totalorder 1, %s12
      %p136 = scmp.lt.s32.totalorder %s12, 9
      %p137 = pnand %p135, %p136
      %p138 = pneg %p137
      // Predicated region
      $region9: #{encdec_forward.10} parent=5 // pred_check
        _
      $region10: #{encdec_forward.10} parent=5 // pred_check_branch
        %140 = sbr.rel (%p137) target = $region12
      $region11: #{encdec_forward.10} parent=5 // pred_region
        %s141 = ssub.s32 %s12, 1
        // Predicated region
        $region13: #{encdec_forward.10} parent=11 // pred_check
          %p142 = pneg %p59
        $region14: #{encdec_forward.10} parent=11 // pred_check_branch
          %144 = sbr.rel (%p142) target = $region16
        $region15: #{encdec_forward.10} parent=11 // pred_region
          _
        $region16: #{encdec_forward.10} parent=11 // pred_fallthru
          _
        // Predicated region
        $region17: #{encdec_forward.10} parent=11 // pred_check
          %p145 = pneg %p80
        $region18: #{encdec_forward.10} parent=11 // pred_check_branch
          %147 = sbr.rel (%p145) target = $region20
        $region19: #{encdec_forward.10} parent=11 // pred_region
          _
        $region20: #{encdec_forward.10} parent=11 // pred_fallthru
          _
      $region12: #{encdec_forward.10} parent=5 // pred_fallthru
        _
      %p148 = scmp.lt.s32.totalorder %s12, 8
      // Predicated region
      $region21: #{encdec_forward.10} parent=5 // pred_check
        %p149 = pneg %p148
      $region22: #{encdec_forward.10} parent=5 // pred_check_branch
        %151 = sbr.rel (%p149) target = $region24
      $region23: #{encdec_forward.10} parent=5 // pred_region
        // Predicated region
        $region25: #{encdec_forward.10} parent=23 // pred_check
          %p152 = pneg %p32
        $region26: #{encdec_forward.10} parent=23 // pred_check_branch
          %154 = sbr.rel (%p152) target = $region28
        $region27: #{encdec_forward.10} parent=23 // pred_region
          %p155 = scmp.lt.s32.totalorder %s12, 7
          %s156 = scalar_select %p155, %s12, 7
          %s157 = smul.addr %s156, 3
          %s158 = smul.addr %s157, 8
          %s159 = scalar_lea.vmem %s0, %s158
        $region28: #{encdec_forward.10} parent=23 // pred_fallthru
          _
      $region24: #{encdec_forward.10} parent=5 // pred_fallthru
        _
      %p160 = scmp.le.s32.totalorder 1, %s12
      %p161 = scmp.lt.s32.totalorder %s12, 9
      %p162 = pnand %p160, %p161
      %p163 = pneg %p162
      // Predicated region
      $region29: #{encdec_forward.10} parent=5 // pred_check
        _
      $region30: #{encdec_forward.10} parent=5 // pred_check_branch
        %165 = sbr.rel (%p162) target = $region32
      $region31: #{encdec_forward.10} parent=5 // pred_region
        %s166 = ssub.s32 %s12, 1
        %p167 = scmp.lt.s32.totalorder %s17, 7
        %s168 = scalar_select %p167, %s17, 7
        %s169 = smul.addr %s168, 3
        %s170 = smul.addr %s169, 8
        %s171 = scalar_lea.vmem %s0, %s170
        %p172 = pneg %p38
        %p173 = pneg %p35
        %p174 = pneg %p59
        %p175 = pneg %p56
        %p176 = pneg %p80
        %p177 = pneg %p77
        %p178 = pneg %p106
        %p179 = pneg %p103
        %p180 = scmp.lt.s32.totalorder %s17, 7
        %s181 = scalar_select %p180, %s17, 7
        %s182 = smul.addr %s181, 8
        %s183 = scalar_lea.vmem %s3, %s182
        %p184 = pneg %p127
        %p185 = pneg %p124
        %p186 = scmp.lt.s32.totalorder %s17, 7
        %s187 = scalar_select %p186, %s17, 7
        %s188 = smul.addr %s187, 3
        %s189 = smul.addr %s188, 8
        %s190 = scalar_lea.vmem %s0, %s189
        %p191 = scmp.lt.s32.totalorder %s17, 7
        %s192 = scalar_select %p191, %s17, 7
        %s193 = smul.addr %s192, 8
        %s194 = scalar_lea.vmem %s3, %s193
        %p195 = scmp.eq.s32.totalorder %s17, 0
        // Predicated region
        $region33: #{encdec_forward.10} parent=31 // pred_check
          %p196 = pneg %p195
        $region34: #{encdec_forward.10} parent=31 // pred_check_branch
          %198 = sbr.rel (%p196) target = $region36
        $region35: #{encdec_forward.10} parent=31 // pred_region
          %v199 = vld [vmem:[%s2] sm:$0xff]
          %200 = vst [vmem:[#allocation2] sm:$0xff] %v199
        $region36: #{encdec_forward.10} parent=31 // pred_fallthru
          _
        %v201 = vld [vmem:[#allocation2] sm:$0xff]
        %v202 = vld [vmem:[%s190] sm:$0xff]
        %v203 = vld [vmem:[%s190 + $0x8] sm:$0xff]
        %v204 = vld [vmem:[%s190 + $0x10] sm:$0xff]
        %v205 = vld [vmem:[%s1] sm:$0xff]
        %v206 = vld [vmem:[%s1 + $0x8] sm:$0xff]
        %v207 = vld [vmem:[%s1 + $0x10] sm:$0xff]
        %v208 = vld [vmem:[%s1 + $0x18] sm:$0xff]
        %v209 = vld [vmem:[%s1 + $0x20] sm:$0xff]
        %v210 = vld [vmem:[%s1 + $0x28] sm:$0xff]
        %v211 = vld [vmem:[%s1 + $0x30] sm:$0xff]
        %v212 = vld [vmem:[%s1 + $0x38] sm:$0xff]
        %v213 = vld [vmem:[%s1 + $0x40] sm:$0xff]
        %v214 = vld [vmem:[%s1 + $0x48] sm:$0xff]
        %v215 = vld [vmem:[%s1 + $0x50] sm:$0xff]
        %v216 = vld [vmem:[%s1 + $0x58] sm:$0xff]
        %v217 = vld [vmem:[%s1 + $0x60] sm:$0xff]
        %v218 = vld [vmem:[%s1 + $0x68] sm:$0xff]
        %v219 = vld [vmem:[%s1 + $0x70] sm:$0xff]
        %v220 = vld [vmem:[%s1 + $0x78] sm:$0xff]
        %v221 = vld [vmem:[%s1 + $0x80] sm:$0xff]
        %v222 = vld [vmem:[%s1 + $0x88] sm:$0xff]
        %v223 = vld [vmem:[%s1 + $0x90] sm:$0xff]
        %v224 = vld [vmem:[%s1 + $0x98] sm:$0xff]
        %v225 = vld [vmem:[%s1 + $0xa0] sm:$0xff]
        %v226 = vld [vmem:[%s1 + $0xa8] sm:$0xff]
        %v227 = vld [vmem:[%s1 + $0xb0] sm:$0xff]
        %v228 = vld [vmem:[%s1 + $0xb8] sm:$0xff]
        %v229 = vld [vmem:[%s1 + $0xc0] sm:$0xff]
        %v230 = vld [vmem:[%s1 + $0xc8] sm:$0xff]
        %v231 = vld [vmem:[%s1 + $0xd0] sm:$0xff]
        %v232 = vld [vmem:[%s1 + $0xd8] sm:$0xff]
        %v233 = vld [vmem:[%s1 + $0xe0] sm:$0xff]
        %v234 = vld [vmem:[%s1 + $0xe8] sm:$0xff]
        %v235 = vld [vmem:[%s1 + $0xf0] sm:$0xff]
        %v236 = vld [vmem:[%s1 + $0xf8] sm:$0xff]
        %v237 = vld [vmem:[%s1 + $0x100] sm:$0xff]
        %v238 = vld [vmem:[%s1 + $0x108] sm:$0xff]
        %v239 = vld [vmem:[%s1 + $0x110] sm:$0xff]
        %v240 = vld [vmem:[%s1 + $0x118] sm:$0xff]
        %v241 = vld [vmem:[%s1 + $0x120] sm:$0xff]
        %v242 = vld [vmem:[%s1 + $0x128] sm:$0xff]
        %v243 = vld [vmem:[%s1 + $0x130] sm:$0xff]
        %v244 = vld [vmem:[%s1 + $0x138] sm:$0xff]
        %v245 = vld [vmem:[%s1 + $0x140] sm:$0xff]
        %v246 = vld [vmem:[%s1 + $0x148] sm:$0xff]
        %v247 = vld [vmem:[%s1 + $0x150] sm:$0xff]
        %v248 = vld [vmem:[%s1 + $0x158] sm:$0xff]
        %v249 = vld [vmem:[%s1 + $0x160] sm:$0xff]
        %v250 = vld [vmem:[%s1 + $0x168] sm:$0xff]
        %v251 = vld [vmem:[%s1 + $0x170] sm:$0xff]
        %v252 = vld [vmem:[%s1 + $0x178] sm:$0xff]
        %253 = vmatprep.subr.mxu0 %v206
        %254 = vmatpush1.msra.mxu0 %v205
        %255 = vmatprep.subr.mxu0 %v209
        %256 = vmatpush1.msra.mxu0 %v208
        %257 = vmatprep.subr.mxu0 %v212
        %258 = vmatpush1.msra.mxu0 %v211
        %259 = vmatprep.subr.mxu0 %v215
        %260 = vmatpush1.msra.mxu0 %v214
        %261 = vmatprep.subr.mxu0 %v218
        %262 = vmatpush1.msra.mxu0 %v217
        %263 = vmatprep.subr.mxu0 %v221
        %264 = vmatpush1.msra.mxu0 %v220
        %265 = vmatprep.subr.mxu0 %v224
        %266 = vmatpush1.msra.mxu0 %v223
        %267 = vmatprep.subr.mxu0 %v227
        %268 = vmatpush1.msra.mxu0 %v226
        %269 = vmatprep.subr.mxu0 %v230
        %270 = vmatpush1.msra.mxu0 %v229
        %271 = vmatprep.subr.mxu0 %v233
        %272 = vmatpush1.msra.mxu0 %v232
        %273 = vmatprep.subr.mxu0 %v236
        %274 = vmatpush1.msra.mxu0 %v235
        %275 = vmatprep.subr.mxu0 %v239
        %276 = vmatpush1.msra.mxu0 %v238
        %277 = vmatprep.subr.mxu0 %v242
        %278 = vmatpush1.msra.mxu0 %v241
        %279 = vmatprep.subr.mxu0 %v245
        %280 = vmatpush1.msra.mxu0 %v244
        %281 = vmatprep.subr.mxu0 %v248
        %282 = vmatpush1.msra.mxu0 %v247
        %283 = vmatprep.subr.mxu0 %v251
        %284 = vmatpush1.msra.mxu0 %v250
        %285 = vmatprep.subr.mxu0 0.0
        %286 = vmatpush1.msra.mxu0 0.0
        %287 = vmatprep.subr.mxu0 0.0
        %288 = vmatpush1.msra.mxu0 0.0
        %289 = vmatprep.subr.mxu0 0.0
        %290 = vmatpush1.msra.mxu0 0.0
        %291 = vmatprep.subr.mxu0 0.0
        %292 = vmatpush1.msra.mxu0 0.0
        %293 = vmatprep.subr.mxu0 0.0
        %294 = vmatpush1.msra.mxu0 0.0
        %295 = vmatprep.subr.mxu0 0.0
        %296 = vmatpush1.msra.mxu0 0.0
        %297 = vmatprep.subr.mxu0 0.0
        %298 = vmatpush1.msra.mxu0 0.0
        %299 = vmatprep.subr.mxu0 0.0
        %300 = vmatpush1.msra.mxu0 0.0
        %301 = vmatprep.subr.mxu0 0.0
        %302 = vmatpush1.msra.mxu0 0.0
        %303 = vmatprep.subr.mxu0 0.0
        %304 = vmatpush1.msra.mxu0 0.0
        %305 = vmatprep.subr.mxu0 0.0
        %306 = vmatpush1.msra.mxu0 0.0
        %307 = vmatprep.subr.mxu0 0.0
        %308 = vmatpush1.msra.mxu0 0.0
        %309 = vmatprep.subr.mxu0 0.0
        %310 = vmatpush1.msra.mxu0 0.0
        %311 = vmatprep.subr.mxu0 0.0
        %312 = vmatpush1.msra.mxu0 0.0
        %313 = vmatprep.subr.mxu0 0.0
        %314 = vmatpush1.msra.mxu0 0.0
        %315 = vmatprep.subr.mxu0 0.0
        %316 = vmatpush1.msra.mxu0 0.0
        %317 = vmatprep.mubr.f32.mxu0 0.0
        %318 = vmatmul.mubr.f32.gmra.mrb[0].mxu0 %v201
        %v319 = vpop.f32.mrb[0].mxu0
        %v320 = vadd.f32 0.0, %v319
        %v321 = vpop.f32.mrb[0].mxu0
        %v322 = vadd.f32 0.0, %v321
        %323 = vdwg.mxu0
        %324 = vmatprep.subr.mxu0 0.0
        %325 = vmatpush1.msra.mxu0 %v207
        %326 = vmatprep.subr.mxu0 0.0
        %327 = vmatpush1.msra.mxu0 %v210
        %328 = vmatprep.subr.mxu0 0.0
        %329 = vmatpush1.msra.mxu0 %v213
        %330 = vmatprep.subr.mxu0 0.0
        %331 = vmatpush1.msra.mxu0 %v216
        %332 = vmatprep.subr.mxu0 0.0
        %333 = vmatpush1.msra.mxu0 %v219
        %334 = vmatprep.subr.mxu0 0.0
        %335 = vmatpush1.msra.mxu0 %v222
        %336 = vmatprep.subr.mxu0 0.0
        %337 = vmatpush1.msra.mxu0 %v225
        %338 = vmatprep.subr.mxu0 0.0
        %339 = vmatpush1.msra.mxu0 %v228
        %340 = vmatprep.subr.mxu0 0.0
        %341 = vmatpush1.msra.mxu0 %v231
        %342 = vmatprep.subr.mxu0 0.0
        %343 = vmatpush1.msra.mxu0 %v234
        %344 = vmatprep.subr.mxu0 0.0
        %345 = vmatpush1.msra.mxu0 %v237
        %346 = vmatprep.subr.mxu0 0.0
        %347 = vmatpush1.msra.mxu0 %v240
        %348 = vmatprep.subr.mxu0 0.0
        %349 = vmatpush1.msra.mxu0 %v243
        %350 = vmatprep.subr.mxu0 0.0
        %351 = vmatpush1.msra.mxu0 %v246
        %352 = vmatprep.subr.mxu0 0.0
        %353 = vmatpush1.msra.mxu0 %v249
        %354 = vmatprep.subr.mxu0 0.0
        %355 = vmatpush1.msra.mxu0 %v252
        %356 = vmatprep.subr.mxu0 0.0
        %357 = vmatpush1.msra.mxu0 0.0
        %358 = vmatprep.subr.mxu0 0.0
        %359 = vmatpush1.msra.mxu0 0.0
        %360 = vmatprep.subr.mxu0 0.0
        %361 = vmatpush1.msra.mxu0 0.0
        %362 = vmatprep.subr.mxu0 0.0
        %363 = vmatpush1.msra.mxu0 0.0
        %364 = vmatprep.subr.mxu0 0.0
        %365 = vmatpush1.msra.mxu0 0.0
        %366 = vmatprep.subr.mxu0 0.0
        %367 = vmatpush1.msra.mxu0 0.0
        %368 = vmatprep.subr.mxu0 0.0
        %369 = vmatpush1.msra.mxu0 0.0
        %370 = vmatprep.subr.mxu0 0.0
        %371 = vmatpush1.msra.mxu0 0.0
        %372 = vmatprep.subr.mxu0 0.0
        %373 = vmatpush1.msra.mxu0 0.0
        %374 = vmatprep.subr.mxu0 0.0
        %375 = vmatpush1.msra.mxu0 0.0
        %376 = vmatprep.subr.mxu0 0.0
        %377 = vmatpush1.msra.mxu0 0.0
        %378 = vmatprep.subr.mxu0 0.0
        %379 = vmatpush1.msra.mxu0 0.0
        %380 = vmatprep.subr.mxu0 0.0
        %381 = vmatpush1.msra.mxu0 0.0
        %382 = vmatprep.subr.mxu0 0.0
        %383 = vmatpush1.msra.mxu0 0.0
        %384 = vmatprep.subr.mxu0 0.0
        %385 = vmatpush1.msra.mxu0 0.0
        %386 = vmatprep.subr.mxu0 0.0
        %387 = vmatpush1.msra.mxu0 0.0
        %388 = vmatprep.mubr.f32.mxu0 0.0
        %389 = vmatmul.mubr.f32.gmra.mrb[0].mxu0 %v201
        %v390 = vpop.f32.mrb[0].mxu0
        %v391 = vadd.f32 0.0, %v390
        %v392 = vpop.f32.mrb[0].mxu0
        %393 = vdwg.mxu0
        %v394 = vadd.f32 %v202, %v320
        %v395 = vxor.u32 %v394, 2147483648
        %v396 = vmul.f32 %v395, 1.442695
        %v397 = vpow.pop %v396
        %v398 = vadd.f32 %v397, 1.0
        %v399 = vrcp.pop %v398
        %v400 = vmul.f32 1.0, %v399
        %v401 = vadd.f32 %v203, %v322
        %v402 = vxor.u32 %v401, 2147483648
        %v403 = vmul.f32 %v402, 1.442695
        %v404 = vpow.pop %v403
        %v405 = vadd.f32 %v404, 1.0
        %v406 = vrcp.pop %v405
        %v407 = vmul.f32 1.0, %v406
        %v408 = vmul.f32 %v400, %v391
        %v409 = vadd.f32 %v204, %v408
        %v410 = vtanh.pop %v409
        %v411 = vsub.f32 1.0, %v407
        %v412 = vmul.f32 %v411, %v410
        %v413 = vmul.f32 %v407, %v201
        %v414 = vadd.f32 %v412, %v413
        %415 = vst [vmem:[%s194] sm:$0xff] %v414
        %416 = vst [vmem:[#allocation2] sm:$0xff] %v414
        %p417 = scmp.eq.s32.totalorder %s17, 7
        // Predicated region
        $region37: #{encdec_forward.10} parent=31 // pred_check
          %p418 = pneg %p417
        $region38: #{encdec_forward.10} parent=31 // pred_check_branch
          %420 = sbr.rel (%p418) target = $region40
        $region39: #{encdec_forward.10} parent=31 // pred_region
          %421 = vst [vmem:[#allocation3] sm:$0xff] %v414
        $region40: #{encdec_forward.10} parent=31 // pred_fallthru
          _
        %p422 = scmp.lt.s32.totalorder %s17, 7
        %s423 = scalar_select %p422, %s17, 7
        %s424 = smul.addr %s423, 8
        %s425 = scalar_lea.vmem %s3, %s424
        // Predicated region
        $region41: #{encdec_forward.10} parent=31 // pred_check
          %p426 = pneg %p103
        $region42: #{encdec_forward.10} parent=31 // pred_check_branch
          %428 = sbr.rel (%p426) target = $region44
        $region43: #{encdec_forward.10} parent=31 // pred_region
          _
        $region44: #{encdec_forward.10} parent=31 // pred_fallthru
          _
        // Predicated region
        $region45: #{encdec_forward.10} parent=31 // pred_check
          %p429 = pneg %p124
        $region46: #{encdec_forward.10} parent=31 // pred_check_branch
          %431 = sbr.rel (%p429) target = $region48
        $region47: #{encdec_forward.10} parent=31 // pred_region
          %s433 = ssub.s32 128, 128
          %434 = vsyncadd [#allocation4], %s433
          %s436 = sshll.u32 [#allocation3], 4
          %s437 = int_to_ptr.vmem [resolvable:$true] %s436
          %439 = dma.vmem_to_hbm [thread:$0]  %s437, 128, %s4, [#allocation4]
        $region48: #{encdec_forward.10} parent=31 // pred_fallthru
          _
        // Predicated region
        $region49: #{encdec_forward.10} parent=31 // pred_check
          %p440 = pneg %p124
        $region50: #{encdec_forward.10} parent=31 // pred_check_branch
          %442 = sbr.rel (%p440) target = $region52
        $region51: #{encdec_forward.10} parent=31 // pred_region
          %443 = dma.done [#allocation4], 128
        $region52: #{encdec_forward.10} parent=31 // pred_fallthru
          _
      $region32: #{encdec_forward.10} parent=5 // pred_fallthru
        _
      %p444 = scmp.le.s32.totalorder 2, %s12
      // Predicated region
      $region53: #{encdec_forward.10} parent=5 // pred_check
        %p445 = pneg %p444
      $region54: #{encdec_forward.10} parent=5 // pred_check_branch
        %447 = sbr.rel (%p445) target = $region56
      $region55: #{encdec_forward.10} parent=5 // pred_region
        %s448 = ssub.s32 %s12, 2
        // Predicated region
        $region57: #{encdec_forward.10} parent=55 // pred_check
          %p449 = pneg %p109
        $region58: #{encdec_forward.10} parent=55 // pred_check_branch
          %451 = sbr.rel (%p449) target = $region60
        $region59: #{encdec_forward.10} parent=55 // pred_region
          %p452 = scmp.lt.s32.totalorder %s18, 7
          %s453 = scalar_select %p452, %s18, 7
          %s454 = smul.addr %s453, 8
          %s455 = scalar_lea.vmem %s3, %s454
        $region60: #{encdec_forward.10} parent=55 // pred_fallthru
          _
      $region56: #{encdec_forward.10} parent=5 // pred_fallthru
        _
    $region6: #{encdec_forward.10} parent=1 // loop_footer
      %s16 = sadd.s32 1, %s12
    $region7: #{encdec_forward.10} parent=1 // loop_footer_branch
      %11 = sbr.rel target = $region3
    $region8: #{encdec_forward.10} parent=1 // loop_exit
      _
    %456 = vsyncpa [#allocation4], 1
    %s457 = scalar_lea.sflag [#allocation4], 1
    %458 = vsyncpa %s457, 1

// kernel: encdec_forward.11
$region0: #{encdec_forward.11}
  #allocation0 [shape = 'u32[]', space=smem, size = 0x4, offset = 0x4, fixed_abs, tag = 'smem constant byte address 0x4 - core index']
  #allocation1 [shape = 'u32[144,128]{1,0:T(1,128)}', space=vmem, size = 0x12000, scoped, tag = 'internal scratch']
  %s0 = inlined_call_operand.vmem [shape: f32[8,8,128], index: 0, kind: input, shape index: {}]
  %s1 = inlined_call_operand.vmem [shape: f32[8,8,128], index: 1, kind: input, shape index: {}]
  %s2 = inlined_call_operand.vmem [shape: f32[8,1,8], index: 2, kind: input, shape index: {}]
  %s3 = inlined_call_operand.vmem [shape: f32[8,8,128], index: 3, kind: output, shape index: {0}]
  %s4 = inlined_call_operand.vmem [shape: f32[8,8,8], index: 4, kind: output, shape index: {1}]
  %5 = xla_tuple %s3, %s4
  %s6 = sld [smem:[#allocation0]]
  $region53: #{encdec_forward.11} parent=0
    _
  %s8 = ssub.s32 1, %s6
  %s9 = scalar_select 0, %s8, %s6
  loop: start=0, step=1, limit=4
  $region2: #{encdec_forward.11} parent=0 // loop_pre_header
    _
  $region3: #{encdec_forward.11} parent=0 // loop_header
    %s11 = sphi 0, %s15
    %p12 = scmp.ge.s32.totalorder %s11, 4
    %s18 = sphi 0, %s30
    %s19 = sphi 0, %s26
    %s20 = sphi 0, %s18
    %s21 = sphi 0, %s19
    %s22 = sphi 0, %s20
    %s23 = sphi 0, %s21
    %s35 = sphi 0, %s37
    %s38 = sphi 0, %s35
    %s39 = sphi 0, %s38
    %s55 = sphi 0, %s39
    %s61 = sphi 0, %s63
    %s64 = sphi 0, %s61
    %s65 = sphi 0, %s64
    %s81 = sphi 0, %s65
    %s87 = sphi 0, %s89
    %s90 = sphi 0, %s87
    %s91 = sphi 0, %s90
    %s107 = sphi 0, %s91
    %s115 = sphi 0, %s117
    %s118 = sphi 0, %s115
    %s119 = sphi 0, %s118
    %s135 = sphi 0, %s119
    %s143 = sphi 0, %s145
    %s146 = sphi 0, %s143
    %s147 = sphi 0, %s146
    %s163 = sphi 0, %s147
  $region4: #{encdec_forward.11} parent=0 // loop_header_branch
    %14 = sbr.rel (%p12) target = $region8
  $region5: #{encdec_forward.11} parent=0 // loop_body
    %s16 = ssub.s32 %s11, 1
    %s17 = ssub.s32 %s11, 2
    %s24 = sadd.s32 1, %s19
    %p25 = scmp.ge.s32.totalorder %s24, 1
    %s26 = scalar_select %p25, 0, %s24
    %s27 = sadd.s32 1, %s18
    %s28 = scalar_select %p25, %s27, %s18
    %p29 = scmp.ge.s32.totalorder %s28, 2
    %s30 = scalar_select %p29, 0, %s28
    %s31 = ssub.s32 %s18, %s30
    %s32 = ssub.s32 %s19, %s26
    %s33 = sor.u32 %s31, %s32
    %p34 = scmp.eq.s32.totalorder %s33, 0
    %s36 = sadd.s32 %s35, 1
    %s37 = scalar_select %p34, %s35, %s36
    %p40 = pneg %p34
    %p41 = scmp.eq.s32.totalorder %s11, 1
    %p42 = por %p40, %p41
    %p43 = scmp.ne.s32.totalorder %s35, %s38
    %p44 = scmp.eq.s32.totalorder %s11, 0
    %p45 = por %p43, %p44
    %p46 = scmp.ne.s32.totalorder %s35, %s38
    %p47 = scmp.eq.s32.totalorder %s16, 1
    %p48 = por %p46, %p47
    %p49 = scmp.ne.s32.totalorder %s38, %s39
    %p50 = scmp.eq.s32.totalorder %s16, 0
    %p51 = por %p49, %p50
    %p52 = scmp.ne.s32.totalorder %s38, %s39
    %p53 = scmp.eq.s32.totalorder %s17, 1
    %p54 = por %p52, %p53
    %p56 = scmp.ne.s32.totalorder %s39, %s55
    %p57 = scmp.eq.s32.totalorder %s17, 0
    %p58 = por %p56, %p57
    %s59 = ssub.s32 %s18, %s30
    %p60 = scmp.eq.s32.totalorder %s59, 0
    %s62 = sadd.s32 %s61, 1
    %s63 = scalar_select %p60, %s61, %s62
    %p66 = pneg %p60
    %p67 = scmp.eq.s32.totalorder %s11, 1
    %p68 = por %p66, %p67
    %p69 = scmp.ne.s32.totalorder %s61, %s64
    %p70 = scmp.eq.s32.totalorder %s11, 0
    %p71 = por %p69, %p70
    %p72 = scmp.ne.s32.totalorder %s61, %s64
    %p73 = scmp.eq.s32.totalorder %s16, 1
    %p74 = por %p72, %p73
    %p75 = scmp.ne.s32.totalorder %s64, %s65
    %p76 = scmp.eq.s32.totalorder %s16, 0
    %p77 = por %p75, %p76
    %p78 = scmp.ne.s32.totalorder %s64, %s65
    %p79 = scmp.eq.s32.totalorder %s17, 1
    %p80 = por %p78, %p79
    %p82 = scmp.ne.s32.totalorder %s65, %s81
    %p83 = scmp.eq.s32.totalorder %s17, 0
    %p84 = por %p82, %p83
    %s85 = ssub.s32 %s18, %s30
    %p86 = scmp.eq.s32.totalorder %s85, 0
    %s88 = sadd.s32 %s87, 1
    %s89 = scalar_select %p86, %s87, %s88
    %p92 = pneg %p86
    %p93 = scmp.eq.s32.totalorder %s11, 1
    %p94 = por %p92, %p93
    %p95 = scmp.ne.s32.totalorder %s87, %s90
    %p96 = scmp.eq.s32.totalorder %s11, 0
    %p97 = por %p95, %p96
    %p98 = scmp.ne.s32.totalorder %s87, %s90
    %p99 = scmp.eq.s32.totalorder %s16, 1
    %p100 = por %p98, %p99
    %p101 = scmp.ne.s32.totalorder %s90, %s91
    %p102 = scmp.eq.s32.totalorder %s16, 0
    %p103 = por %p101, %p102
    %p104 = scmp.ne.s32.totalorder %s90, %s91
    %p105 = scmp.eq.s32.totalorder %s17, 1
    %p106 = por %p104, %p105
    %p108 = scmp.ne.s32.totalorder %s91, %s107
    %p109 = scmp.eq.s32.totalorder %s17, 0
    %p110 = por %p108, %p109
    %s111 = ssub.s32 %s18, %s30
    %s112 = ssub.s32 %s19, %s26
    %s113 = sor.u32 %s111, %s112
    %p114 = scmp.eq.s32.totalorder %s113, 0
    %s116 = sadd.s32 %s115, 1
    %s117 = scalar_select %p114, %s115, %s116
    %p120 = pneg %p114
    %p121 = scmp.eq.s32.totalorder %s11, 1
    %p122 = por %p120, %p121
    %p123 = scmp.ne.s32.totalorder %s115, %s118
    %p124 = scmp.eq.s32.totalorder %s11, 0
    %p125 = por %p123, %p124
    %p126 = scmp.ne.s32.totalorder %s115, %s118
    %p127 = scmp.eq.s32.totalorder %s16, 1
    %p128 = por %p126, %p127
    %p129 = scmp.ne.s32.totalorder %s118, %s119
    %p130 = scmp.eq.s32.totalorder %s16, 0
    %p131 = por %p129, %p130
    %p132 = scmp.ne.s32.totalorder %s118, %s119
    %p133 = scmp.eq.s32.totalorder %s17, 1
    %p134 = por %p132, %p133
    %p136 = scmp.ne.s32.totalorder %s119, %s135
    %p137 = scmp.eq.s32.totalorder %s17, 0
    %p138 = por %p136, %p137
    %s139 = ssub.s32 %s18, %s30
    %s140 = ssub.s32 %s19, %s26
    %s141 = sor.u32 %s139, %s140
    %p142 = scmp.eq.s32.totalorder %s141, 0
    %s144 = sadd.s32 %s143, 1
    %s145 = scalar_select %p142, %s143, %s144
    %p148 = pneg %p142
    %p149 = scmp.eq.s32.totalorder %s11, 1
    %p150 = por %p148, %p149
    %p151 = scmp.ne.s32.totalorder %s143, %s146
    %p152 = scmp.eq.s32.totalorder %s11, 0
    %p153 = por %p151, %p152
    %p154 = scmp.ne.s32.totalorder %s143, %s146
    %p155 = scmp.eq.s32.totalorder %s16, 1
    %p156 = por %p154, %p155
    %p157 = scmp.ne.s32.totalorder %s146, %s147
    %p158 = scmp.eq.s32.totalorder %s16, 0
    %p159 = por %p157, %p158
    %p160 = scmp.ne.s32.totalorder %s146, %s147
    %p161 = scmp.eq.s32.totalorder %s17, 1
    %p162 = por %p160, %p161
    %p164 = scmp.ne.s32.totalorder %s147, %s163
    %p165 = scmp.eq.s32.totalorder %s17, 0
    %p166 = por %p164, %p165
    %p167 = scmp.le.s32.totalorder 1, %s11
    %p168 = scmp.lt.s32.totalorder %s11, 3
    %p169 = pnand %p167, %p168
    %p170 = pneg %p169
    // Predicated region
    $region9: #{encdec_forward.11} parent=5 // pred_check
      _
    $region10: #{encdec_forward.11} parent=5 // pred_check_branch
      %172 = sbr.rel (%p169) target = $region12
    $region11: #{encdec_forward.11} parent=5 // pred_region
      %s173 = ssub.s32 %s11, 1
    $region12: #{encdec_forward.11} parent=5 // pred_fallthru
      _
    %p174 = scmp.lt.s32.totalorder %s11, 2
    // Predicated region
    $region13: #{encdec_forward.11} parent=5 // pred_check
      %p175 = pneg %p174
    $region14: #{encdec_forward.11} parent=5 // pred_check_branch
      %177 = sbr.rel (%p175) target = $region16
    $region15: #{encdec_forward.11} parent=5 // pred_region
      // Predicated region
      $region17: #{encdec_forward.11} parent=15 // pred_check
        %p178 = pneg %p45
      $region18: #{encdec_forward.11} parent=15 // pred_check_branch
        %180 = sbr.rel (%p178) target = $region20
      $region19: #{encdec_forward.11} parent=15 // pred_region
        %s181 = smul.u32 4, %s18
        %p182 = scmp.lt.s32.totalorder %s181, 7
        %s183 = scalar_select %p182, %s181, 7
        %p184 = scmp.lt.s32.totalorder %s19, 0
        %s185 = scalar_select %p184, %s19, 0
        %s186 = sadd.s32 %s185, %s183
        %s187 = smul.addr %s186, 8
        %s188 = scalar_lea.vmem %s0, %s187
        %s189 = smul.u32 4, %s18
      $region20: #{encdec_forward.11} parent=15 // pred_fallthru
        _
      // Predicated region
      $region21: #{encdec_forward.11} parent=15 // pred_check
        %p190 = pneg %p71
      $region22: #{encdec_forward.11} parent=15 // pred_check_branch
        %192 = sbr.rel (%p190) target = $region24
      $region23: #{encdec_forward.11} parent=15 // pred_region
        %s193 = smul.u32 4, %s18
        %p194 = scmp.lt.s32.totalorder %s193, 7
        %s195 = scalar_select %p194, %s193, 7
        %s196 = smul.addr %s195, 8
        %s197 = scalar_lea.vmem %s1, %s196
        %s198 = smul.u32 4, %s18
      $region24: #{encdec_forward.11} parent=15 // pred_fallthru
        _
      // Predicated region
      $region25: #{encdec_forward.11} parent=15 // pred_check
        %p199 = pneg %p97
      $region26: #{encdec_forward.11} parent=15 // pred_check_branch
        %201 = sbr.rel (%p199) target = $region28
      $region27: #{encdec_forward.11} parent=15 // pred_region
        %s202 = smul.u32 4, %s18
        %p203 = scmp.lt.s32.totalorder %s202, 7
        %s204 = scalar_select %p203, %s202, 7
        %s205 = scalar_lea.vmem %s2, %s204
        %s206 = smul.u32 4, %s18
      $region28: #{encdec_forward.11} parent=15 // pred_fallthru
        _
    $region16: #{encdec_forward.11} parent=5 // pred_fallthru
      _
    %p207 = scmp.le.s32.totalorder 1, %s11
    %p208 = scmp.lt.s32.totalorder %s11, 3
    %p209 = pnand %p207, %p208
    %p210 = pneg %p209
    // Predicated region
    $region29: #{encdec_forward.11} parent=5 // pred_check
      _
    $region30: #{encdec_forward.11} parent=5 // pred_check_branch
      %212 = sbr.rel (%p209) target = $region32
    $region31: #{encdec_forward.11} parent=5 // pred_region
      %s213 = ssub.s32 %s11, 1
      %s214 = smul.u32 4, %s20
      %p215 = scmp.lt.s32.totalorder %s214, 7
      %s216 = scalar_select %p215, %s214, 7
      %p217 = scmp.lt.s32.totalorder %s21, 0
      %s218 = scalar_select %p217, %s21, 0
      %s219 = sadd.s32 %s218, %s216
      %s220 = smul.addr %s219, 8
      %s221 = scalar_lea.vmem %s0, %s220
      %p222 = pneg %p51
      %p223 = pneg %p48
      %s224 = smul.u32 4, %s20
      %p225 = scmp.lt.s32.totalorder %s224, 7
      %s226 = scalar_select %p225, %s224, 7
      %s227 = smul.addr %s226, 8
      %s228 = scalar_lea.vmem %s1, %s227
      %p229 = pneg %p77
      %p230 = pneg %p74
      %s231 = smul.u32 4, %s20
      %p232 = scmp.lt.s32.totalorder %s231, 7
      %s233 = scalar_select %p232, %s231, 7
      %s234 = scalar_lea.vmem %s2, %s233
      %p235 = pneg %p103
      %p236 = pneg %p100
      %p237 = pneg %p131
      %p238 = pneg %p128
      %s239 = smul.u32 4, %s20
      %p240 = scmp.lt.s32.totalorder %s239, 7
      %s241 = scalar_select %p240, %s239, 7
      %p242 = scmp.lt.s32.totalorder %s21, 0
      %s243 = scalar_select %p242, %s21, 0
      %s244 = sadd.s32 %s243, %s241
      %s245 = smul.addr %s244, 8
      %s246 = scalar_lea.vmem %s3, %s245
      %p247 = pneg %p159
      %p248 = pneg %p156
      %s249 = smul.u32 4, %s20
      %p250 = scmp.lt.s32.totalorder %s249, 7
      %s251 = scalar_select %p250, %s249, 7
      %p252 = scmp.lt.s32.totalorder %s21, 0
      %s253 = scalar_select %p252, %s21, 0
      %s254 = sadd.s32 %s253, %s251
      %s255 = smul.addr %s254, 8
      %s256 = scalar_lea.vmem %s4, %s255
      %s257 = smul.u32 4, %s20
      %p258 = scmp.lt.s32.totalorder %s257, 7
      %s259 = scalar_select %p258, %s257, 7
      %p260 = scmp.lt.s32.totalorder %s21, 0
      %s261 = scalar_select %p260, %s21, 0
      %s262 = sadd.s32 %s261, %s259
      %s263 = smul.addr %s262, 8
      %s264 = scalar_lea.vmem %s0, %s263
      %s265 = smul.u32 4, %s20
      %s266 = smul.u32 4, %s20
      %p267 = scmp.lt.s32.totalorder %s266, 7
      %s268 = scalar_select %p267, %s266, 7
      %s269 = smul.addr %s268, 8
      %s270 = scalar_lea.vmem %s1, %s269
      %s271 = smul.u32 4, %s20
      %s272 = smul.u32 4, %s20
      %p273 = scmp.lt.s32.totalorder %s272, 7
      %s274 = scalar_select %p273, %s272, 7
      %s275 = scalar_lea.vmem %s2, %s274
      %s276 = smul.u32 4, %s20
      %s277 = smul.u32 4, %s20
      %p278 = scmp.lt.s32.totalorder %s277, 7
      %s279 = scalar_select %p278, %s277, 7
      %p280 = scmp.lt.s32.totalorder %s21, 0
      %s281 = scalar_select %p280, %s21, 0
      %s282 = sadd.s32 %s281, %s279
      %s283 = smul.addr %s282, 8
      %s284 = scalar_lea.vmem %s3, %s283
      %s285 = smul.u32 4, %s20
      %s286 = smul.u32 4, %s20
      %p287 = scmp.lt.s32.totalorder %s286, 7
      %s288 = scalar_select %p287, %s286, 7
      %p289 = scmp.lt.s32.totalorder %s21, 0
      %s290 = scalar_select %p289, %s21, 0
      %s291 = sadd.s32 %s290, %s288
      %s292 = smul.addr %s291, 8
      %s293 = scalar_lea.vmem %s4, %s292
      %s294 = smul.u32 4, %s20
      %v295 = vld [vmem:[%s264] sm:$0xff]
      %v296 = vld [vmem:[%s264 + $0x8] sm:$0xff]
      %v297 = vld [vmem:[%s264 + $0x10] sm:$0xff]
      %v298 = vld [vmem:[%s264 + $0x18] sm:$0xff]
      %v299 = vld [vmem:[%s270] sm:$0xff]
      %v300 = vld [vmem:[%s270 + $0x8] sm:$0xff]
      %v301 = vld [vmem:[%s270 + $0x10] sm:$0xff]
      %v302 = vld [vmem:[%s270 + $0x18] sm:$0xff]
      %v303 = vld [vmem:[%s275] sm:$0x1]
      %v304 = vld [vmem:[%s275 + $0x1] sm:$0x1]
      %v305 = vld [vmem:[%s275 + $0x2] sm:$0x1]
      %v306 = vld [vmem:[%s275 + $0x3] sm:$0x1]
      %307 = vmatprep.subr.mxu0 0.0
      %308 = vmatpush1.xpose.msra.mxu0 %v299
      %309 = vmatprep.subr.mxu0 0.0
      %310 = vmatpush1.xpose.msra.mxu0 0.0
      %311 = vmatprep.subr.mxu0 0.0
      %312 = vmatpush1.xpose.msra.mxu0 0.0
      %313 = vmatprep.subr.mxu0 0.0
      %314 = vmatpush1.xpose.msra.mxu0 0.0
      %315 = vmatprep.subr.mxu0 0.0
      %316 = vmatpush1.xpose.msra.mxu0 0.0
      %317 = vmatprep.subr.mxu0 0.0
      %318 = vmatpush1.xpose.msra.mxu0 0.0
      %319 = vmatprep.subr.mxu0 0.0
      %320 = vmatpush1.xpose.msra.mxu0 0.0
      %321 = vmatprep.subr.mxu0 0.0
      %322 = vmatpush1.xpose.msra.mxu0 0.0
      %323 = vmatprep.subr.mxu0 0.0
      %324 = vmatpush1.xpose.msra.mxu0 0.0
      %325 = vmatprep.subr.mxu0 0.0
      %326 = vmatpush1.xpose.msra.mxu0 0.0
      %327 = vmatprep.subr.mxu0 0.0
      %328 = vmatpush1.xpose.msra.mxu0 0.0
      %329 = vmatprep.subr.mxu0 0.0
      %330 = vmatpush1.xpose.msra.mxu0 0.0
      %331 = vmatprep.subr.mxu0 0.0
      %332 = vmatpush1.xpose.msra.mxu0 0.0
      %333 = vmatprep.subr.mxu0 0.0
      %334 = vmatpush1.xpose.msra.mxu0 0.0
      %335 = vmatprep.subr.mxu0 0.0
      %336 = vmatpush1.xpose.msra.mxu0 0.0
      %337 = vmatprep.subr.mxu0 0.0
      %338 = vmatpush1.xpose.msra.mxu0 0.0
      %339 = vmatprep.subr.mxu0 0.0
      %340 = vmatpush1.xpose.msra.mxu0 0.0
      %341 = vmatprep.subr.mxu0 0.0
      %342 = vmatpush1.xpose.msra.mxu0 0.0
      %343 = vmatprep.subr.mxu0 0.0
      %344 = vmatpush1.xpose.msra.mxu0 0.0
      %345 = vmatprep.subr.mxu0 0.0
      %346 = vmatpush1.xpose.msra.mxu0 0.0
      %347 = vmatprep.subr.mxu0 0.0
      %348 = vmatpush1.xpose.msra.mxu0 0.0
      %349 = vmatprep.subr.mxu0 0.0
      %350 = vmatpush1.xpose.msra.mxu0 0.0
      %351 = vmatprep.subr.mxu0 0.0
      %352 = vmatpush1.xpose.msra.mxu0 0.0
      %353 = vmatprep.subr.mxu0 0.0
      %354 = vmatpush1.xpose.msra.mxu0 0.0
      %355 = vmatprep.subr.mxu0 0.0
      %356 = vmatpush1.xpose.msra.mxu0 0.0
      %357 = vmatprep.subr.mxu0 0.0
      %358 = vmatpush1.xpose.msra.mxu0 0.0
      %359 = vmatprep.subr.mxu0 0.0
      %360 = vmatpush1.xpose.msra.mxu0 0.0
      %361 = vmatprep.subr.mxu0 0.0
      %362 = vmatpush1.xpose.msra.mxu0 0.0
      %363 = vmatprep.subr.mxu0 0.0
      %364 = vmatpush1.xpose.msra.mxu0 0.0
      %365 = vmatprep.subr.mxu0 0.0
      %366 = vmatpush1.xpose.msra.mxu0 0.0
      %367 = vmatprep.subr.mxu0 0.0
      %368 = vmatpush1.xpose.msra.mxu0 0.0
      %369 = vmatprep.subr.mxu0 0.0
      %370 = vmatpush1.xpose.msra.mxu0 0.0
      %371 = vmatprep.mubr.f32.mxu0 0.0
      %372 = vmatmul.mubr.f32.gmra.mrb[0].mxu0 %v295
      %v373 = vpop.f32.mrb[0].mxu0
      %v374 = vadd.f32 0.0, %v373
      %v375 = vpop.f32.mrb[0].mxu0
      %376 = vdwg.mxu0
      %377 = vmatprep.subr.mxu0 0.0
      %378 = vmatpush1.xpose.msra.mxu0 %v300
      %379 = vmatprep.subr.mxu0 0.0
      %380 = vmatpush1.xpose.msra.mxu0 0.0
      %381 = vmatprep.subr.mxu0 0.0
      %382 = vmatpush1.xpose.msra.mxu0 0.0
      %383 = vmatprep.subr.mxu0 0.0
      %384 = vmatpush1.xpose.msra.mxu0 0.0
      %385 = vmatprep.subr.mxu0 0.0
      %386 = vmatpush1.xpose.msra.mxu0 0.0
      %387 = vmatprep.subr.mxu0 0.0
      %388 = vmatpush1.xpose.msra.mxu0 0.0
      %389 = vmatprep.subr.mxu0 0.0
      %390 = vmatpush1.xpose.msra.mxu0 0.0
      %391 = vmatprep.subr.mxu0 0.0
      %392 = vmatpush1.xpose.msra.mxu0 0.0
      %393 = vmatprep.subr.mxu0 0.0
      %394 = vmatpush1.xpose.msra.mxu0 0.0
      %395 = vmatprep.subr.mxu0 0.0
      %396 = vmatpush1.xpose.msra.mxu0 0.0
      %397 = vmatprep.subr.mxu0 0.0
      %398 = vmatpush1.xpose.msra.mxu0 0.0
      %399 = vmatprep.subr.mxu0 0.0
      %400 = vmatpush1.xpose.msra.mxu0 0.0
      %401 = vmatprep.subr.mxu0 0.0
      %402 = vmatpush1.xpose.msra.mxu0 0.0
      %403 = vmatprep.subr.mxu0 0.0
      %404 = vmatpush1.xpose.msra.mxu0 0.0
      %405 = vmatprep.subr.mxu0 0.0
      %406 = vmatpush1.xpose.msra.mxu0 0.0
      %407 = vmatprep.subr.mxu0 0.0
      %408 = vmatpush1.xpose.msra.mxu0 0.0
      %409 = vmatprep.subr.mxu0 0.0
      %410 = vmatpush1.xpose.msra.mxu0 0.0
      %411 = vmatprep.subr.mxu0 0.0
      %412 = vmatpush1.xpose.msra.mxu0 0.0
      %413 = vmatprep.subr.mxu0 0.0
      %414 = vmatpush1.xpose.msra.mxu0 0.0
      %415 = vmatprep.subr.mxu0 0.0
      %416 = vmatpush1.xpose.msra.mxu0 0.0
      %417 = vmatprep.subr.mxu0 0.0
      %418 = vmatpush1.xpose.msra.mxu0 0.0
      %419 = vmatprep.subr.mxu0 0.0
      %420 = vmatpush1.xpose.msra.mxu0 0.0
      %421 = vmatprep.subr.mxu0 0.0
      %422 = vmatpush1.xpose.msra.mxu0 0.0
      %423 = vmatprep.subr.mxu0 0.0
      %424 = vmatpush1.xpose.msra.mxu0 0.0
      %425 = vmatprep.subr.mxu0 0.0
      %426 = vmatpush1.xpose.msra.mxu0 0.0
      %427 = vmatprep.subr.mxu0 0.0
      %428 = vmatpush1.xpose.msra.mxu0 0.0
      %429 = vmatprep.subr.mxu0 0.0
      %430 = vmatpush1.xpose.msra.mxu0 0.0
      %431 = vmatprep.subr.mxu0 0.0
      %432 = vmatpush1.xpose.msra.mxu0 0.0
      %433 = vmatprep.subr.mxu0 0.0
      %434 = vmatpush1.xpose.msra.mxu0 0.0
      %435 = vmatprep.subr.mxu0 0.0
      %436 = vmatpush1.xpose.msra.mxu0 0.0
      %437 = vmatprep.subr.mxu0 0.0
      %438 = vmatpush1.xpose.msra.mxu0 0.0
      %439 = vmatprep.subr.mxu0 0.0
      %440 = vmatpush1.xpose.msra.mxu0 0.0
      %441 = vmatprep.mubr.f32.mxu0 0.0
      %442 = vmatmul.mubr.f32.gmra.mrb[0].mxu0 %v296
      %v443 = vpop.f32.mrb[0].mxu0
      %v444 = vadd.f32 0.0, %v443
      %v445 = vpop.f32.mrb[0].mxu0
      %446 = vdwg.mxu0
      %447 = vmatprep.subr.mxu0 0.0
      %448 = vmatpush1.xpose.msra.mxu0 %v301
      %449 = vmatprep.subr.mxu0 0.0
      %450 = vmatpush1.xpose.msra.mxu0 0.0
      %451 = vmatprep.subr.mxu0 0.0
      %452 = vmatpush1.xpose.msra.mxu0 0.0
      %453 = vmatprep.subr.mxu0 0.0
      %454 = vmatpush1.xpose.msra.mxu0 0.0
      %455 = vmatprep.subr.mxu0 0.0
      %456 = vmatpush1.xpose.msra.mxu0 0.0
      %457 = vmatprep.subr.mxu0 0.0
      %458 = vmatpush1.xpose.msra.mxu0 0.0
      %459 = vmatprep.subr.mxu0 0.0
      %460 = vmatpush1.xpose.msra.mxu0 0.0
      %461 = vmatprep.subr.mxu0 0.0
      %462 = vmatpush1.xpose.msra.mxu0 0.0
      %463 = vmatprep.subr.mxu0 0.0
      %464 = vmatpush1.xpose.msra.mxu0 0.0
      %465 = vmatprep.subr.mxu0 0.0
      %466 = vmatpush1.xpose.msra.mxu0 0.0
      %467 = vmatprep.subr.mxu0 0.0
      %468 = vmatpush1.xpose.msra.mxu0 0.0
      %469 = vmatprep.subr.mxu0 0.0
      %470 = vmatpush1.xpose.msra.mxu0 0.0
      %471 = vmatprep.subr.mxu0 0.0
      %472 = vmatpush1.xpose.msra.mxu0 0.0
      %473 = vmatprep.subr.mxu0 0.0
      %474 = vmatpush1.xpose.msra.mxu0 0.0
      %475 = vmatprep.subr.mxu0 0.0
      %476 = vmatpush1.xpose.msra.mxu0 0.0
      %477 = vmatprep.subr.mxu0 0.0
      %478 = vmatpush1.xpose.msra.mxu0 0.0
      %479 = vmatprep.subr.mxu0 0.0
      %480 = vmatpush1.xpose.msra.mxu0 0.0
      %481 = vmatprep.subr.mxu0 0.0
      %482 = vmatpush1.xpose.msra.mxu0 0.0
      %483 = vmatprep.subr.mxu0 0.0
      %484 = vmatpush1.xpose.msra.mxu0 0.0
      %485 = vmatprep.subr.mxu0 0.0
      %486 = vmatpush1.xpose.msra.mxu0 0.0
      %487 = vmatprep.subr.mxu0 0.0
      %488 = vmatpush1.xpose.msra.mxu0 0.0
      %489 = vmatprep.subr.mxu0 0.0
      %490 = vmatpush1.xpose.msra.mxu0 0.0
      %491 = vmatprep.subr.mxu0 0.0
      %492 = vmatpush1.xpose.msra.mxu0 0.0
      %493 = vmatprep.subr.mxu0 0.0
      %494 = vmatpush1.xpose.msra.mxu0 0.0
      %495 = vmatprep.subr.mxu0 0.0
      %496 = vmatpush1.xpose.msra.mxu0 0.0
      %497 = vmatprep.subr.mxu0 0.0
      %498 = vmatpush1.xpose.msra.mxu0 0.0
      %499 = vmatprep.subr.mxu0 0.0
      %500 = vmatpush1.xpose.msra.mxu0 0.0
      %501 = vmatprep.subr.mxu0 0.0
      %502 = vmatpush1.xpose.msra.mxu0 0.0
      %503 = vmatprep.subr.mxu0 0.0
      %504 = vmatpush1.xpose.msra.mxu0 0.0
      %505 = vmatprep.subr.mxu0 0.0
      %506 = vmatpush1.xpose.msra.mxu0 0.0
      %507 = vmatprep.subr.mxu0 0.0
      %508 = vmatpush1.xpose.msra.mxu0 0.0
      %509 = vmatprep.subr.mxu0 0.0
      %510 = vmatpush1.xpose.msra.mxu0 0.0
      %511 = vmatprep.mubr.f32.mxu0 0.0
      %512 = vmatmul.mubr.f32.gmra.mrb[0].mxu0 %v297
      %v513 = vpop.f32.mrb[0].mxu0
      %v514 = vadd.f32 0.0, %v513
      %v515 = vpop.f32.mrb[0].mxu0
      %516 = vdwg.mxu0
      %517 = vmatprep.subr.mxu0 0.0
      %518 = vmatpush1.xpose.msra.mxu0 %v302
      %519 = vmatprep.subr.mxu0 0.0
      %520 = vmatpush1.xpose.msra.mxu0 0.0
      %521 = vmatprep.subr.mxu0 0.0
      %522 = vmatpush1.xpose.msra.mxu0 0.0
      %523 = vmatprep.subr.mxu0 0.0
      %524 = vmatpush1.xpose.msra.mxu0 0.0
      %525 = vmatprep.subr.mxu0 0.0
      %526 = vmatpush1.xpose.msra.mxu0 0.0
      %527 = vmatprep.subr.mxu0 0.0
      %528 = vmatpush1.xpose.msra.mxu0 0.0
      %529 = vmatprep.subr.mxu0 0.0
      %530 = vmatpush1.xpose.msra.mxu0 0.0
      %531 = vmatprep.subr.mxu0 0.0
      %532 = vmatpush1.xpose.msra.mxu0 0.0
      %533 = vmatprep.subr.mxu0 0.0
      %534 = vmatpush1.xpose.msra.mxu0 0.0
      %535 = vmatprep.subr.mxu0 0.0
      %536 = vmatpush1.xpose.msra.mxu0 0.0
      %537 = vmatprep.subr.mxu0 0.0
      %538 = vmatpush1.xpose.msra.mxu0 0.0
      %539 = vmatprep.subr.mxu0 0.0
      %540 = vmatpush1.xpose.msra.mxu0 0.0
      %541 = vmatprep.subr.mxu0 0.0
      %542 = vmatpush1.xpose.msra.mxu0 0.0
      %543 = vmatprep.subr.mxu0 0.0
      %544 = vmatpush1.xpose.msra.mxu0 0.0
      %545 = vmatprep.subr.mxu0 0.0
      %546 = vmatpush1.xpose.msra.mxu0 0.0
      %547 = vmatprep.subr.mxu0 0.0
      %548 = vmatpush1.xpose.msra.mxu0 0.0
      %549 = vmatprep.subr.mxu0 0.0
      %550 = vmatpush1.xpose.msra.mxu0 0.0
      %551 = vmatprep.subr.mxu0 0.0
      %552 = vmatpush1.xpose.msra.mxu0 0.0
      %553 = vmatprep.subr.mxu0 0.0
      %554 = vmatpush1.xpose.msra.mxu0 0.0
      %555 = vmatprep.subr.mxu0 0.0
      %556 = vmatpush1.xpose.msra.mxu0 0.0
      %557 = vmatprep.subr.mxu0 0.0
      %558 = vmatpush1.xpose.msra.mxu0 0.0
      %559 = vmatprep.subr.mxu0 0.0
      %560 = vmatpush1.xpose.msra.mxu0 0.0
      %561 = vmatprep.subr.mxu0 0.0
      %562 = vmatpush1.xpose.msra.mxu0 0.0
      %563 = vmatprep.subr.mxu0 0.0
      %564 = vmatpush1.xpose.msra.mxu0 0.0
      %565 = vmatprep.subr.mxu0 0.0
      %566 = vmatpush1.xpose.msra.mxu0 0.0
      %567 = vmatprep.subr.mxu0 0.0
      %568 = vmatpush1.xpose.msra.mxu0 0.0
      %569 = vmatprep.subr.mxu0 0.0
      %570 = vmatpush1.xpose.msra.mxu0 0.0
      %571 = vmatprep.subr.mxu0 0.0
      %572 = vmatpush1.xpose.msra.mxu0 0.0
      %573 = vmatprep.subr.mxu0 0.0
      %574 = vmatpush1.xpose.msra.mxu0 0.0
      %575 = vmatprep.subr.mxu0 0.0
      %576 = vmatpush1.xpose.msra.mxu0 0.0
      %577 = vmatprep.subr.mxu0 0.0
      %578 = vmatpush1.xpose.msra.mxu0 0.0
      %579 = vmatprep.subr.mxu0 0.0
      %580 = vmatpush1.xpose.msra.mxu0 0.0
      %581 = vmatprep.mubr.f32.mxu0 0.0
      %582 = vmatmul.mubr.f32.gmra.mrb[0].mxu0 %v298
      %v583 = vpop.f32.mrb[0].mxu0
      %v584 = vadd.f32 0.0, %v583
      %v585 = vpop.f32.mrb[0].mxu0
      %586 = vdwg.mxu0
      %vm587 = vcmp.gt.f32.partialorder %v303, 0.0
      %vm588 = vcmp.gt.f32.partialorder %v304, 0.0
      %vm589 = vcmp.gt.f32.partialorder %v305, 0.0
      %vm590 = vcmp.gt.f32.partialorder %v306, 0.0
      %v591 = vsel %vm587, 1, 0
      %v592 = vsel %vm588, 1, 0
      %v593 = vsel %vm589, 1, 0
      %v594 = vsel %vm590, 1, 0
      %v595 = vlaneseq
      %v596 = vshrl.u32 %v595, 7
      %v597 = vsub.s32 0, %v596
      %v598 = vrot.slane %v591, %v597
      %v599 = vlaneseq
      %v600 = vshrl.u32 %v599, 7
      %v601 = vsub.s32 0, %v600
      %v602 = vrot.slane %v592, %v601
      %v603 = vlaneseq
      %v604 = vshrl.u32 %v603, 7
      %v605 = vsub.s32 0, %v604
      %v606 = vrot.slane %v593, %v605
      %v607 = vlaneseq
      %v608 = vshrl.u32 %v607, 7
      %v609 = vsub.s32 0, %v608
      %v610 = vrot.slane %v594, %v609
      %vm611 = vcmp.eq.s32.totalorder %v598, 1
      %vm612 = vcmp.eq.s32.totalorder %v602, 1
      %vm613 = vcmp.eq.s32.totalorder %v606, 1
      %vm614 = vcmp.eq.s32.totalorder %v610, 1
      %v615 = vsel %vm611, %v374, -1e+30
      %v616 = vsel %vm612, %v444, -1e+30
      %v617 = vsel %vm613, %v514, -1e+30
      %v618 = vsel %vm614, %v584, -1e+30
      %vm619 = vcmask 64512
      %v620 = vsel %vm619, %v615, -inf
      %621 = vmax.xlane.f32.xlu0 %v620
      %v622 = vpop.xlane.xlu0 %621
      %v623 = vsel %vm619, %v616, -inf
      %624 = vmax.xlane.f32.xlu0 %v623
      %v625 = vpop.xlane.xlu0 %624
      %v626 = vsel %vm619, %v617, -inf
      %627 = vmax.xlane.f32.xlu0 %v626
      %v628 = vpop.xlane.xlu0 %627
      %v629 = vsel %vm619, %v618, -inf
      %630 = vmax.xlane.f32.xlu0 %v629
      %v631 = vpop.xlane.xlu0 %630
      %v632 = vsub.f32 %v615, %v622
      %v633 = vsub.f32 %v616, %v625
      %v634 = vsub.f32 %v617, %v628
      %v635 = vsub.f32 %v618, %v631
      %v636 = vmul.f32 %v632, 1.442695
      %v637 = vpow.pop %v636
      %v638 = vmul.f32 %v633, 1.442695
      %v639 = vpow.pop %v638
      %v640 = vmul.f32 %v634, 1.442695
      %v641 = vpow.pop %v640
      %v642 = vmul.f32 %v635, 1.442695
      %v643 = vpow.pop %v642
      %v644 = vsel %vm611, %v637, 0.0
      %v645 = vsel %vm612, %v639, 0.0
      %v646 = vsel %vm613, %v641, 0.0
      %v647 = vsel %vm614, %v643, 0.0
      %v648 = vsel %vm619, %v644, 0.0
      %649 = vadd.xlane.f32.xlu0 %v648
      %v650 = vpop.xlane.xlu0 %649
      %v651 = vsel %vm619, %v645, 0.0
      %652 = vadd.xlane.f32.xlu0 %v651
      %v653 = vpop.xlane.xlu0 %652
      %v654 = vsel %vm619, %v646, 0.0
      %655 = vadd.xlane.f32.xlu0 %v654
      %v656 = vpop.xlane.xlu0 %655
      %v657 = vsel %vm619, %v647, 0.0
      %658 = vadd.xlane.f32.xlu0 %v657
      %v659 = vpop.xlane.xlu0 %658
      %v660 = vmax.f32 %v650, 1e-20
      %v661 = vmax.f32 %v653, 1e-20
      %v662 = vmax.f32 %v656, 1e-20
      %v663 = vmax.f32 %v659, 1e-20
      %v664 = vrcp.pop %v660
      %v665 = vrcp.pop %v661
      %v666 = vrcp.pop %v662
      %v667 = vrcp.pop %v663
      %v668 = vmul.f32 %v644, %v664
      %v669 = vmul.f32 %v645, %v665
      %v670 = vmul.f32 %v646, %v666
      %v671 = vmul.f32 %v647, %v667
      %672 = vst.msk [vmem:[%s293] sm:$0xff] %vm619, %v668
      %673 = vst.msk [vmem:[%s293 + $0x8] sm:$0xff] %vm619, %v669
      %674 = vst.msk [vmem:[%s293 + $0x10] sm:$0xff] %vm619, %v670
      %675 = vst.msk [vmem:[%s293 + $0x18] sm:$0xff] %vm619, %v671
      %v677 = vsel %vm619, %v668, 0
      %679 = vmatprep.subr.mxu0 0.0
      %680 = vmatpush1.msra.mxu0 %v299
      %681 = vmatprep.subr.mxu0 0.0
      %682 = vmatpush1.msra.mxu0 0.0
      %683 = vmatprep.subr.mxu0 0.0
      %684 = vmatpush1.msra.mxu0 0.0
      %685 = vmatprep.subr.mxu0 0.0
      %686 = vmatpush1.msra.mxu0 0.0
      %687 = vmatprep.subr.mxu0 0.0
      %688 = vmatpush1.msra.mxu0 0.0
      %689 = vmatprep.subr.mxu0 0.0
      %690 = vmatpush1.msra.mxu0 0.0
      %691 = vmatprep.subr.mxu0 0.0
      %692 = vmatpush1.msra.mxu0 0.0
      %693 = vmatprep.subr.mxu0 0.0
      %694 = vmatpush1.msra.mxu0 0.0
      %695 = vmatprep.subr.mxu0 0.0
      %696 = vmatpush1.msra.mxu0 0.0
      %697 = vmatprep.subr.mxu0 0.0
      %698 = vmatpush1.msra.mxu0 0.0
      %699 = vmatprep.subr.mxu0 0.0
      %700 = vmatpush1.msra.mxu0 0.0
      %701 = vmatprep.subr.mxu0 0.0
      %702 = vmatpush1.msra.mxu0 0.0
      %703 = vmatprep.subr.mxu0 0.0
      %704 = vmatpush1.msra.mxu0 0.0
      %705 = vmatprep.subr.mxu0 0.0
      %706 = vmatpush1.msra.mxu0 0.0
      %707 = vmatprep.subr.mxu0 0.0
      %708 = vmatpush1.msra.mxu0 0.0
      %709 = vmatprep.subr.mxu0 0.0
      %710 = vmatpush1.msra.mxu0 0.0
      %711 = vmatprep.subr.mxu0 0.0
      %712 = vmatpush1.msra.mxu0 0.0
      %713 = vmatprep.subr.mxu0 0.0
      %714 = vmatpush1.msra.mxu0 0.0
      %715 = vmatprep.subr.mxu0 0.0
      %716 = vmatpush1.msra.mxu0 0.0
      %717 = vmatprep.subr.mxu0 0.0
      %718 = vmatpush1.msra.mxu0 0.0
      %719 = vmatprep.subr.mxu0 0.0
      %720 = vmatpush1.msra.mxu0 0.0
      %721 = vmatprep.subr.mxu0 0.0
      %722 = vmatpush1.msra.mxu0 0.0
      %723 = vmatprep.subr.mxu0 0.0
      %724 = vmatpush1.msra.mxu0 0.0
      %725 = vmatprep.subr.mxu0 0.0
      %726 = vmatpush1.msra.mxu0 0.0
      %727 = vmatprep.subr.mxu0 0.0
      %728 = vmatpush1.msra.mxu0 0.0
      %729 = vmatprep.subr.mxu0 0.0
      %730 = vmatpush1.msra.mxu0 0.0
      %731 = vmatprep.subr.mxu0 0.0
      %732 = vmatpush1.msra.mxu0 0.0
      %733 = vmatprep.subr.mxu0 0.0
      %734 = vmatpush1.msra.mxu0 0.0
      %735 = vmatprep.subr.mxu0 0.0
      %736 = vmatpush1.msra.mxu0 0.0
      %737 = vmatprep.subr.mxu0 0.0
      %738 = vmatpush1.msra.mxu0 0.0
      %739 = vmatprep.subr.mxu0 0.0
      %740 = vmatpush1.msra.mxu0 0.0
      %741 = vmatprep.subr.mxu0 0.0
      %742 = vmatpush1.msra.mxu0 0.0
      %743 = vmatprep.mubr.f32.mxu0 0.0
      %744 = vmatmul.mubr.f32.gmra.mrb[0].mxu0 %v677
      %v745 = vpop.f32.mrb[0].mxu0
      %v746 = vadd.f32 0.0, %v745
      %v747 = vpop.f32.mrb[0].mxu0
      %748 = vdwg.mxu0
      %v750 = vsel %vm619, %v669, 0
      %752 = vmatprep.subr.mxu0 0.0
      %753 = vmatpush1.msra.mxu0 %v300
      %754 = vmatprep.subr.mxu0 0.0
      %755 = vmatpush1.msra.mxu0 0.0
      %756 = vmatprep.subr.mxu0 0.0
      %757 = vmatpush1.msra.mxu0 0.0
      %758 = vmatprep.subr.mxu0 0.0
      %759 = vmatpush1.msra.mxu0 0.0
      %760 = vmatprep.subr.mxu0 0.0
      %761 = vmatpush1.msra.mxu0 0.0
      %762 = vmatprep.subr.mxu0 0.0
      %763 = vmatpush1.msra.mxu0 0.0
      %764 = vmatprep.subr.mxu0 0.0
      %765 = vmatpush1.msra.mxu0 0.0
      %766 = vmatprep.subr.mxu0 0.0
      %767 = vmatpush1.msra.mxu0 0.0
      %768 = vmatprep.subr.mxu0 0.0
      %769 = vmatpush1.msra.mxu0 0.0
      %770 = vmatprep.subr.mxu0 0.0
      %771 = vmatpush1.msra.mxu0 0.0
      %772 = vmatprep.subr.mxu0 0.0
      %773 = vmatpush1.msra.mxu0 0.0
      %774 = vmatprep.subr.mxu0 0.0
      %775 = vmatpush1.msra.mxu0 0.0
      %776 = vmatprep.subr.mxu0 0.0
      %777 = vmatpush1.msra.mxu0 0.0
      %778 = vmatprep.subr.mxu0 0.0
      %779 = vmatpush1.msra.mxu0 0.0
      %780 = vmatprep.subr.mxu0 0.0
      %781 = vmatpush1.msra.mxu0 0.0
      %782 = vmatprep.subr.mxu0 0.0
      %783 = vmatpush1.msra.mxu0 0.0
      %784 = vmatprep.subr.mxu0 0.0
      %785 = vmatpush1.msra.mxu0 0.0
      %786 = vmatprep.subr.mxu0 0.0
      %787 = vmatpush1.msra.mxu0 0.0
      %788 = vmatprep.subr.mxu0 0.0
      %789 = vmatpush1.msra.mxu0 0.0
      %790 = vmatprep.subr.mxu0 0.0
      %791 = vmatpush1.msra.mxu0 0.0
      %792 = vmatprep.subr.mxu0 0.0
      %793 = vmatpush1.msra.mxu0 0.0
      %794 = vmatprep.subr.mxu0 0.0
      %795 = vmatpush1.msra.mxu0 0.0
      %796 = vmatprep.subr.mxu0 0.0
      %797 = vmatpush1.msra.mxu0 0.0
      %798 = vmatprep.subr.mxu0 0.0
      %799 = vmatpush1.msra.mxu0 0.0
      %800 = vmatprep.subr.mxu0 0.0
      %801 = vmatpush1.msra.mxu0 0.0
      %802 = vmatprep.subr.mxu0 0.0
      %803 = vmatpush1.msra.mxu0 0.0
      %804 = vmatprep.subr.mxu0 0.0
      %805 = vmatpush1.msra.mxu0 0.0
      %806 = vmatprep.subr.mxu0 0.0
      %807 = vmatpush1.msra.mxu0 0.0
      %808 = vmatprep.subr.mxu0 0.0
      %809 = vmatpush1.msra.mxu0 0.0
      %810 = vmatprep.subr.mxu0 0.0
      %811 = vmatpush1.msra.mxu0 0.0
      %812 = vmatprep.subr.mxu0 0.0
      %813 = vmatpush1.msra.mxu0 0.0
      %814 = vmatprep.subr.mxu0 0.0
      %815 = vmatpush1.msra.mxu0 0.0
      %816 = vmatprep.mubr.f32.mxu0 0.0
      %817 = vmatmul.mubr.f32.gmra.mrb[0].mxu0 %v750
      %v818 = vpop.f32.mrb[0].mxu0
      %v819 = vadd.f32 0.0, %v818
      %v820 = vpop.f32.mrb[0].mxu0
      %821 = vdwg.mxu0
      %v823 = vsel %vm619, %v670, 0
      %825 = vmatprep.subr.mxu0 0.0
      %826 = vmatpush1.msra.mxu0 %v301
      %827 = vmatprep.subr.mxu0 0.0
      %828 = vmatpush1.msra.mxu0 0.0
      %829 = vmatprep.subr.mxu0 0.0
      %830 = vmatpush1.msra.mxu0 0.0
      %831 = vmatprep.subr.mxu0 0.0
      %832 = vmatpush1.msra.mxu0 0.0
      %833 = vmatprep.subr.mxu0 0.0
      %834 = vmatpush1.msra.mxu0 0.0
      %835 = vmatprep.subr.mxu0 0.0
      %836 = vmatpush1.msra.mxu0 0.0
      %837 = vmatprep.subr.mxu0 0.0
      %838 = vmatpush1.msra.mxu0 0.0
      %839 = vmatprep.subr.mxu0 0.0
      %840 = vmatpush1.msra.mxu0 0.0
      %841 = vmatprep.subr.mxu0 0.0
      %842 = vmatpush1.msra.mxu0 0.0
      %843 = vmatprep.subr.mxu0 0.0
      %844 = vmatpush1.msra.mxu0 0.0
      %845 = vmatprep.subr.mxu0 0.0
      %846 = vmatpush1.msra.mxu0 0.0
      %847 = vmatprep.subr.mxu0 0.0
      %848 = vmatpush1.msra.mxu0 0.0
      %849 = vmatprep.subr.mxu0 0.0
      %850 = vmatpush1.msra.mxu0 0.0
      %851 = vmatprep.subr.mxu0 0.0
      %852 = vmatpush1.msra.mxu0 0.0
      %853 = vmatprep.subr.mxu0 0.0
      %854 = vmatpush1.msra.mxu0 0.0
      %855 = vmatprep.subr.mxu0 0.0
      %856 = vmatpush1.msra.mxu0 0.0
      %857 = vmatprep.subr.mxu0 0.0
      %858 = vmatpush1.msra.mxu0 0.0
      %859 = vmatprep.subr.mxu0 0.0
      %860 = vmatpush1.msra.mxu0 0.0
      %861 = vmatprep.subr.mxu0 0.0
      %862 = vmatpush1.msra.mxu0 0.0
      %863 = vmatprep.subr.mxu0 0.0
      %864 = vmatpush1.msra.mxu0 0.0
      %865 = vmatprep.subr.mxu0 0.0
      %866 = vmatpush1.msra.mxu0 0.0
      %867 = vmatprep.subr.mxu0 0.0
      %868 = vmatpush1.msra.mxu0 0.0
      %869 = vmatprep.subr.mxu0 0.0
      %870 = vmatpush1.msra.mxu0 0.0
      %871 = vmatprep.subr.mxu0 0.0
      %872 = vmatpush1.msra.mxu0 0.0
      %873 = vmatprep.subr.mxu0 0.0
      %874 = vmatpush1.msra.mxu0 0.0
      %875 = vmatprep.subr.mxu0 0.0
      %876 = vmatpush1.msra.mxu0 0.0
      %877 = vmatprep.subr.mxu0 0.0
      %878 = vmatpush1.msra.mxu0 0.0
      %879 = vmatprep.subr.mxu0 0.0
      %880 = vmatpush1.msra.mxu0 0.0
      %881 = vmatprep.subr.mxu0 0.0
      %882 = vmatpush1.msra.mxu0 0.0
      %883 = vmatprep.subr.mxu0 0.0
      %884 = vmatpush1.msra.mxu0 0.0
      %885 = vmatprep.subr.mxu0 0.0
      %886 = vmatpush1.msra.mxu0 0.0
      %887 = vmatprep.subr.mxu0 0.0
      %888 = vmatpush1.msra.mxu0 0.0
      %889 = vmatprep.mubr.f32.mxu0 0.0
      %890 = vmatmul.mubr.f32.gmra.mrb[0].mxu0 %v823
      %v891 = vpop.f32.mrb[0].mxu0
      %v892 = vadd.f32 0.0, %v891
      %v893 = vpop.f32.mrb[0].mxu0
      %894 = vdwg.mxu0
      %v896 = vsel %vm619, %v671, 0
      %898 = vmatprep.subr.mxu0 0.0
      %899 = vmatpush1.msra.mxu0 %v302
      %900 = vmatprep.subr.mxu0 0.0
      %901 = vmatpush1.msra.mxu0 0.0
      %902 = vmatprep.subr.mxu0 0.0
      %903 = vmatpush1.msra.mxu0 0.0
      %904 = vmatprep.subr.mxu0 0.0
      %905 = vmatpush1.msra.mxu0 0.0
      %906 = vmatprep.subr.mxu0 0.0
      %907 = vmatpush1.msra.mxu0 0.0
      %908 = vmatprep.subr.mxu0 0.0
      %909 = vmatpush1.msra.mxu0 0.0
      %910 = vmatprep.subr.mxu0 0.0
      %911 = vmatpush1.msra.mxu0 0.0
      %912 = vmatprep.subr.mxu0 0.0
      %913 = vmatpush1.msra.mxu0 0.0
      %914 = vmatprep.subr.mxu0 0.0
      %915 = vmatpush1.msra.mxu0 0.0
      %916 = vmatprep.subr.mxu0 0.0
      %917 = vmatpush1.msra.mxu0 0.0
      %918 = vmatprep.subr.mxu0 0.0
      %919 = vmatpush1.msra.mxu0 0.0
      %920 = vmatprep.subr.mxu0 0.0
      %921 = vmatpush1.msra.mxu0 0.0
      %922 = vmatprep.subr.mxu0 0.0
      %923 = vmatpush1.msra.mxu0 0.0
      %924 = vmatprep.subr.mxu0 0.0
      %925 = vmatpush1.msra.mxu0 0.0
      %926 = vmatprep.subr.mxu0 0.0
      %927 = vmatpush1.msra.mxu0 0.0
      %928 = vmatprep.subr.mxu0 0.0
      %929 = vmatpush1.msra.mxu0 0.0
      %930 = vmatprep.subr.mxu0 0.0
      %931 = vmatpush1.msra.mxu0 0.0
      %932 = vmatprep.subr.mxu0 0.0
      %933 = vmatpush1.msra.mxu0 0.0
      %934 = vmatprep.subr.mxu0 0.0
      %935 = vmatpush1.msra.mxu0 0.0
      %936 = vmatprep.subr.mxu0 0.0
      %937 = vmatpush1.msra.mxu0 0.0
      %938 = vmatprep.subr.mxu0 0.0
      %939 = vmatpush1.msra.mxu0 0.0
      %940 = vmatprep.subr.mxu0 0.0
      %941 = vmatpush1.msra.mxu0 0.0
      %942 = vmatprep.subr.mxu0 0.0
      %943 = vmatpush1.msra.mxu0 0.0
      %944 = vmatprep.subr.mxu0 0.0
      %945 = vmatpush1.msra.mxu0 0.0
      %946 = vmatprep.subr.mxu0 0.0
      %947 = vmatpush1.msra.mxu0 0.0
      %948 = vmatprep.subr.mxu0 0.0
      %949 = vmatpush1.msra.mxu0 0.0
      %950 = vmatprep.subr.mxu0 0.0
      %951 = vmatpush1.msra.mxu0 0.0
      %952 = vmatprep.subr.mxu0 0.0
      %953 = vmatpush1.msra.mxu0 0.0
      %954 = vmatprep.subr.mxu0 0.0
      %955 = vmatpush1.msra.mxu0 0.0
      %956 = vmatprep.subr.mxu0 0.0
      %957 = vmatpush1.msra.mxu0 0.0
      %958 = vmatprep.subr.mxu0 0.0
      %959 = vmatpush1.msra.mxu0 0.0
      %960 = vmatprep.subr.mxu0 0.0
      %961 = vmatpush1.msra.mxu0 0.0
      %962 = vmatprep.mubr.f32.mxu0 0.0
      %963 = vmatmul.mubr.f32.gmra.mrb[0].mxu0 %v896
      %v964 = vpop.f32.mrb[0].mxu0
      %v965 = vadd.f32 0.0, %v964
      %v966 = vpop.f32.mrb[0].mxu0
      %967 = vdwg.mxu0
      %968 = vst [vmem:[%s284] sm:$0xff] %v746
      %969 = vst [vmem:[%s284 + $0x8] sm:$0xff] %v819
      %970 = vst [vmem:[%s284 + $0x10] sm:$0xff] %v892
      %971 = vst [vmem:[%s284 + $0x18] sm:$0xff] %v965
      %s972 = smul.u32 4, %s20
      %p973 = scmp.lt.s32.totalorder %s972, 7
      %s974 = scalar_select %p973, %s972, 7
      %p975 = scmp.lt.s32.totalorder %s21, 0
      %s976 = scalar_select %p975, %s21, 0
      %s977 = sadd.s32 %s976, %s974
      %s978 = smul.addr %s977, 8
      %s979 = scalar_lea.vmem %s3, %s978
      %s980 = smul.u32 4, %s20
      %p981 = scmp.lt.s32.totalorder %s980, 7
      %s982 = scalar_select %p981, %s980, 7
      %p983 = scmp.lt.s32.totalorder %s21, 0
      %s984 = scalar_select %p983, %s21, 0
      %s985 = sadd.s32 %s984, %s982
      %s986 = smul.addr %s985, 8
      %s987 = scalar_lea.vmem %s4, %s986
      // Predicated region
      $region33: #{encdec_forward.11} parent=31 // pred_check
        %p988 = pneg %p128
      $region34: #{encdec_forward.11} parent=31 // pred_check_branch
        %990 = sbr.rel (%p988) target = $region36
      $region35: #{encdec_forward.11} parent=31 // pred_region
        %s991 = smul.u32 4, %s20
      $region36: #{encdec_forward.11} parent=31 // pred_fallthru
        _
      // Predicated region
      $region37: #{encdec_forward.11} parent=31 // pred_check
        %p992 = pneg %p156
      $region38: #{encdec_forward.11} parent=31 // pred_check_branch
        %994 = sbr.rel (%p992) target = $region40
      $region39: #{encdec_forward.11} parent=31 // pred_region
        %s995 = smul.u32 4, %s20
      $region40: #{encdec_forward.11} parent=31 // pred_fallthru
        _
    $region32: #{encdec_forward.11} parent=5 // pred_fallthru
      _
    %p996 = scmp.le.s32.totalorder 2, %s11
    // Predicated region
    $region41: #{encdec_forward.11} parent=5 // pred_check
      %p997 = pneg %p996
    $region42: #{encdec_forward.11} parent=5 // pred_check_branch
      %999 = sbr.rel (%p997) target = $region44
    $region43: #{encdec_forward.11} parent=5 // pred_region
      %s1000 = ssub.s32 %s11, 2
      // Predicated region
      $region45: #{encdec_forward.11} parent=43 // pred_check
        %p1001 = pneg %p134
      $region46: #{encdec_forward.11} parent=43 // pred_check_branch
        %1003 = sbr.rel (%p1001) target = $region48
      $region47: #{encdec_forward.11} parent=43 // pred_region
        %s1004 = smul.u32 4, %s22
        %p1005 = scmp.lt.s32.totalorder %s1004, 7
        %s1006 = scalar_select %p1005, %s1004, 7
        %p1007 = scmp.lt.s32.totalorder %s23, 0
        %s1008 = scalar_select %p1007, %s23, 0
        %s1009 = sadd.s32 %s1008, %s1006
        %s1010 = smul.addr %s1009, 8
        %s1011 = scalar_lea.vmem %s3, %s1010
      $region48: #{encdec_forward.11} parent=43 // pred_fallthru
        _
      // Predicated region
      $region49: #{encdec_forward.11} parent=43 // pred_check
        %p1012 = pneg %p162
      $region50: #{encdec_forward.11} parent=43 // pred_check_branch
        %1014 = sbr.rel (%p1012) target = $region52
      $region51: #{encdec_forward.11} parent=43 // pred_region
        %s1015 = smul.u32 4, %s22
        %p1016 = scmp.lt.s32.totalorder %s1015, 7
        %s1017 = scalar_select %p1016, %s1015, 7
        %p1018 = scmp.lt.s32.totalorder %s23, 0
        %s1019 = scalar_select %p1018, %s23, 0
        %s1020 = sadd.s32 %s1019, %s1017
        %s1021 = smul.addr %s1020, 8
        %s1022 = scalar_lea.vmem %s4, %s1021
      $region52: #{encdec_forward.11} parent=43 // pred_fallthru
        _
    $region44: #{encdec_forward.11} parent=5 // pred_fallthru
      _
  $region6: #{encdec_forward.11} parent=0 // loop_footer
    %s15 = sadd.s32 1, %s11
  $region7: #{encdec_forward.11} parent=0 // loop_footer_branch
    %10 = sbr.rel target = $region3
  $region8: #{encdec_forward.11} parent=0 // loop_exit
    _

// kernel: encdec_forward.13
$region0: #{encdec_forward.13}
  #allocation0 [shape = 'u32[]', space=smem, size = 0x4, offset = 0x4, fixed_abs, tag = 'smem constant byte address 0x4 - core index']
  #allocation1 [shape = 'u32[144,128]{1,0:T(1,128)}', space=vmem, size = 0x12000, scoped, tag = 'internal scratch']
  %s0 = inlined_call_operand.vmem [shape: f32[64,256], index: 0, kind: input, shape index: {}]
  %s1 = inlined_call_operand.vmem [shape: f32[64,128], index: 1, kind: input, shape index: {}]
  %s2 = inlined_call_operand.vmem [shape: f32[256,128], index: 2, kind: input, shape index: {}]
  %s3 = inlined_call_operand.vmem [shape: f32[1,128], index: 3, kind: input, shape index: {}]
  %s4 = inlined_call_operand.vmem [shape: f32[64,128], index: 4, kind: output, shape index: {}]
  %s5 = sld [smem:[#allocation0]]
  $region49: #{encdec_forward.13} parent=0
    _
  %s7 = ssub.s32 1, %s5
  %s8 = scalar_select 0, %s7, %s5
  loop: start=0, step=1, limit=4
  $region2: #{encdec_forward.13} parent=0 // loop_pre_header
    _
  $region3: #{encdec_forward.13} parent=0 // loop_header
    %s10 = sphi 0, %s14
    %p11 = scmp.ge.s32.totalorder %s10, 4
    %s20 = sphi 0, %s22
    %s23 = sphi 0, %s20
    %s24 = sphi 0, %s23
    %s40 = sphi 0, %s24
    %s46 = sphi 0, %s48
    %s49 = sphi 0, %s46
    %s50 = sphi 0, %s49
    %s66 = sphi 0, %s50
    %s70 = sphi 0, %s70
    %s72 = sphi 0, %s70
    %s73 = sphi 0, %s72
    %s87 = sphi 0, %s73
    %s91 = sphi 0, %s91
    %s93 = sphi 0, %s91
    %s94 = sphi 0, %s93
    %s108 = sphi 0, %s94
    %s114 = sphi 0, %s116
    %s117 = sphi 0, %s114
    %s118 = sphi 0, %s117
    %s134 = sphi 0, %s118
  $region4: #{encdec_forward.13} parent=0 // loop_header_branch
    %13 = sbr.rel (%p11) target = $region8
  $region5: #{encdec_forward.13} parent=0 // loop_body
    %s15 = ssub.s32 %s10, 1
    %s16 = ssub.s32 %s10, 2
    %s17 = sadd.s32 %s10, 1
    %s18 = ssub.s32 %s10, %s17
    %p19 = scmp.eq.s32.totalorder %s18, 0
    %s21 = sadd.s32 %s20, 1
    %s22 = scalar_select %p19, %s20, %s21
    %p25 = pneg %p19
    %p26 = scmp.eq.s32.totalorder %s10, 1
    %p27 = por %p25, %p26
    %p28 = scmp.ne.s32.totalorder %s20, %s23
    %p29 = scmp.eq.s32.totalorder %s10, 0
    %p30 = por %p28, %p29
    %p31 = scmp.ne.s32.totalorder %s20, %s23
    %p32 = scmp.eq.s32.totalorder %s15, 1
    %p33 = por %p31, %p32
    %p34 = scmp.ne.s32.totalorder %s23, %s24
    %p35 = scmp.eq.s32.totalorder %s15, 0
    %p36 = por %p34, %p35
    %p37 = scmp.ne.s32.totalorder %s23, %s24
    %p38 = scmp.eq.s32.totalorder %s16, 1
    %p39 = por %p37, %p38
    %p41 = scmp.ne.s32.totalorder %s24, %s40
    %p42 = scmp.eq.s32.totalorder %s16, 0
    %p43 = por %p41, %p42
    %s44 = ssub.s32 %s10, %s17
    %p45 = scmp.eq.s32.totalorder %s44, 0
    %s47 = sadd.s32 %s46, 1
    %s48 = scalar_select %p45, %s46, %s47
    %p51 = pneg %p45
    %p52 = scmp.eq.s32.totalorder %s10, 1
    %p53 = por %p51, %p52
    %p54 = scmp.ne.s32.totalorder %s46, %s49
    %p55 = scmp.eq.s32.totalorder %s10, 0
    %p56 = por %p54, %p55
    %p57 = scmp.ne.s32.totalorder %s46, %s49
    %p58 = scmp.eq.s32.totalorder %s15, 1
    %p59 = por %p57, %p58
    %p60 = scmp.ne.s32.totalorder %s49, %s50
    %p61 = scmp.eq.s32.totalorder %s15, 0
    %p62 = por %p60, %p61
    %p63 = scmp.ne.s32.totalorder %s49, %s50
    %p64 = scmp.eq.s32.totalorder %s16, 1
    %p65 = por %p63, %p64
    %p67 = scmp.ne.s32.totalorder %s50, %s66
    %p68 = scmp.eq.s32.totalorder %s16, 0
    %p69 = por %p67, %p68
    %s71 = sadd.s32 %s70, 1
    %p74 = scmp.eq.s32.totalorder %s10, 1
    %p75 = scmp.ne.s32.totalorder %s70, %s72
    %p76 = scmp.eq.s32.totalorder %s10, 0
    %p77 = por %p75, %p76
    %p78 = scmp.ne.s32.totalorder %s70, %s72
    %p79 = scmp.eq.s32.totalorder %s15, 1
    %p80 = por %p78, %p79
    %p81 = scmp.ne.s32.totalorder %s72, %s73
    %p82 = scmp.eq.s32.totalorder %s15, 0
    %p83 = por %p81, %p82
    %p84 = scmp.ne.s32.totalorder %s72, %s73
    %p85 = scmp.eq.s32.totalorder %s16, 1
    %p86 = por %p84, %p85
    %p88 = scmp.ne.s32.totalorder %s73, %s87
    %p89 = scmp.eq.s32.totalorder %s16, 0
    %p90 = por %p88, %p89
    %s92 = sadd.s32 %s91, 1
    %p95 = scmp.eq.s32.totalorder %s10, 1
    %p96 = scmp.ne.s32.totalorder %s91, %s93
    %p97 = scmp.eq.s32.totalorder %s10, 0
    %p98 = por %p96, %p97
    %p99 = scmp.ne.s32.totalorder %s91, %s93
    %p100 = scmp.eq.s32.totalorder %s15, 1
    %p101 = por %p99, %p100
    %p102 = scmp.ne.s32.totalorder %s93, %s94
    %p103 = scmp.eq.s32.totalorder %s15, 0
    %p104 = por %p102, %p103
    %p105 = scmp.ne.s32.totalorder %s93, %s94
    %p106 = scmp.eq.s32.totalorder %s16, 1
    %p107 = por %p105, %p106
    %p109 = scmp.ne.s32.totalorder %s94, %s108
    %p110 = scmp.eq.s32.totalorder %s16, 0
    %p111 = por %p109, %p110
    %s112 = ssub.s32 %s10, %s17
    %p113 = scmp.eq.s32.totalorder %s112, 0
    %s115 = sadd.s32 %s114, 1
    %s116 = scalar_select %p113, %s114, %s115
    %p119 = pneg %p113
    %p120 = scmp.eq.s32.totalorder %s10, 1
    %p121 = por %p119, %p120
    %p122 = scmp.ne.s32.totalorder %s114, %s117
    %p123 = scmp.eq.s32.totalorder %s10, 0
    %p124 = por %p122, %p123
    %p125 = scmp.ne.s32.totalorder %s114, %s117
    %p126 = scmp.eq.s32.totalorder %s15, 1
    %p127 = por %p125, %p126
    %p128 = scmp.ne.s32.totalorder %s117, %s118
    %p129 = scmp.eq.s32.totalorder %s15, 0
    %p130 = por %p128, %p129
    %p131 = scmp.ne.s32.totalorder %s117, %s118
    %p132 = scmp.eq.s32.totalorder %s16, 1
    %p133 = por %p131, %p132
    %p135 = scmp.ne.s32.totalorder %s118, %s134
    %p136 = scmp.eq.s32.totalorder %s16, 0
    %p137 = por %p135, %p136
    %p138 = scmp.le.s32.totalorder 1, %s10
    %p139 = scmp.lt.s32.totalorder %s10, 3
    %p140 = pnand %p138, %p139
    %p141 = pneg %p140
    // Predicated region
    $region9: #{encdec_forward.13} parent=5 // pred_check
      _
    $region10: #{encdec_forward.13} parent=5 // pred_check_branch
      %143 = sbr.rel (%p140) target = $region12
    $region11: #{encdec_forward.13} parent=5 // pred_region
      %s144 = ssub.s32 %s10, 1
      // Predicated region
      $region13: #{encdec_forward.13} parent=11 // pred_check
        %p145 = pneg %p83
      $region14: #{encdec_forward.13} parent=11 // pred_check_branch
        %147 = sbr.rel (%p145) target = $region16
      $region15: #{encdec_forward.13} parent=11 // pred_region
        _
      $region16: #{encdec_forward.13} parent=11 // pred_fallthru
        _
      // Predicated region
      $region17: #{encdec_forward.13} parent=11 // pred_check
        %p148 = pneg %p104
      $region18: #{encdec_forward.13} parent=11 // pred_check_branch
        %150 = sbr.rel (%p148) target = $region20
      $region19: #{encdec_forward.13} parent=11 // pred_region
        _
      $region20: #{encdec_forward.13} parent=11 // pred_fallthru
        _
    $region12: #{encdec_forward.13} parent=5 // pred_fallthru
      _
    %p151 = scmp.lt.s32.totalorder %s10, 2
    // Predicated region
    $region21: #{encdec_forward.13} parent=5 // pred_check
      %p152 = pneg %p151
    $region22: #{encdec_forward.13} parent=5 // pred_check_branch
      %154 = sbr.rel (%p152) target = $region24
    $region23: #{encdec_forward.13} parent=5 // pred_region
      // Predicated region
      $region25: #{encdec_forward.13} parent=23 // pred_check
        %p155 = pneg %p30
      $region26: #{encdec_forward.13} parent=23 // pred_check_branch
        %157 = sbr.rel (%p155) target = $region28
      $region27: #{encdec_forward.13} parent=23 // pred_region
        %s158 = smul.u32 4, %s10
        %p159 = scmp.lt.s32.totalorder %s158, 7
        %s160 = scalar_select %p159, %s158, 7
        %s161 = smul.addr %s160, 2
        %s162 = smul.addr %s161, 8
        %s163 = scalar_lea.vmem %s0, %s162
        %s164 = smul.u32 4, %s10
      $region28: #{encdec_forward.13} parent=23 // pred_fallthru
        _
      // Predicated region
      $region29: #{encdec_forward.13} parent=23 // pred_check
        %p165 = pneg %p56
      $region30: #{encdec_forward.13} parent=23 // pred_check_branch
        %167 = sbr.rel (%p165) target = $region32
      $region31: #{encdec_forward.13} parent=23 // pred_region
        %s168 = smul.u32 4, %s10
        %p169 = scmp.lt.s32.totalorder %s168, 7
        %s170 = scalar_select %p169, %s168, 7
        %s171 = smul.addr %s170, 8
        %s172 = scalar_lea.vmem %s1, %s171
        %s173 = smul.u32 4, %s10
      $region32: #{encdec_forward.13} parent=23 // pred_fallthru
        _
    $region24: #{encdec_forward.13} parent=5 // pred_fallthru
      _
    %p174 = scmp.le.s32.totalorder 1, %s10
    %p175 = scmp.lt.s32.totalorder %s10, 3
    %p176 = pnand %p174, %p175
    %p177 = pneg %p176
    // Predicated region
    $region33: #{encdec_forward.13} parent=5 // pred_check
      _
    $region34: #{encdec_forward.13} parent=5 // pred_check_branch
      %179 = sbr.rel (%p176) target = $region36
    $region35: #{encdec_forward.13} parent=5 // pred_region
      %s180 = ssub.s32 %s10, 1
      %s181 = smul.u32 4, %s15
      %p182 = scmp.lt.s32.totalorder %s181, 7
      %s183 = scalar_select %p182, %s181, 7
      %s184 = smul.addr %s183, 2
      %s185 = smul.addr %s184, 8
      %s186 = scalar_lea.vmem %s0, %s185
      %p187 = pneg %p36
      %p188 = pneg %p33
      %s189 = smul.u32 4, %s15
      %p190 = scmp.lt.s32.totalorder %s189, 7
      %s191 = scalar_select %p190, %s189, 7
      %s192 = smul.addr %s191, 8
      %s193 = scalar_lea.vmem %s1, %s192
      %p194 = pneg %p62
      %p195 = pneg %p59
      %p196 = pneg %p83
      %p197 = pneg %p80
      %p198 = pneg %p104
      %p199 = pneg %p101
      %p200 = pneg %p130
      %p201 = pneg %p127
      %s202 = smul.u32 4, %s15
      %p203 = scmp.lt.s32.totalorder %s202, 7
      %s204 = scalar_select %p203, %s202, 7
      %s205 = smul.addr %s204, 8
      %s206 = scalar_lea.vmem %s4, %s205
      %s207 = smul.u32 4, %s15
      %p208 = scmp.lt.s32.totalorder %s207, 7
      %s209 = scalar_select %p208, %s207, 7
      %s210 = smul.addr %s209, 2
      %s211 = smul.addr %s210, 8
      %s212 = scalar_lea.vmem %s0, %s211
      %s213 = smul.u32 4, %s15
      %s214 = smul.u32 4, %s15
      %p215 = scmp.lt.s32.totalorder %s214, 7
      %s216 = scalar_select %p215, %s214, 7
      %s217 = smul.addr %s216, 8
      %s218 = scalar_lea.vmem %s1, %s217
      %s219 = smul.u32 4, %s15
      %s220 = smul.u32 4, %s15
      %p221 = scmp.lt.s32.totalorder %s220, 7
      %s222 = scalar_select %p221, %s220, 7
      %s223 = smul.addr %s222, 8
      %s224 = scalar_lea.vmem %s4, %s223
      %s225 = smul.u32 4, %s15
      %v226 = vld [vmem:[%s212] sm:$0xff]
      %v227 = vld [vmem:[%s212 + $0x8] sm:$0xff]
      %v228 = vld [vmem:[%s212 + $0x10] sm:$0xff]
      %v229 = vld [vmem:[%s212 + $0x18] sm:$0xff]
      %v230 = vld [vmem:[%s212 + $0x20] sm:$0xff]
      %v231 = vld [vmem:[%s212 + $0x28] sm:$0xff]
      %v232 = vld [vmem:[%s212 + $0x30] sm:$0xff]
      %v233 = vld [vmem:[%s212 + $0x38] sm:$0xff]
      %v234 = vld [vmem:[%s2] sm:$0xff]
      %v235 = vld [vmem:[%s2 + $0x8] sm:$0xff]
      %v236 = vld [vmem:[%s2 + $0x10] sm:$0xff]
      %v237 = vld [vmem:[%s2 + $0x18] sm:$0xff]
      %v238 = vld [vmem:[%s2 + $0x20] sm:$0xff]
      %v239 = vld [vmem:[%s2 + $0x28] sm:$0xff]
      %v240 = vld [vmem:[%s2 + $0x30] sm:$0xff]
      %v241 = vld [vmem:[%s2 + $0x38] sm:$0xff]
      %v242 = vld [vmem:[%s2 + $0x40] sm:$0xff]
      %v243 = vld [vmem:[%s2 + $0x48] sm:$0xff]
      %v244 = vld [vmem:[%s2 + $0x50] sm:$0xff]
      %v245 = vld [vmem:[%s2 + $0x58] sm:$0xff]
      %v246 = vld [vmem:[%s2 + $0x60] sm:$0xff]
      %v247 = vld [vmem:[%s2 + $0x68] sm:$0xff]
      %v248 = vld [vmem:[%s2 + $0x70] sm:$0xff]
      %v249 = vld [vmem:[%s2 + $0x78] sm:$0xff]
      %v250 = vld [vmem:[%s2 + $0x80] sm:$0xff]
      %v251 = vld [vmem:[%s2 + $0x88] sm:$0xff]
      %v252 = vld [vmem:[%s2 + $0x90] sm:$0xff]
      %v253 = vld [vmem:[%s2 + $0x98] sm:$0xff]
      %v254 = vld [vmem:[%s2 + $0xa0] sm:$0xff]
      %v255 = vld [vmem:[%s2 + $0xa8] sm:$0xff]
      %v256 = vld [vmem:[%s2 + $0xb0] sm:$0xff]
      %v257 = vld [vmem:[%s2 + $0xb8] sm:$0xff]
      %v258 = vld [vmem:[%s2 + $0xc0] sm:$0xff]
      %v259 = vld [vmem:[%s2 + $0xc8] sm:$0xff]
      %v260 = vld [vmem:[%s2 + $0xd0] sm:$0xff]
      %v261 = vld [vmem:[%s2 + $0xd8] sm:$0xff]
      %v262 = vld [vmem:[%s2 + $0xe0] sm:$0xff]
      %v263 = vld [vmem:[%s2 + $0xe8] sm:$0xff]
      %v264 = vld [vmem:[%s2 + $0xf0] sm:$0xff]
      %v265 = vld [vmem:[%s2 + $0xf8] sm:$0xff]
      %v266 = vld [vmem:[%s3] sm:$0x1]
      %v268 = vlaneseq
      %v269 = vshrl.u32 %v268, 7
      %v270 = vsub.s32 0, %v269
      %v271 = vrot.slane %v266, %v270
      %273 = vmatprep.subr.mxu0 0.0
      %274 = vmatpush1.msra.mxu0 %v234
      %275 = vmatprep.subr.mxu0 0.0
      %276 = vmatpush1.msra.mxu0 %v235
      %277 = vmatprep.subr.mxu0 0.0
      %278 = vmatpush1.msra.mxu0 %v236
      %279 = vmatprep.subr.mxu0 0.0
      %280 = vmatpush1.msra.mxu0 %v237
      %281 = vmatprep.subr.mxu0 0.0
      %282 = vmatpush1.msra.mxu0 %v238
      %283 = vmatprep.subr.mxu0 0.0
      %284 = vmatpush1.msra.mxu0 %v239
      %285 = vmatprep.subr.mxu0 0.0
      %286 = vmatpush1.msra.mxu0 %v240
      %287 = vmatprep.subr.mxu0 0.0
      %288 = vmatpush1.msra.mxu0 %v241
      %289 = vmatprep.subr.mxu0 0.0
      %290 = vmatpush1.msra.mxu0 %v242
      %291 = vmatprep.subr.mxu0 0.0
      %292 = vmatpush1.msra.mxu0 %v243
      %293 = vmatprep.subr.mxu0 0.0
      %294 = vmatpush1.msra.mxu0 %v244
      %295 = vmatprep.subr.mxu0 0.0
      %296 = vmatpush1.msra.mxu0 %v245
      %297 = vmatprep.subr.mxu0 0.0
      %298 = vmatpush1.msra.mxu0 %v246
      %299 = vmatprep.subr.mxu0 0.0
      %300 = vmatpush1.msra.mxu0 %v247
      %301 = vmatprep.subr.mxu0 0.0
      %302 = vmatpush1.msra.mxu0 %v248
      %303 = vmatprep.subr.mxu0 0.0
      %304 = vmatpush1.msra.mxu0 %v249
      %305 = vmatprep.subr.mxu0 0.0
      %306 = vmatpush1.msra.mxu0 %v250
      %307 = vmatprep.subr.mxu0 0.0
      %308 = vmatpush1.msra.mxu0 %v251
      %309 = vmatprep.subr.mxu0 0.0
      %310 = vmatpush1.msra.mxu0 %v252
      %311 = vmatprep.subr.mxu0 0.0
      %312 = vmatpush1.msra.mxu0 %v253
      %313 = vmatprep.subr.mxu0 0.0
      %314 = vmatpush1.msra.mxu0 %v254
      %315 = vmatprep.subr.mxu0 0.0
      %316 = vmatpush1.msra.mxu0 %v255
      %317 = vmatprep.subr.mxu0 0.0
      %318 = vmatpush1.msra.mxu0 %v256
      %319 = vmatprep.subr.mxu0 0.0
      %320 = vmatpush1.msra.mxu0 %v257
      %321 = vmatprep.subr.mxu0 0.0
      %322 = vmatpush1.msra.mxu0 %v258
      %323 = vmatprep.subr.mxu0 0.0
      %324 = vmatpush1.msra.mxu0 %v259
      %325 = vmatprep.subr.mxu0 0.0
      %326 = vmatpush1.msra.mxu0 %v260
      %327 = vmatprep.subr.mxu0 0.0
      %328 = vmatpush1.msra.mxu0 %v261
      %329 = vmatprep.subr.mxu0 0.0
      %330 = vmatpush1.msra.mxu0 %v262
      %331 = vmatprep.subr.mxu0 0.0
      %332 = vmatpush1.msra.mxu0 %v263
      %333 = vmatprep.subr.mxu0 0.0
      %334 = vmatpush1.msra.mxu0 %v264
      %335 = vmatprep.subr.mxu0 0.0
      %336 = vmatpush1.msra.mxu0 %v265
      %337 = vmatprep.mubr.f32.mxu0 %v227
      %338 = vmatmul.mubr.f32.gmra.mrb[0].mxu0 %v226
      %v339 = vpop.f32.mrb[0].mxu0
      %v340 = vadd.f32 %v271, %v339
      %v341 = vpop.f32.mrb[0].mxu0
      %342 = vmatprep.mubr.f32.mxu0 %v229
      %343 = vmatmul.mubr.f32.gmra.mrb[0].mxu0 %v228
      %v344 = vpop.f32.mrb[0].mxu0
      %v345 = vadd.f32 %v271, %v344
      %v346 = vpop.f32.mrb[0].mxu0
      %347 = vmatprep.mubr.f32.mxu0 %v231
      %348 = vmatmul.mubr.f32.gmra.mrb[0].mxu0 %v230
      %v349 = vpop.f32.mrb[0].mxu0
      %v350 = vadd.f32 %v271, %v349
      %v351 = vpop.f32.mrb[0].mxu0
      %352 = vmatprep.mubr.f32.mxu0 %v233
      %353 = vmatmul.mubr.f32.gmra.mrb[0].mxu0 %v232
      %v354 = vpop.f32.mrb[0].mxu0
      %v355 = vadd.f32 %v271, %v354
      %v356 = vpop.f32.mrb[0].mxu0
      %357 = vdwg.mxu0
      %v358 = vlaneseq
      %v359 = vand.u32 %v358, 127
      %vm360 = vcmp.eq.s32.totalorder %v359, 24
      %v361 = vsel %vm360, %v340, 0.0
      %v362 = vsel %vm360, %v345, 0.0
      %v363 = vsel %vm360, %v350, 0.0
      %v364 = vsel %vm360, %v355, 0.0
      %365 = vadd.xlane.f32.xlu0 %v361
      %v366 = vpop.xlane.xlu0 %365
      %367 = vadd.xlane.f32.xlu0 %v362
      %v368 = vpop.xlane.xlu0 %367
      %369 = vadd.xlane.f32.xlu0 %v363
      %v370 = vpop.xlane.xlu0 %369
      %371 = vadd.xlane.f32.xlu0 %v364
      %v372 = vpop.xlane.xlu0 %371
      %v373 = vxor.u32 %v366, 2147483648
      %v374 = vxor.u32 %v368, 2147483648
      %v375 = vxor.u32 %v370, 2147483648
      %v376 = vxor.u32 %v372, 2147483648
      %v377 = vmul.f32 %v373, 1.442695
      %v378 = vpow.pop %v377
      %v379 = vmul.f32 %v374, 1.442695
      %v380 = vpow.pop %v379
      %v381 = vmul.f32 %v375, 1.442695
      %v382 = vpow.pop %v381
      %v383 = vmul.f32 %v376, 1.442695
      %v384 = vpow.pop %v383
      %v385 = vadd.f32 %v378, 1.0
      %v386 = vadd.f32 %v380, 1.0
      %v387 = vadd.f32 %v382, 1.0
      %v388 = vadd.f32 %v384, 1.0
      %v389 = vrcp.pop %v385
      %v390 = vmul.f32 1.0, %v389
      %v391 = vrcp.pop %v386
      %v392 = vmul.f32 1.0, %v391
      %v393 = vrcp.pop %v387
      %v394 = vmul.f32 1.0, %v393
      %v395 = vrcp.pop %v388
      %v396 = vmul.f32 1.0, %v395
      %vm397 = vcmp.lt.s32.totalorder %v359, 24
      %v398 = vsel %vm397, %v340, -1e+30
      %v399 = vsel %vm397, %v345, -1e+30
      %v400 = vsel %vm397, %v350, -1e+30
      %v401 = vsel %vm397, %v355, -1e+30
      %402 = vmax.xlane.f32.xlu0 %v398
      %v403 = vpop.xlane.xlu0 %402
      %404 = vmax.xlane.f32.xlu0 %v399
      %v405 = vpop.xlane.xlu0 %404
      %406 = vmax.xlane.f32.xlu0 %v400
      %v407 = vpop.xlane.xlu0 %406
      %408 = vmax.xlane.f32.xlu0 %v401
      %v409 = vpop.xlane.xlu0 %408
      %v410 = vsub.f32 %v398, %v403
      %v411 = vsub.f32 %v399, %v405
      %v412 = vsub.f32 %v400, %v407
      %v413 = vsub.f32 %v401, %v409
      %v414 = vmul.f32 %v410, 1.442695
      %v415 = vpow.pop %v414
      %v416 = vmul.f32 %v411, 1.442695
      %v417 = vpow.pop %v416
      %v418 = vmul.f32 %v412, 1.442695
      %v419 = vpow.pop %v418
      %v420 = vmul.f32 %v413, 1.442695
      %v421 = vpow.pop %v420
      %v422 = vsel %vm397, %v415, 0.0
      %v423 = vsel %vm397, %v417, 0.0
      %v424 = vsel %vm397, %v419, 0.0
      %v425 = vsel %vm397, %v421, 0.0
      %426 = vadd.xlane.f32.xlu0 %v422
      %v427 = vpop.xlane.xlu0 %426
      %428 = vadd.xlane.f32.xlu0 %v423
      %v429 = vpop.xlane.xlu0 %428
      %430 = vadd.xlane.f32.xlu0 %v424
      %v431 = vpop.xlane.xlu0 %430
      %432 = vadd.xlane.f32.xlu0 %v425
      %v433 = vpop.xlane.xlu0 %432
      %v434 = vrcp.pop %v427
      %v435 = vmul.f32 %v422, %v434
      %v436 = vrcp.pop %v429
      %v437 = vmul.f32 %v423, %v436
      %v438 = vrcp.pop %v431
      %v439 = vmul.f32 %v424, %v438
      %v440 = vrcp.pop %v433
      %v441 = vmul.f32 %v425, %v440
      %v442 = vmul.f32 %v390, %v435
      %v443 = vmul.f32 %v392, %v437
      %v444 = vmul.f32 %v394, %v439
      %v445 = vmul.f32 %v396, %v441
      %v446 = vsub.f32 1.0, %v390
      %v447 = vsub.f32 1.0, %v392
      %v448 = vsub.f32 1.0, %v394
      %v449 = vsub.f32 1.0, %v396
      %v450 = vld [vmem:[%s218] sm:$0xff]
      %v451 = vld [vmem:[%s218 + $0x8] sm:$0xff]
      %v452 = vld [vmem:[%s218 + $0x10] sm:$0xff]
      %v453 = vld [vmem:[%s218 + $0x18] sm:$0xff]
      %v454 = vmul.f32 %v446, %v450
      %v455 = vmul.f32 %v447, %v451
      %v456 = vmul.f32 %v448, %v452
      %v457 = vmul.f32 %v449, %v453
      %v458 = vadd.f32 %v442, %v454
      %v459 = vadd.f32 %v443, %v455
      %v460 = vadd.f32 %v444, %v456
      %v461 = vadd.f32 %v445, %v457
      %462 = vst [vmem:[%s224] sm:$0xff] %v458
      %463 = vst [vmem:[%s224 + $0x8] sm:$0xff] %v459
      %464 = vst [vmem:[%s224 + $0x10] sm:$0xff] %v460
      %465 = vst [vmem:[%s224 + $0x18] sm:$0xff] %v461
      %s466 = smul.u32 4, %s15
      %p467 = scmp.lt.s32.totalorder %s466, 7
      %s468 = scalar_select %p467, %s466, 7
      %s469 = smul.addr %s468, 8
      %s470 = scalar_lea.vmem %s4, %s469
      // Predicated region
      $region37: #{encdec_forward.13} parent=35 // pred_check
        %p471 = pneg %p127
      $region38: #{encdec_forward.13} parent=35 // pred_check_branch
        %473 = sbr.rel (%p471) target = $region40
      $region39: #{encdec_forward.13} parent=35 // pred_region
        %s474 = smul.u32 4, %s15
      $region40: #{encdec_forward.13} parent=35 // pred_fallthru
        _
    $region36: #{encdec_forward.13} parent=5 // pred_fallthru
      _
    %p475 = scmp.le.s32.totalorder 2, %s10
    // Predicated region
    $region41: #{encdec_forward.13} parent=5 // pred_check
      %p476 = pneg %p475
    $region42: #{encdec_forward.13} parent=5 // pred_check_branch
      %478 = sbr.rel (%p476) target = $region44
    $region43: #{encdec_forward.13} parent=5 // pred_region
      %s479 = ssub.s32 %s10, 2
      // Predicated region
      $region45: #{encdec_forward.13} parent=43 // pred_check
        %p480 = pneg %p133
      $region46: #{encdec_forward.13} parent=43 // pred_check_branch
        %482 = sbr.rel (%p480) target = $region48
      $region47: #{encdec_forward.13} parent=43 // pred_region
        %s483 = smul.u32 4, %s16
        %p484 = scmp.lt.s32.totalorder %s483, 7
        %s485 = scalar_select %p484, %s483, 7
        %s486 = smul.addr %s485, 8
        %s487 = scalar_lea.vmem %s4, %s486
      $region48: #{encdec_forward.13} parent=43 // pred_fallthru
        _
    $region44: #{encdec_forward.13} parent=5 // pred_fallthru
      _
  $region6: #{encdec_forward.13} parent=0 // loop_footer
    %s14 = sadd.s32 1, %s10
  $region7: #{encdec_forward.13} parent=0 // loop_footer_branch
    %9 = sbr.rel target = $region3
  $region8: #{encdec_forward.13} parent=0 // loop_exit
    _

// kernel: encdec_forward.12
$region0: #{encdec_forward.12}
  #allocation0 [shape = 'u32[]', space=smem, size = 0x4, offset = 0x4, fixed_abs, tag = 'smem constant byte address 0x4 - core index']
  #allocation1 [shape = 'u32[144,128]{1,0:T(1,128)}', space=vmem, size = 0x12000, scoped, tag = 'internal scratch']
  %s0 = inlined_call_operand.vmem [shape: f32[8,8,8], index: 0, kind: input, shape index: {}]
  %s1 = inlined_call_operand.vmem [shape: s32[8,8,1], index: 1, kind: input, shape index: {}]
  %s2 = inlined_call_operand.vmem [shape: f32[8,8,128], index: 2, kind: output, shape index: {}]
  %s3 = sld [smem:[#allocation0]]
  $region41: #{encdec_forward.12} parent=0
    _
  %s5 = ssub.s32 1, %s3
  %s6 = scalar_select 0, %s5, %s3
  loop: start=0, step=1, limit=4
  $region2: #{encdec_forward.12} parent=0 // loop_pre_header
    _
  $region3: #{encdec_forward.12} parent=0 // loop_header
    %s8 = sphi 0, %s12
    %p9 = scmp.ge.s32.totalorder %s8, 4
    %s15 = sphi 0, %s27
    %s16 = sphi 0, %s23
    %s17 = sphi 0, %s15
    %s18 = sphi 0, %s16
    %s19 = sphi 0, %s17
    %s20 = sphi 0, %s18
    %s30 = sphi 0, %s32
    %s33 = sphi 0, %s30
    %s34 = sphi 0, %s33
    %s50 = sphi 0, %s34
    %s56 = sphi 0, %s58
    %s59 = sphi 0, %s56
    %s60 = sphi 0, %s59
    %s76 = sphi 0, %s60
    %s84 = sphi 0, %s86
    %s87 = sphi 0, %s84
    %s88 = sphi 0, %s87
    %s104 = sphi 0, %s88
  $region4: #{encdec_forward.12} parent=0 // loop_header_branch
    %11 = sbr.rel (%p9) target = $region8
  $region5: #{encdec_forward.12} parent=0 // loop_body
    %s13 = ssub.s32 %s8, 1
    %s14 = ssub.s32 %s8, 2
    %s21 = sadd.s32 1, %s16
    %p22 = scmp.ge.s32.totalorder %s21, 1
    %s23 = scalar_select %p22, 0, %s21
    %s24 = sadd.s32 1, %s15
    %s25 = scalar_select %p22, %s24, %s15
    %p26 = scmp.ge.s32.totalorder %s25, 2
    %s27 = scalar_select %p26, 0, %s25
    %s28 = ssub.s32 %s15, %s27
    %p29 = scmp.eq.s32.totalorder %s28, 0
    %s31 = sadd.s32 %s30, 1
    %s32 = scalar_select %p29, %s30, %s31
    %p35 = pneg %p29
    %p36 = scmp.eq.s32.totalorder %s8, 1
    %p37 = por %p35, %p36
    %p38 = scmp.ne.s32.totalorder %s30, %s33
    %p39 = scmp.eq.s32.totalorder %s8, 0
    %p40 = por %p38, %p39
    %p41 = scmp.ne.s32.totalorder %s30, %s33
    %p42 = scmp.eq.s32.totalorder %s13, 1
    %p43 = por %p41, %p42
    %p44 = scmp.ne.s32.totalorder %s33, %s34
    %p45 = scmp.eq.s32.totalorder %s13, 0
    %p46 = por %p44, %p45
    %p47 = scmp.ne.s32.totalorder %s33, %s34
    %p48 = scmp.eq.s32.totalorder %s14, 1
    %p49 = por %p47, %p48
    %p51 = scmp.ne.s32.totalorder %s34, %s50
    %p52 = scmp.eq.s32.totalorder %s14, 0
    %p53 = por %p51, %p52
    %s54 = ssub.s32 %s15, %s27
    %p55 = scmp.eq.s32.totalorder %s54, 0
    %s57 = sadd.s32 %s56, 1
    %s58 = scalar_select %p55, %s56, %s57
    %p61 = pneg %p55
    %p62 = scmp.eq.s32.totalorder %s8, 1
    %p63 = por %p61, %p62
    %p64 = scmp.ne.s32.totalorder %s56, %s59
    %p65 = scmp.eq.s32.totalorder %s8, 0
    %p66 = por %p64, %p65
    %p67 = scmp.ne.s32.totalorder %s56, %s59
    %p68 = scmp.eq.s32.totalorder %s13, 1
    %p69 = por %p67, %p68
    %p70 = scmp.ne.s32.totalorder %s59, %s60
    %p71 = scmp.eq.s32.totalorder %s13, 0
    %p72 = por %p70, %p71
    %p73 = scmp.ne.s32.totalorder %s59, %s60
    %p74 = scmp.eq.s32.totalorder %s14, 1
    %p75 = por %p73, %p74
    %p77 = scmp.ne.s32.totalorder %s60, %s76
    %p78 = scmp.eq.s32.totalorder %s14, 0
    %p79 = por %p77, %p78
    %s80 = ssub.s32 %s15, %s27
    %s81 = ssub.s32 %s16, %s23
    %s82 = sor.u32 %s80, %s81
    %p83 = scmp.eq.s32.totalorder %s82, 0
    %s85 = sadd.s32 %s84, 1
    %s86 = scalar_select %p83, %s84, %s85
    %p89 = pneg %p83
    %p90 = scmp.eq.s32.totalorder %s8, 1
    %p91 = por %p89, %p90
    %p92 = scmp.ne.s32.totalorder %s84, %s87
    %p93 = scmp.eq.s32.totalorder %s8, 0
    %p94 = por %p92, %p93
    %p95 = scmp.ne.s32.totalorder %s84, %s87
    %p96 = scmp.eq.s32.totalorder %s13, 1
    %p97 = por %p95, %p96
    %p98 = scmp.ne.s32.totalorder %s87, %s88
    %p99 = scmp.eq.s32.totalorder %s13, 0
    %p100 = por %p98, %p99
    %p101 = scmp.ne.s32.totalorder %s87, %s88
    %p102 = scmp.eq.s32.totalorder %s14, 1
    %p103 = por %p101, %p102
    %p105 = scmp.ne.s32.totalorder %s88, %s104
    %p106 = scmp.eq.s32.totalorder %s14, 0
    %p107 = por %p105, %p106
    %p108 = scmp.le.s32.totalorder 1, %s8
    %p109 = scmp.lt.s32.totalorder %s8, 3
    %p110 = pnand %p108, %p109
    %p111 = pneg %p110
    // Predicated region
    $region9: #{encdec_forward.12} parent=5 // pred_check
      _
    $region10: #{encdec_forward.12} parent=5 // pred_check_branch
      %113 = sbr.rel (%p110) target = $region12
    $region11: #{encdec_forward.12} parent=5 // pred_region
      %s114 = ssub.s32 %s8, 1
    $region12: #{encdec_forward.12} parent=5 // pred_fallthru
      _
    %p115 = scmp.lt.s32.totalorder %s8, 2
    // Predicated region
    $region13: #{encdec_forward.12} parent=5 // pred_check
      %p116 = pneg %p115
    $region14: #{encdec_forward.12} parent=5 // pred_check_branch
      %118 = sbr.rel (%p116) target = $region16
    $region15: #{encdec_forward.12} parent=5 // pred_region
      // Predicated region
      $region17: #{encdec_forward.12} parent=15 // pred_check
        %p119 = pneg %p40
      $region18: #{encdec_forward.12} parent=15 // pred_check_branch
        %121 = sbr.rel (%p119) target = $region20
      $region19: #{encdec_forward.12} parent=15 // pred_region
        %s122 = smul.u32 4, %s15
        %p123 = scmp.lt.s32.totalorder %s122, 7
        %s124 = scalar_select %p123, %s122, 7
        %s125 = smul.addr %s124, 8
        %s126 = scalar_lea.vmem %s0, %s125
        %s127 = smul.u32 4, %s15
      $region20: #{encdec_forward.12} parent=15 // pred_fallthru
        _
      // Predicated region
      $region21: #{encdec_forward.12} parent=15 // pred_check
        %p128 = pneg %p66
      $region22: #{encdec_forward.12} parent=15 // pred_check_branch
        %130 = sbr.rel (%p128) target = $region24
      $region23: #{encdec_forward.12} parent=15 // pred_region
        %s131 = smul.u32 4, %s15
        %p132 = scmp.lt.s32.totalorder %s131, 7
        %s133 = scalar_select %p132, %s131, 7
        %s134 = smul.addr %s133, 8
        %s135 = scalar_lea.vmem %s1, %s134
        %s136 = smul.u32 4, %s15
      $region24: #{encdec_forward.12} parent=15 // pred_fallthru
        _
    $region16: #{encdec_forward.12} parent=5 // pred_fallthru
      _
    %p137 = scmp.le.s32.totalorder 1, %s8
    %p138 = scmp.lt.s32.totalorder %s8, 3
    %p139 = pnand %p137, %p138
    %p140 = pneg %p139
    // Predicated region
    $region25: #{encdec_forward.12} parent=5 // pred_check
      _
    $region26: #{encdec_forward.12} parent=5 // pred_check_branch
      %142 = sbr.rel (%p139) target = $region28
    $region27: #{encdec_forward.12} parent=5 // pred_region
      %s143 = ssub.s32 %s8, 1
      %s144 = smul.u32 4, %s17
      %p145 = scmp.lt.s32.totalorder %s144, 7
      %s146 = scalar_select %p145, %s144, 7
      %s147 = smul.addr %s146, 8
      %s148 = scalar_lea.vmem %s0, %s147
      %p149 = pneg %p46
      %p150 = pneg %p43
      %s151 = smul.u32 4, %s17
      %p152 = scmp.lt.s32.totalorder %s151, 7
      %s153 = scalar_select %p152, %s151, 7
      %s154 = smul.addr %s153, 8
      %s155 = scalar_lea.vmem %s1, %s154
      %p156 = pneg %p72
      %p157 = pneg %p69
      %p158 = pneg %p100
      %p159 = pneg %p97
      %s160 = smul.u32 4, %s17
      %p161 = scmp.lt.s32.totalorder %s160, 7
      %s162 = scalar_select %p161, %s160, 7
      %p163 = scmp.lt.s32.totalorder %s18, 0
      %s164 = scalar_select %p163, %s18, 0
      %s165 = sadd.s32 %s164, %s162
      %s166 = smul.addr %s165, 8
      %s167 = scalar_lea.vmem %s2, %s166
      %s168 = smul.u32 4, %s17
      %p169 = scmp.lt.s32.totalorder %s168, 7
      %s170 = scalar_select %p169, %s168, 7
      %s171 = smul.addr %s170, 8
      %s172 = scalar_lea.vmem %s0, %s171
      %s173 = smul.u32 4, %s17
      %s174 = smul.u32 4, %s17
      %p175 = scmp.lt.s32.totalorder %s174, 7
      %s176 = scalar_select %p175, %s174, 7
      %s177 = smul.addr %s176, 8
      %s178 = scalar_lea.vmem %s1, %s177
      %s179 = smul.u32 4, %s17
      %s180 = smul.u32 4, %s17
      %p181 = scmp.lt.s32.totalorder %s180, 7
      %s182 = scalar_select %p181, %s180, 7
      %p183 = scmp.lt.s32.totalorder %s18, 0
      %s184 = scalar_select %p183, %s18, 0
      %s185 = sadd.s32 %s184, %s182
      %s186 = smul.addr %s185, 8
      %s187 = scalar_lea.vmem %s2, %s186
      %s188 = smul.u32 4, %s17
      %s190 = smul.u32 %s18, 128
      %v191 = vld [vmem:[%s172] sm:$0xff]
      %v192 = vld [vmem:[%s172 + $0x8] sm:$0xff]
      %v193 = vld [vmem:[%s172 + $0x10] sm:$0xff]
      %v194 = vld [vmem:[%s172 + $0x18] sm:$0xff]
      %v195 = vpack.c.bf16 %v191, %v191
      %v196 = vpack.c.bf16 %v192, %v192
      %v197 = vpack.c.bf16 %v193, %v193
      %v198 = vpack.c.bf16 %v194, %v194
      %v199 = vld [vmem:[%s178] sm:$0xff]
      %v200 = vld [vmem:[%s178 + $0x8] sm:$0xff]
      %v201 = vld [vmem:[%s178 + $0x10] sm:$0xff]
      %v202 = vld [vmem:[%s178 + $0x18] sm:$0xff]
      %v203 = vlaneseq
      %v204 = vand.u32 %v203, 127
      %v205 = vstv %s190
      %v206 = vadd.s32 %v204, %v205
      %207 = vset.pattern.permute.xlu0 0
      %208 = vperm.xlu0 %207, %v199
      %v209 = vpop.permute.xlu0 %208
      %210 = vset.pattern.permute.xlu0 0
      %211 = vperm.xlu0 %210, %v200
      %v212 = vpop.permute.xlu0 %211
      %213 = vset.pattern.permute.xlu0 0
      %214 = vperm.xlu0 %213, %v201
      %v215 = vpop.permute.xlu0 %214
      %216 = vset.pattern.permute.xlu0 0
      %217 = vperm.xlu0 %216, %v202
      %v218 = vpop.permute.xlu0 %217
      %vm219 = vcmp.eq.s32.totalorder %v209, %v206
      %vm220 = vcmp.eq.s32.totalorder %v212, %v206
      %vm221 = vcmp.eq.s32.totalorder %v215, %v206
      %vm222 = vcmp.eq.s32.totalorder %v218, %v206
      %v223 = vsel %vm219, 1, 0
      %v224 = vsel %vm220, 1, 0
      %v225 = vsel %vm221, 1, 0
      %v226 = vsel %vm222, 1, 0
      %v227 = vcvt.s32.f32 %v223
      %v228 = vcvt.s32.f32 %v224
      %v229 = vcvt.s32.f32 %v225
      %v230 = vcvt.s32.f32 %v226
      %v231 = vpack.c.bf16 %v227, %v227
      %v232 = vpack.c.bf16 %v228, %v228
      %v233 = vpack.c.bf16 %v229, %v229
      %v234 = vpack.c.bf16 %v230, %v230
      %vm235 = vcmask 64512
      %v237 = vsel %vm235, %v195, 0
      %vm239 = vcmask 1043456
      %v241 = vsel %vm239, %v231, 0
      %243 = vmatprep.subr.bf16.mxu0 0
      %244 = vmatpush1.bf16.msra.mxu0 %v241
      %245 = vmatprep.subr.bf16.mxu0 0
      %246 = vmatpush1.bf16.msra.mxu0 0
      %247 = vmatprep.subr.bf16.mxu0 0
      %248 = vmatpush1.bf16.msra.mxu0 0
      %249 = vmatprep.subr.bf16.mxu0 0
      %250 = vmatpush1.bf16.msra.mxu0 0
      %251 = vmatprep.subr.bf16.mxu0 0
      %252 = vmatpush1.bf16.msra.mxu0 0
      %253 = vmatprep.subr.bf16.mxu0 0
      %254 = vmatpush1.bf16.msra.mxu0 0
      %255 = vmatprep.subr.bf16.mxu0 0
      %256 = vmatpush1.bf16.msra.mxu0 0
      %257 = vmatprep.subr.bf16.mxu0 0
      %258 = vmatpush1.bf16.msra.mxu0 0
      %259 = vmatprep.subr.bf16.mxu0 0
      %260 = vmatpush1.bf16.msra.mxu0 0
      %261 = vmatprep.subr.bf16.mxu0 0
      %262 = vmatpush1.bf16.msra.mxu0 0
      %263 = vmatprep.subr.bf16.mxu0 0
      %264 = vmatpush1.bf16.msra.mxu0 0
      %265 = vmatprep.subr.bf16.mxu0 0
      %266 = vmatpush1.bf16.msra.mxu0 0
      %267 = vmatprep.subr.bf16.mxu0 0
      %268 = vmatpush1.bf16.msra.mxu0 0
      %269 = vmatprep.subr.bf16.mxu0 0
      %270 = vmatpush1.bf16.msra.mxu0 0
      %271 = vmatprep.subr.bf16.mxu0 0
      %272 = vmatpush1.bf16.msra.mxu0 0
      %273 = vmatprep.subr.bf16.mxu0 0
      %274 = vmatpush1.bf16.msra.mxu0 0
      %275 = vmatprep.mubr.bf16.mxu0 0
      %276 = vmatmul.mubr.bf16.gmra.mrb[0].mxu0 %v237
      %v277 = vpop.f32.mrb[0].mxu0
      %v278 = vadd.f32 0.0, %v277
      %v279 = vpop.f32.mrb[0].mxu0
      %v280 = vpop.f32.mrb[0].mxu0
      %v281 = vpop.f32.mrb[0].mxu0
      %282 = vdwg.mxu0
      %v284 = vsel %vm235, %v196, 0
      %v287 = vsel %vm239, %v232, 0
      %289 = vmatprep.subr.bf16.mxu0 0
      %290 = vmatpush1.bf16.msra.mxu0 %v287
      %291 = vmatprep.subr.bf16.mxu0 0
      %292 = vmatpush1.bf16.msra.mxu0 0
      %293 = vmatprep.subr.bf16.mxu0 0
      %294 = vmatpush1.bf16.msra.mxu0 0
      %295 = vmatprep.subr.bf16.mxu0 0
      %296 = vmatpush1.bf16.msra.mxu0 0
      %297 = vmatprep.subr.bf16.mxu0 0
      %298 = vmatpush1.bf16.msra.mxu0 0
      %299 = vmatprep.subr.bf16.mxu0 0
      %300 = vmatpush1.bf16.msra.mxu0 0
      %301 = vmatprep.subr.bf16.mxu0 0
      %302 = vmatpush1.bf16.msra.mxu0 0
      %303 = vmatprep.subr.bf16.mxu0 0
      %304 = vmatpush1.bf16.msra.mxu0 0
      %305 = vmatprep.subr.bf16.mxu0 0
      %306 = vmatpush1.bf16.msra.mxu0 0
      %307 = vmatprep.subr.bf16.mxu0 0
      %308 = vmatpush1.bf16.msra.mxu0 0
      %309 = vmatprep.subr.bf16.mxu0 0
      %310 = vmatpush1.bf16.msra.mxu0 0
      %311 = vmatprep.subr.bf16.mxu0 0
      %312 = vmatpush1.bf16.msra.mxu0 0
      %313 = vmatprep.subr.bf16.mxu0 0
      %314 = vmatpush1.bf16.msra.mxu0 0
      %315 = vmatprep.subr.bf16.mxu0 0
      %316 = vmatpush1.bf16.msra.mxu0 0
      %317 = vmatprep.subr.bf16.mxu0 0
      %318 = vmatpush1.bf16.msra.mxu0 0
      %319 = vmatprep.subr.bf16.mxu0 0
      %320 = vmatpush1.bf16.msra.mxu0 0
      %321 = vmatprep.mubr.bf16.mxu0 0
      %322 = vmatmul.mubr.bf16.gmra.mrb[0].mxu0 %v284
      %v323 = vpop.f32.mrb[0].mxu0
      %v324 = vadd.f32 0.0, %v323
      %v325 = vpop.f32.mrb[0].mxu0
      %v326 = vpop.f32.mrb[0].mxu0
      %v327 = vpop.f32.mrb[0].mxu0
      %328 = vdwg.mxu0
      %v330 = vsel %vm235, %v197, 0
      %v333 = vsel %vm239, %v233, 0
      %335 = vmatprep.subr.bf16.mxu0 0
      %336 = vmatpush1.bf16.msra.mxu0 %v333
      %337 = vmatprep.subr.bf16.mxu0 0
      %338 = vmatpush1.bf16.msra.mxu0 0
      %339 = vmatprep.subr.bf16.mxu0 0
      %340 = vmatpush1.bf16.msra.mxu0 0
      %341 = vmatprep.subr.bf16.mxu0 0
      %342 = vmatpush1.bf16.msra.mxu0 0
      %343 = vmatprep.subr.bf16.mxu0 0
      %344 = vmatpush1.bf16.msra.mxu0 0
      %345 = vmatprep.subr.bf16.mxu0 0
      %346 = vmatpush1.bf16.msra.mxu0 0
      %347 = vmatprep.subr.bf16.mxu0 0
      %348 = vmatpush1.bf16.msra.mxu0 0
      %349 = vmatprep.subr.bf16.mxu0 0
      %350 = vmatpush1.bf16.msra.mxu0 0
      %351 = vmatprep.subr.bf16.mxu0 0
      %352 = vmatpush1.bf16.msra.mxu0 0
      %353 = vmatprep.subr.bf16.mxu0 0
      %354 = vmatpush1.bf16.msra.mxu0 0
      %355 = vmatprep.subr.bf16.mxu0 0
      %356 = vmatpush1.bf16.msra.mxu0 0
      %357 = vmatprep.subr.bf16.mxu0 0
      %358 = vmatpush1.bf16.msra.mxu0 0
      %359 = vmatprep.subr.bf16.mxu0 0
      %360 = vmatpush1.bf16.msra.mxu0 0
      %361 = vmatprep.subr.bf16.mxu0 0
      %362 = vmatpush1.bf16.msra.mxu0 0
      %363 = vmatprep.subr.bf16.mxu0 0
      %364 = vmatpush1.bf16.msra.mxu0 0
      %365 = vmatprep.subr.bf16.mxu0 0
      %366 = vmatpush1.bf16.msra.mxu0 0
      %367 = vmatprep.mubr.bf16.mxu0 0
      %368 = vmatmul.mubr.bf16.gmra.mrb[0].mxu0 %v330
      %v369 = vpop.f32.mrb[0].mxu0
      %v370 = vadd.f32 0.0, %v369
      %v371 = vpop.f32.mrb[0].mxu0
      %v372 = vpop.f32.mrb[0].mxu0
      %v373 = vpop.f32.mrb[0].mxu0
      %374 = vdwg.mxu0
      %v376 = vsel %vm235, %v198, 0
      %v379 = vsel %vm239, %v234, 0
      %381 = vmatprep.subr.bf16.mxu0 0
      %382 = vmatpush1.bf16.msra.mxu0 %v379
      %383 = vmatprep.subr.bf16.mxu0 0
      %384 = vmatpush1.bf16.msra.mxu0 0
      %385 = vmatprep.subr.bf16.mxu0 0
      %386 = vmatpush1.bf16.msra.mxu0 0
      %387 = vmatprep.subr.bf16.mxu0 0
      %388 = vmatpush1.bf16.msra.mxu0 0
      %389 = vmatprep.subr.bf16.mxu0 0
      %390 = vmatpush1.bf16.msra.mxu0 0
      %391 = vmatprep.subr.bf16.mxu0 0
      %392 = vmatpush1.bf16.msra.mxu0 0
      %393 = vmatprep.subr.bf16.mxu0 0
      %394 = vmatpush1.bf16.msra.mxu0 0
      %395 = vmatprep.subr.bf16.mxu0 0
      %396 = vmatpush1.bf16.msra.mxu0 0
      %397 = vmatprep.subr.bf16.mxu0 0
      %398 = vmatpush1.bf16.msra.mxu0 0
      %399 = vmatprep.subr.bf16.mxu0 0
      %400 = vmatpush1.bf16.msra.mxu0 0
      %401 = vmatprep.subr.bf16.mxu0 0
      %402 = vmatpush1.bf16.msra.mxu0 0
      %403 = vmatprep.subr.bf16.mxu0 0
      %404 = vmatpush1.bf16.msra.mxu0 0
      %405 = vmatprep.subr.bf16.mxu0 0
      %406 = vmatpush1.bf16.msra.mxu0 0
      %407 = vmatprep.subr.bf16.mxu0 0
      %408 = vmatpush1.bf16.msra.mxu0 0
      %409 = vmatprep.subr.bf16.mxu0 0
      %410 = vmatpush1.bf16.msra.mxu0 0
      %411 = vmatprep.subr.bf16.mxu0 0
      %412 = vmatpush1.bf16.msra.mxu0 0
      %413 = vmatprep.mubr.bf16.mxu0 0
      %414 = vmatmul.mubr.bf16.gmra.mrb[0].mxu0 %v376
      %v415 = vpop.f32.mrb[0].mxu0
      %v416 = vadd.f32 0.0, %v415
      %v417 = vpop.f32.mrb[0].mxu0
      %v418 = vpop.f32.mrb[0].mxu0
      %v419 = vpop.f32.mrb[0].mxu0
      %420 = vdwg.mxu0
      %421 = vst [vmem:[%s187] sm:$0xff] %v278
      %422 = vst [vmem:[%s187 + $0x8] sm:$0xff] %v324
      %423 = vst [vmem:[%s187 + $0x10] sm:$0xff] %v370
      %424 = vst [vmem:[%s187 + $0x18] sm:$0xff] %v416
      %s425 = smul.u32 4, %s17
      %p426 = scmp.lt.s32.totalorder %s425, 7
      %s427 = scalar_select %p426, %s425, 7
      %p428 = scmp.lt.s32.totalorder %s18, 0
      %s429 = scalar_select %p428, %s18, 0
      %s430 = sadd.s32 %s429, %s427
      %s431 = smul.addr %s430, 8
      %s432 = scalar_lea.vmem %s2, %s431
      // Predicated region
      $region29: #{encdec_forward.12} parent=27 // pred_check
        %p433 = pneg %p97
      $region30: #{encdec_forward.12} parent=27 // pred_check_branch
        %435 = sbr.rel (%p433) target = $region32
      $region31: #{encdec_forward.12} parent=27 // pred_region
        %s436 = smul.u32 4, %s17
      $region32: #{encdec_forward.12} parent=27 // pred_fallthru
        _
    $region28: #{encdec_forward.12} parent=5 // pred_fallthru
      _
    %p437 = scmp.le.s32.totalorder 2, %s8
    // Predicated region
    $region33: #{encdec_forward.12} parent=5 // pred_check
      %p438 = pneg %p437
    $region34: #{encdec_forward.12} parent=5 // pred_check_branch
      %440 = sbr.rel (%p438) target = $region36
    $region35: #{encdec_forward.12} parent=5 // pred_region
      %s441 = ssub.s32 %s8, 2
      // Predicated region
      $region37: #{encdec_forward.12} parent=35 // pred_check
        %p442 = pneg %p103
      $region38: #{encdec_forward.12} parent=35 // pred_check_branch
        %444 = sbr.rel (%p442) target = $region40
      $region39: #{encdec_forward.12} parent=35 // pred_region
        %s445 = smul.u32 4, %s19
        %p446 = scmp.lt.s32.totalorder %s445, 7
        %s447 = scalar_select %p446, %s445, 7
        %p448 = scmp.lt.s32.totalorder %s20, 0
        %s449 = scalar_select %p448, %s20, 0
        %s450 = sadd.s32 %s449, %s447
        %s451 = smul.addr %s450, 8
        %s452 = scalar_lea.vmem %s2, %s451
      $region40: #{encdec_forward.12} parent=35 // pred_fallthru
        _
    $region36: #{encdec_forward.12} parent=5 // pred_fallthru
      _
  $region6: #{encdec_forward.12} parent=0 // loop_footer
    %s12 = sadd.s32 1, %s8
  $region7: #{encdec_forward.12} parent=0 // loop_footer_branch
    %7 = sbr.rel target = $region3
  $region8: #{encdec_forward.12} parent=0 // loop_exit
    _

</llo_original>
